<compile_context>
chip_gen: v6e
topology: v6e:2x2x1
jax: 0.10.0
libtpu: 0.0.40
codegen_flags: <defaults>
</compile_context>

<pallas_src>
import functools

import jax
import jax.numpy as jnp
from jax import lax
from jax.experimental import pallas as pl
from jax.experimental.pallas import tpu as pltpu

EPS = 1e-5  # nn.BatchNorm2d default eps


def _round_up(x, m):
    return (x + m - 1) // m * m


_COMPILER_PARAMS = pltpu.CompilerParams(
    dimension_semantics=("arbitrary",),      # grid is always (1,) here
    vmem_limit_bytes=32 * 1024 * 1024,       # safe on v5e/v6e (128 MiB) & v7x (64 MiB)
)


# ---------------------------------------------------------------------------
# Pallas kernels
# ---------------------------------------------------------------------------
def _mm_bn_relu_kernel(p_ref, w_ref, g_ref, b_ref, o_ref, *, m_real):
    """Fused (Mp,Kp)@(Kp,Cp) matmul + BatchNorm(batch stats) + ReLU, one tile.

    m_real: number of real (non-padded) rows; padded rows of `p_ref` are zero
    so they do not bias the mean; they are masked out of the variance.
    """
    acc = jnp.dot(p_ref[...], w_ref[...], preferred_element_type=jnp.float32)
    inv_m = 1.0 / m_real
    mean = jnp.sum(acc, axis=0, keepdims=True) * inv_m            # (1, Cp)
    row = lax.broadcasted_iota(jnp.int32, acc.shape, 0)
    centered = jnp.where(row < m_real, acc - mean, 0.0)           # two-pass var
    var = jnp.sum(centered * centered, axis=0, keepdims=True) * inv_m
    scale = g_ref[...] * lax.rsqrt(var + EPS)                     # (1, Cp)
    shift = b_ref[...] - mean * scale
    # Padded rows evaluate relu(shift); they are sliced off in the wrapper.
    o_ref[...] = jnp.maximum(acc * scale + shift, 0.0).astype(o_ref.dtype)


def _matmul_tanh_kernel(w_ref, p_ref, o_ref):
    """Final layer, transposed layout: (Cp8, Kp) @ (Kp, Mp) -> tanh."""
    acc = jnp.dot(w_ref[...], p_ref[...], preferred_element_type=jnp.float32)
    o_ref[...] = jnp.tanh(acc)


def _fused_conv_bn_relu(patches, wmat, gamma_p, beta_p, m_real):
    Mp, Kp = patches.shape
    _, Cp = wmat.shape
    kern = functools.partial(_mm_bn_relu_kernel, m_real=m_real)
    return pl.pallas_call(
        kern,
        out_shape=jax.ShapeDtypeStruct((Mp, Cp), jnp.bfloat16),
        grid=(1,),
        in_specs=[
            pl.BlockSpec((Mp, Kp), lambda i: (0, 0)),
            pl.BlockSpec((Kp, Cp), lambda i: (0, 0)),
            pl.BlockSpec((1, Cp), lambda i: (0, 0)),
            pl.BlockSpec((1, Cp), lambda i: (0, 0)),
        ],
        out_specs=pl.BlockSpec((Mp, Cp), lambda i: (0, 0)),
        compiler_params=_COMPILER_PARAMS,
    )(patches, wmat, gamma_p, beta_p)


def _matmul_tanh(wmat_t, patches_t):
    Cp8, Kp = wmat_t.shape
    _, Mp = patches_t.shape
    return pl.pallas_call(
        _matmul_tanh_kernel,
        out_shape=jax.ShapeDtypeStruct((Cp8, Mp), jnp.float32),
        grid=(1,),
        in_specs=[
            pl.BlockSpec((Cp8, Kp), lambda i: (0, 0)),
            pl.BlockSpec((Kp, Mp), lambda i: (0, 0)),
        ],
        out_specs=pl.BlockSpec((Cp8, Mp), lambda i: (0, 0)),
        compiler_params=_COMPILER_PARAMS,
    )(wmat_t, patches_t)


# ---------------------------------------------------------------------------
# Glue: ConvTranspose2d -> im2col (NHWC, bf16)
# ---------------------------------------------------------------------------
def _conv_transpose_patches_nhwc(x, kH, kW, stride, padding):
    """x: (N, Hin, Win, Cin) -> patches (N*Hout*Wout, kH*kW*Cin), Hout, Wout."""
    N, Hin, Win, Cin = x.shape
    Hup = (Hin - 1) * stride + 1
    Wup = (Win - 1) * stride + 1
    x_up = jnp.zeros((N, Hup, Wup, Cin), x.dtype).at[:, ::stride, ::stride, :].set(x)
    ph = kH - 1 - padding
    pw = kW - 1 - padding
    x_pad = jnp.pad(x_up, ((0, 0), (ph, ph), (pw, pw), (0, 0)))
    Hout = (Hin - 1) * stride - 2 * padding + kH
    Wout = (Win - 1) * stride - 2 * padding + kW
    cols = [x_pad[:, kh:kh + Hout, kw:kw + Wout, :]
            for kh in range(kH) for kw in range(kW)]
    p = jnp.stack(cols, axis=3)                       # (N, Hout, Wout, kH*kW, Cin)
    return p.reshape(N * Hout * Wout, kH * kW * Cin), Hout, Wout


def _weight_matrix(W):
    """ConvTranspose2d weight (Cin, Cout, kH, kW) -> (kH*kW*Cin, Cout), flipped."""
    Cin, Cout, kH, kW = W.shape
    return jnp.flip(W, (2, 3)).transpose(2, 3, 0, 1).reshape(kH * kW * Cin, Cout)


# ---------------------------------------------------------------------------
# Generator: parameters + forward
# ---------------------------------------------------------------------------
def generator_layer_specs(im_chan, z_dim, ngf):
    # (Cin, Cout, kernel, stride, padding)
    return (
        (z_dim, ngf * 4, 4, 2, 0),
        (ngf * 4, ngf * 2, 3, 2, 1),
        (ngf * 2, ngf, 4, 2, 1),
        (ngf, im_chan, 4, 2, 1),
    )


def init_generator_params(key, specs):
    params = []
    for (cin, cout, k, s, p) in specs:
        key, wk = jax.random.split(key)
        W = 0.02 * jax.random.normal(wk, (cin, cout, k, k), jnp.float32)
        params.append(dict(
            W=W,
            gamma=jnp.ones((cout,), jnp.float32),   # BatchNorm2d default init
            beta=jnp.zeros((cout,), jnp.float32),
        ))
    return params


def prepare_generator_params(params, specs):
    """Hoisted per-layer preprocessing: flip/transpose/pad/bf16 weights once."""
    n = len(specs)
    prepped = []
    for i, (lp, (cin, cout, k, _s, _p)) in enumerate(zip(params, specs)):
        wmat = _weight_matrix(lp["W"])                       # (K, Cout) f32
        K = k * k * cin
        Kp = _round_up(K, 128)
        if i == n - 1:
            # Final layer: transposed layout so spatial (M) becomes the lane dim.
            Cp8 = _round_up(cout, 8)
            wt = jnp.pad(wmat.T.astype(jnp.bfloat16),
                         ((0, Cp8 - cout), (0, Kp - K)))
            prepped.append(dict(wmat_t=wt))
        else:
            Cp = _round_up(cout, 128)
            wm = jnp.pad(wmat.astype(jnp.bfloat16),
                         ((0, Kp - K), (0, Cp - cout)))
            gamma_p = jnp.pad(lp["gamma"], (0, Cp - cout),
                              constant_values=1.0).reshape(1, Cp)
            beta_p = jnp.pad(lp["beta"], (0, Cp - cout)).reshape(1, Cp)
            prepped.append(dict(wmat=wm, gamma=gamma_p, beta=beta_p))
    return prepped


def generator_forward(noise, prepped, specs):
    """noise: (N, z_dim) -> generated images (N, im_chan, H, W)."""
    N = noise.shape[0]
    n_layers = len(specs)
    x = None  # NHWC bf16 activation

    for i, ((cin, cout, k, s, p), lp) in enumerate(zip(specs, prepped)):
        if i == 0:
            # 1x1 spatial input: patches = outer product with anti-diagonal
            # selector (no zero-insert / pad / slice im2col needed).
            x2d = noise.astype(jnp.bfloat16)                       # (N, Cin)
            sel = jnp.flip(jnp.eye(k * k, dtype=jnp.bfloat16), axis=1)
            patches = jnp.einsum("pt,nc->nptc", sel, x2d).reshape(
                N * k * k, k * k * cin)
            Hout = Wout = k                                        # stride*(1-1)+k
        else:
            patches, Hout, Wout = _conv_transpose_patches_nhwc(x, k, k, s, p)

        M, K = patches.shape
        Kp = _round_up(K, 128)
        final = (i == n_layers - 1)

        if final:
            Mp = _round_up(M, 128)
            pt = jnp.pad(patches.T, ((0, Kp - K), (0, Mp - M)))    # (Kp, Mp) bf16
            out = _matmul_tanh(lp["wmat_t"], pt)                   # (Cp8, Mp) f32
            out = out[:cout, :M].reshape(cout, N, Hout, Wout)
            return out.transpose(1, 0, 2, 3)                       # NCHW

        Cp = lp["wmat"].shape[1]
        Mp = _round_up(M, 16)
        pp = jnp.pad(patches, ((0, Mp - M), (0, Kp - K)))          # bf16
        y = _fused_conv_bn_relu(pp, lp["wmat"], lp["gamma"], lp["beta"], M)
        x = y[:M, :cout].reshape(N, Hout, Wout, cout)              # NHWC bf16

    return x  # unreachable (final layer returns)


# ---------------------------------------------------------------------------
# Pure-JAX reference (same bf16-input / f32-accumulate precision)
# ---------------------------------------------------------------------------
def _ref_conv_transpose(x, W, stride, padding):
    Cin, Cout, kH, kW = W.shape
    Wc = jnp.flip(W, (2, 3)).transpose(1, 0, 2, 3)  # OIHW
    ph, pw = kH - 1 - padding, kW - 1 - padding
    return lax.conv_general_dilated(
        x.astype(jnp.bfloat16), Wc.astype(jnp.bfloat16),
        window_strides=(1, 1), padding=((ph, ph), (pw, pw)),
        lhs_dilation=(stride, stride),
        dimension_numbers=("NCHW", "OIHW", "NCHW"),
        preferred_element_type=jnp.float32)


def generator_forward_ref(noise, params, specs):
    x = noise[:, :, None, None].astype(jnp.float32)
    n_layers = len(specs)
    for i, (lp, (_cin, _cout, _k, s, p)) in enumerate(zip(params, specs)):
        y = _ref_conv_transpose(x, lp["W"], s, p)
        if i == n_layers - 1:
            x = jnp.tanh(y)
        else:
            mean = jnp.mean(y, axis=(0, 2, 3), keepdims=True)
            var = jnp.mean(jnp.square(y - mean), axis=(0, 2, 3), keepdims=True)
            y = (y - mean) * lax.rsqrt(var + EPS)
            y = y * lp["gamma"][None, :, None, None] + lp["beta"][None, :, None, None]
            x = jnp.maximum(y, 0.0)
    return x


if __name__ == "__main__":
    im_chan, z_dim, ngf, batch = 1, 16, 8, 2

    key = jax.random.PRNGKey(0)
    pkey, nkey = jax.random.split(key)
    specs = generator_layer_specs(im_chan, z_dim, ngf)
    params = init_generator_params(pkey, specs)
    noise = jax.random.normal(nkey, (batch, z_dim), jnp.float32)

    prepped = prepare_generator_params(params, specs)   # hoisted weight prep (once)
    fwd = jax.jit(functools.partial(generator_forward, specs=specs))
    out = jax.block_until_ready(fwd(noise, prepped))
    assert out.shape == (batch, im_chan, 28, 28), out.shape

    ref = jax.block_until_ready(generator_forward_ref(noise, params, specs))
    max_err = float(jnp.max(jnp.abs(out - ref)))
    # bf16 matmul inputs in both paths; tolerance covers accumulation-order +
    # per-layer re-quantization differences.
    assert jnp.allclose(out, ref, atol=2e-2, rtol=2e-2), max_err

    print("KERNEL_OK")
</pallas_src>

<mosaic_0001>
module attributes {stable_mosaic.version = 11 : i64} {
  func.func @_mm_bn_relu_kernel(%arg0: i32, %arg1: memref<32x256xbf16, #tpu.memory_space<vmem>>, %arg2: memref<256x128xbf16, #tpu.memory_space<vmem>>, %arg3: memref<1x128xf32, #tpu.memory_space<vmem>>, %arg4: memref<1x128xf32, #tpu.memory_space<vmem>>, %arg5: memref<32x128xbf16, #tpu.memory_space<vmem>>) attributes {dimension_semantics = [#tpu.dimension_semantics<arbitrary>], iteration_bounds = array<i64: 1>, scalar_prefetch = 0 : i64, scratch_operands = 0 : i64, tpu.core_type = #tpu.core_type<tc>, window_params = [{pipeline_mode = #tpu.pipeline_mode<synchronous>, transform_indices = @transform_0, window_bounds = array<i64: 32, 256>}, {pipeline_mode = #tpu.pipeline_mode<synchronous>, transform_indices = @transform_1, window_bounds = array<i64: 256, 128>}, {pipeline_mode = #tpu.pipeline_mode<synchronous>, transform_indices = @transform_2, window_bounds = array<i64: 1, 128>}, {pipeline_mode = #tpu.pipeline_mode<synchronous>, transform_indices = @transform_3, window_bounds = array<i64: 1, 128>}, {pipeline_mode = #tpu.pipeline_mode<synchronous>, transform_indices = @transform_4, window_bounds = array<i64: 32, 128>}]} {
    %c0 = arith.constant 0 : index
    %c0_0 = arith.constant 0 : index
    %0 = vector.load %arg1[%c0, %c0_0] : memref<32x256xbf16, #tpu.memory_space<vmem>>, vector<32x256xbf16>
    %c0_1 = arith.constant 0 : index
    %c0_2 = arith.constant 0 : index
    %1 = vector.load %arg2[%c0_1, %c0_2] : memref<256x128xbf16, #tpu.memory_space<vmem>>, vector<256x128xbf16>
    %cst = arith.constant dense<0.000000e+00> : vector<32x128xf32>
    %2 = tpu.matmul %0, %1, %cst {dimension_numbers = #tpu.dot_dimension_numbers<[1], [0], [0], [1], [0, 0, 1, 1], [], []>} : vector<32x256xbf16>, vector<256x128xbf16>, vector<32x128xf32> -> vector<32x128xf32>
    %cst_3 = arith.constant dense<0.000000e+00> : vector<128xf32>
    %3 = vector.multi_reduction <add>, %2, %cst_3 [0] : vector<32x128xf32> to vector<128xf32>
    %4 = vector.shape_cast %3 : vector<128xf32> to vector<1x128xf32>
    %cst_4 = arith.constant 3.125000e-02 : f32
    %5 = vector.broadcast %cst_4 : f32 to vector<1x128xf32>
    %6 = arith.mulf %4, %5 : vector<1x128xf32>
    %7 = tpu.iota {dimensions = array<i32: 0>} : vector<32x128xi32>
    %c32_i32 = arith.constant 32 : i32
    %8 = vector.broadcast %c32_i32 : i32 to vector<32x128xi32>
    %9 = arith.cmpi slt, %7, %8 : vector<32x128xi32>
    %10 = vector.broadcast %6 : vector<1x128xf32> to vector<32x128xf32>
    %11 = arith.subf %2, %10 : vector<32x128xf32>
    %cst_5 = arith.constant 0.000000e+00 : f32
    %12 = vector.broadcast %cst_5 : f32 to vector<32x128xf32>
    %13 = arith.select %9, %11, %12 : vector<32x128xi1>, vector<32x128xf32>
    %14 = arith.mulf %13, %13 : vector<32x128xf32>
    %cst_6 = arith.constant dense<0.000000e+00> : vector<128xf32>
    %15 = vector.multi_reduction <add>, %14, %cst_6 [0] : vector<32x128xf32> to vector<128xf32>
    %16 = vector.shape_cast %15 : vector<128xf32> to vector<1x128xf32>
    %cst_7 = arith.constant 3.125000e-02 : f32
    %17 = vector.broadcast %cst_7 : f32 to vector<1x128xf32>
    %18 = arith.mulf %16, %17 : vector<1x128xf32>
    %c0_8 = arith.constant 0 : index
    %c0_9 = arith.constant 0 : index
    %19 = vector.load %arg3[%c0_8, %c0_9] : memref<1x128xf32, #tpu.memory_space<vmem>>, vector<1x128xf32>
    %cst_10 = arith.constant 9.99999974E-6 : f32
    %20 = vector.broadcast %cst_10 : f32 to vector<1x128xf32>
    %21 = arith.addf %18, %20 : vector<1x128xf32>
    %22 = math.rsqrt %21 : vector<1x128xf32>
    %23 = arith.mulf %19, %22 : vector<1x128xf32>
    %c0_11 = arith.constant 0 : index
    %c0_12 = arith.constant 0 : index
    %24 = vector.load %arg4[%c0_11, %c0_12] : memref<1x128xf32, #tpu.memory_space<vmem>>, vector<1x128xf32>
    %25 = arith.mulf %6, %23 : vector<1x128xf32>
    %26 = arith.subf %24, %25 : vector<1x128xf32>
    %27 = vector.broadcast %23 : vector<1x128xf32> to vector<32x128xf32>
    %28 = arith.mulf %2, %27 : vector<32x128xf32>
    %29 = vector.broadcast %26 : vector<1x128xf32> to vector<32x128xf32>
    %30 = arith.addf %28, %29 : vector<32x128xf32>
    %cst_13 = arith.constant 0.000000e+00 : f32
    %31 = vector.broadcast %cst_13 : f32 to vector<32x128xf32>
    %32 = arith.maximumf %30, %31 : vector<32x128xf32>
    %33 = arith.truncf %32 : vector<32x128xf32> to vector<32x128xbf16>
    %c0_14 = arith.constant 0 : index
    %c0_15 = arith.constant 0 : index
    %34 = vector.load %arg5[%c0_14, %c0_15] : memref<32x128xbf16, #tpu.memory_space<vmem>>, vector<32x128xbf16>
    tpu.vector_store %arg5[%c0_14, %c0_15], %33 {strides = array<i32>} : memref<32x128xbf16, #tpu.memory_space<vmem>>, vector<32x128xbf16>,
    return
  }
  func.func @transform_0(%arg0: i32) -> (i32, i32) {
    %c0_i32 = arith.constant 0 : i32
    %c0_i32_0 = arith.constant 0 : i32
    %c0_i32_1 = arith.constant 0 : i32
    return %c0_i32, %c0_i32_0 : i32, i32
  }
  func.func @transform_1(%arg0: i32) -> (i32, i32) {
    %c0_i32 = arith.constant 0 : i32
    %c0_i32_0 = arith.constant 0 : i32
    %c0_i32_1 = arith.constant 0 : i32
    return %c0_i32, %c0_i32_0 : i32, i32
  }
  func.func @transform_2(%arg0: i32) -> (i32, i32) {
    %c0_i32 = arith.constant 0 : i32
    %c0_i32_0 = arith.constant 0 : i32
    %c0_i32_1 = arith.constant 0 : i32
    return %c0_i32, %c0_i32_0 : i32, i32
  }
  func.func @transform_3(%arg0: i32) -> (i32, i32) {
    %c0_i32 = arith.constant 0 : i32
    %c0_i32_0 = arith.constant 0 : i32
    %c0_i32_1 = arith.constant 0 : i32
    return %c0_i32, %c0_i32_0 : i32, i32
  }
  func.func @transform_4(%arg0: i32) -> (i32, i32) {
    %c0_i32 = arith.constant 0 : i32
    %c0_i32_0 = arith.constant 0 : i32
    %c0_i32_1 = arith.constant 0 : i32
    return %c0_i32, %c0_i32_0 : i32, i32
  }
}

module attributes {stable_mosaic.version = 11 : i64} {
  func.func @_mm_bn_relu_kernel(%arg0: i32, %arg1: memref<112x384xbf16, #tpu.memory_space<vmem>>, %arg2: memref<384x128xbf16, #tpu.memory_space<vmem>>, %arg3: memref<1x128xf32, #tpu.memory_space<vmem>>, %arg4: memref<1x128xf32, #tpu.memory_space<vmem>>, %arg5: memref<112x128xbf16, #tpu.memory_space<vmem>>) attributes {dimension_semantics = [#tpu.dimension_semantics<arbitrary>], iteration_bounds = array<i64: 1>, scalar_prefetch = 0 : i64, scratch_operands = 0 : i64, tpu.core_type = #tpu.core_type<tc>, window_params = [{pipeline_mode = #tpu.pipeline_mode<synchronous>, transform_indices = @transform_0, window_bounds = array<i64: 112, 384>}, {pipeline_mode = #tpu.pipeline_mode<synchronous>, transform_indices = @transform_1, window_bounds = array<i64: 384, 128>}, {pipeline_mode = #tpu.pipeline_mode<synchronous>, transform_indices = @transform_2, window_bounds = array<i64: 1, 128>}, {pipeline_mode = #tpu.pipeline_mode<synchronous>, transform_indices = @transform_3, window_bounds = array<i64: 1, 128>}, {pipeline_mode = #tpu.pipeline_mode<synchronous>, transform_indices = @transform_4, window_bounds = array<i64: 112, 128>}]} {
    %c0 = arith.constant 0 : index
    %c0_0 = arith.constant 0 : index
    %0 = vector.load %arg1[%c0, %c0_0] : memref<112x384xbf16, #tpu.memory_space<vmem>>, vector<112x384xbf16>
    %c0_1 = arith.constant 0 : index
    %c0_2 = arith.constant 0 : index
    %1 = vector.load %arg2[%c0_1, %c0_2] : memref<384x128xbf16, #tpu.memory_space<vmem>>, vector<384x128xbf16>
    %cst = arith.constant dense<0.000000e+00> : vector<112x128xf32>
    %2 = tpu.matmul %0, %1, %cst {dimension_numbers = #tpu.dot_dimension_numbers<[1], [0], [0], [1], [0, 0, 1, 1], [], []>} : vector<112x384xbf16>, vector<384x128xbf16>, vector<112x128xf32> -> vector<112x128xf32>
    %cst_3 = arith.constant dense<0.000000e+00> : vector<128xf32>
    %3 = vector.multi_reduction <add>, %2, %cst_3 [0] : vector<112x128xf32> to vector<128xf32>
    %4 = vector.shape_cast %3 : vector<128xf32> to vector<1x128xf32>
    %cst_4 = arith.constant 0.0102040814 : f32
    %5 = vector.broadcast %cst_4 : f32 to vector<1x128xf32>
    %6 = arith.mulf %4, %5 : vector<1x128xf32>
    %7 = tpu.iota {dimensions = array<i32: 0>} : vector<112x128xi32>
    %c98_i32 = arith.constant 98 : i32
    %8 = vector.broadcast %c98_i32 : i32 to vector<112x128xi32>
    %9 = arith.cmpi slt, %7, %8 : vector<112x128xi32>
    %10 = vector.broadcast %6 : vector<1x128xf32> to vector<112x128xf32>
    %11 = arith.subf %2, %10 : vector<112x128xf32>
    %cst_5 = arith.constant 0.000000e+00 : f32
    %12 = vector.broadcast %cst_5 : f32 to vector<112x128xf32>
    %13 = arith.select %9, %11, %12 : vector<112x128xi1>, vector<112x128xf32>
    %14 = arith.mulf %13, %13 : vector<112x128xf32>
    %cst_6 = arith.constant dense<0.000000e+00> : vector<128xf32>
    %15 = vector.multi_reduction <add>, %14, %cst_6 [0] : vector<112x128xf32> to vector<128xf32>
    %16 = vector.shape_cast %15 : vector<128xf32> to vector<1x128xf32>
    %cst_7 = arith.constant 0.0102040814 : f32
    %17 = vector.broadcast %cst_7 : f32 to vector<1x128xf32>
    %18 = arith.mulf %16, %17 : vector<1x128xf32>
    %c0_8 = arith.constant 0 : index
    %c0_9 = arith.constant 0 : index
    %19 = vector.load %arg3[%c0_8, %c0_9] : memref<1x128xf32, #tpu.memory_space<vmem>>, vector<1x128xf32>
    %cst_10 = arith.constant 9.99999974E-6 : f32
    %20 = vector.broadcast %cst_10 : f32 to vector<1x128xf32>
    %21 = arith.addf %18, %20 : vector<1x128xf32>
    %22 = math.rsqrt %21 : vector<1x128xf32>
    %23 = arith.mulf %19, %22 : vector<1x128xf32>
    %c0_11 = arith.constant 0 : index
    %c0_12 = arith.constant 0 : index
    %24 = vector.load %arg4[%c0_11, %c0_12] : memref<1x128xf32, #tpu.memory_space<vmem>>, vector<1x128xf32>
    %25 = arith.mulf %6, %23 : vector<1x128xf32>
    %26 = arith.subf %24, %25 : vector<1x128xf32>
    %27 = vector.broadcast %23 : vector<1x128xf32> to vector<112x128xf32>
    %28 = arith.mulf %2, %27 : vector<112x128xf32>
    %29 = vector.broadcast %26 : vector<1x128xf32> to vector<112x128xf32>
    %30 = arith.addf %28, %29 : vector<112x128xf32>
    %cst_13 = arith.constant 0.000000e+00 : f32
    %31 = vector.broadcast %cst_13 : f32 to vector<112x128xf32>
    %32 = arith.maximumf %30, %31 : vector<112x128xf32>
    %33 = arith.truncf %32 : vector<112x128xf32> to vector<112x128xbf16>
    %c0_14 = arith.constant 0 : index
    %c0_15 = arith.constant 0 : index
    %34 = vector.load %arg5[%c0_14, %c0_15] : memref<112x128xbf16, #tpu.memory_space<vmem>>, vector<112x128xbf16>
    tpu.vector_store %arg5[%c0_14, %c0_15], %33 {strides = array<i32>} : memref<112x128xbf16, #tpu.memory_space<vmem>>, vector<112x128xbf16>,
    return
  }
  func.func @transform_0(%arg0: i32) -> (i32, i32) {
    %c0_i32 = arith.constant 0 : i32
    %c0_i32_0 = arith.constant 0 : i32
    %c0_i32_1 = arith.constant 0 : i32
    return %c0_i32, %c0_i32_0 : i32, i32
  }
  func.func @transform_1(%arg0: i32) -> (i32, i32) {
    %c0_i32 = arith.constant 0 : i32
    %c0_i32_0 = arith.constant 0 : i32
    %c0_i32_1 = arith.constant 0 : i32
    return %c0_i32, %c0_i32_0 : i32, i32
  }
  func.func @transform_2(%arg0: i32) -> (i32, i32) {
    %c0_i32 = arith.constant 0 : i32
    %c0_i32_0 = arith.constant 0 : i32
    %c0_i32_1 = arith.constant 0 : i32
    return %c0_i32, %c0_i32_0 : i32, i32
  }
  func.func @transform_3(%arg0: i32) -> (i32, i32) {
    %c0_i32 = arith.constant 0 : i32
    %c0_i32_0 = arith.constant 0 : i32
    %c0_i32_1 = arith.constant 0 : i32
    return %c0_i32, %c0_i32_0 : i32, i32
  }
  func.func @transform_4(%arg0: i32) -> (i32, i32) {
    %c0_i32 = arith.constant 0 : i32
    %c0_i32_0 = arith.constant 0 : i32
    %c0_i32_1 = arith.constant 0 : i32
    return %c0_i32, %c0_i32_0 : i32, i32
  }
}

module attributes {stable_mosaic.version = 11 : i64} {
  func.func @_mm_bn_relu_kernel(%arg0: i32, %arg1: memref<400x256xbf16, #tpu.memory_space<vmem>>, %arg2: memref<256x128xbf16, #tpu.memory_space<vmem>>, %arg3: memref<1x128xf32, #tpu.memory_space<vmem>>, %arg4: memref<1x128xf32, #tpu.memory_space<vmem>>, %arg5: memref<400x128xbf16, #tpu.memory_space<vmem>>) attributes {dimension_semantics = [#tpu.dimension_semantics<arbitrary>], iteration_bounds = array<i64: 1>, scalar_prefetch = 0 : i64, scratch_operands = 0 : i64, tpu.core_type = #tpu.core_type<tc>, window_params = [{pipeline_mode = #tpu.pipeline_mode<synchronous>, transform_indices = @transform_0, window_bounds = array<i64: 400, 256>}, {pipeline_mode = #tpu.pipeline_mode<synchronous>, transform_indices = @transform_1, window_bounds = array<i64: 256, 128>}, {pipeline_mode = #tpu.pipeline_mode<synchronous>, transform_indices = @transform_2, window_bounds = array<i64: 1, 128>}, {pipeline_mode = #tpu.pipeline_mode<synchronous>, transform_indices = @transform_3, window_bounds = array<i64: 1, 128>}, {pipeline_mode = #tpu.pipeline_mode<synchronous>, transform_indices = @transform_4, window_bounds = array<i64: 400, 128>}]} {
    %c0 = arith.constant 0 : index
    %c0_0 = arith.constant 0 : index
    %0 = vector.load %arg1[%c0, %c0_0] : memref<400x256xbf16, #tpu.memory_space<vmem>>, vector<400x256xbf16>
    %c0_1 = arith.constant 0 : index
    %c0_2 = arith.constant 0 : index
    %1 = vector.load %arg2[%c0_1, %c0_2] : memref<256x128xbf16, #tpu.memory_space<vmem>>, vector<256x128xbf16>
    %cst = arith.constant dense<0.000000e+00> : vector<400x128xf32>
    %2 = tpu.matmul %0, %1, %cst {dimension_numbers = #tpu.dot_dimension_numbers<[1], [0], [0], [1], [0, 0, 1, 1], [], []>} : vector<400x256xbf16>, vector<256x128xbf16>, vector<400x128xf32> -> vector<400x128xf32>
    %cst_3 = arith.constant dense<0.000000e+00> : vector<128xf32>
    %3 = vector.multi_reduction <add>, %2, %cst_3 [0] : vector<400x128xf32> to vector<128xf32>
    %4 = vector.shape_cast %3 : vector<128xf32> to vector<1x128xf32>
    %cst_4 = arith.constant 0.00255102036 : f32
    %5 = vector.broadcast %cst_4 : f32 to vector<1x128xf32>
    %6 = arith.mulf %4, %5 : vector<1x128xf32>
    %7 = tpu.iota {dimensions = array<i32: 0>} : vector<400x128xi32>
    %c392_i32 = arith.constant 392 : i32
    %8 = vector.broadcast %c392_i32 : i32 to vector<400x128xi32>
    %9 = arith.cmpi slt, %7, %8 : vector<400x128xi32>
    %10 = vector.broadcast %6 : vector<1x128xf32> to vector<400x128xf32>
    %11 = arith.subf %2, %10 : vector<400x128xf32>
    %cst_5 = arith.constant 0.000000e+00 : f32
    %12 = vector.broadcast %cst_5 : f32 to vector<400x128xf32>
    %13 = arith.select %9, %11, %12 : vector<400x128xi1>, vector<400x128xf32>
    %14 = arith.mulf %13, %13 : vector<400x128xf32>
    %cst_6 = arith.constant dense<0.000000e+00> : vector<128xf32>
    %15 = vector.multi_reduction <add>, %14, %cst_6 [0] : vector<400x128xf32> to vector<128xf32>
    %16 = vector.shape_cast %15 : vector<128xf32> to vector<1x128xf32>
    %cst_7 = arith.constant 0.00255102036 : f32
    %17 = vector.broadcast %cst_7 : f32 to vector<1x128xf32>
    %18 = arith.mulf %16, %17 : vector<1x128xf32>
    %c0_8 = arith.constant 0 : index
    %c0_9 = arith.constant 0 : index
    %19 = vector.load %arg3[%c0_8, %c0_9] : memref<1x128xf32, #tpu.memory_space<vmem>>, vector<1x128xf32>
    %cst_10 = arith.constant 9.99999974E-6 : f32
    %20 = vector.broadcast %cst_10 : f32 to vector<1x128xf32>
    %21 = arith.addf %18, %20 : vector<1x128xf32>
    %22 = math.rsqrt %21 : vector<1x128xf32>
    %23 = arith.mulf %19, %22 : vector<1x128xf32>
    %c0_11 = arith.constant 0 : index
    %c0_12 = arith.constant 0 : index
    %24 = vector.load %arg4[%c0_11, %c0_12] : memref<1x128xf32, #tpu.memory_space<vmem>>, vector<1x128xf32>
    %25 = arith.mulf %6, %23 : vector<1x128xf32>
    %26 = arith.subf %24, %25 : vector<1x128xf32>
    %27 = vector.broadcast %23 : vector<1x128xf32> to vector<400x128xf32>
    %28 = arith.mulf %2, %27 : vector<400x128xf32>
    %29 = vector.broadcast %26 : vector<1x128xf32> to vector<400x128xf32>
    %30 = arith.addf %28, %29 : vector<400x128xf32>
    %cst_13 = arith.constant 0.000000e+00 : f32
    %31 = vector.broadcast %cst_13 : f32 to vector<400x128xf32>
    %32 = arith.maximumf %30, %31 : vector<400x128xf32>
    %33 = arith.truncf %32 : vector<400x128xf32> to vector<400x128xbf16>
    %c0_14 = arith.constant 0 : index
    %c0_15 = arith.constant 0 : index
    %34 = vector.load %arg5[%c0_14, %c0_15] : memref<400x128xbf16, #tpu.memory_space<vmem>>, vector<400x128xbf16>
    tpu.vector_store %arg5[%c0_14, %c0_15], %33 {strides = array<i32>} : memref<400x128xbf16, #tpu.memory_space<vmem>>, vector<400x128xbf16>,
    return
  }
  func.func @transform_0(%arg0: i32) -> (i32, i32) {
    %c0_i32 = arith.constant 0 : i32
    %c0_i32_0 = arith.constant 0 : i32
    %c0_i32_1 = arith.constant 0 : i32
    return %c0_i32, %c0_i32_0 : i32, i32
  }
  func.func @transform_1(%arg0: i32) -> (i32, i32) {
    %c0_i32 = arith.constant 0 : i32
    %c0_i32_0 = arith.constant 0 : i32
    %c0_i32_1 = arith.constant 0 : i32
    return %c0_i32, %c0_i32_0 : i32, i32
  }
  func.func @transform_2(%arg0: i32) -> (i32, i32) {
    %c0_i32 = arith.constant 0 : i32
    %c0_i32_0 = arith.constant 0 : i32
    %c0_i32_1 = arith.constant 0 : i32
    return %c0_i32, %c0_i32_0 : i32, i32
  }
  func.func @transform_3(%arg0: i32) -> (i32, i32) {
    %c0_i32 = arith.constant 0 : i32
    %c0_i32_0 = arith.constant 0 : i32
    %c0_i32_1 = arith.constant 0 : i32
    return %c0_i32, %c0_i32_0 : i32, i32
  }
  func.func @transform_4(%arg0: i32) -> (i32, i32) {
    %c0_i32 = arith.constant 0 : i32
    %c0_i32_0 = arith.constant 0 : i32
    %c0_i32_1 = arith.constant 0 : i32
    return %c0_i32, %c0_i32_0 : i32, i32
  }
}

module attributes {stable_mosaic.version = 11 : i64} {
  func.func @_matmul_tanh_kernel(%arg0: i32, %arg1: memref<8x128xbf16, #tpu.memory_space<vmem>>, %arg2: memref<128x1664xbf16, #tpu.memory_space<vmem>>, %arg3: memref<8x1664xf32, #tpu.memory_space<vmem>>) attributes {dimension_semantics = [#tpu.dimension_semantics<arbitrary>], iteration_bounds = array<i64: 1>, scalar_prefetch = 0 : i64, scratch_operands = 0 : i64, tpu.core_type = #tpu.core_type<tc>, window_params = [{pipeline_mode = #tpu.pipeline_mode<synchronous>, transform_indices = @transform_0, window_bounds = array<i64: 8, 128>}, {pipeline_mode = #tpu.pipeline_mode<synchronous>, transform_indices = @transform_1, window_bounds = array<i64: 128, 1664>}, {pipeline_mode = #tpu.pipeline_mode<synchronous>, transform_indices = @transform_2, window_bounds = array<i64: 8, 1664>}]} {
    %c0 = arith.constant 0 : index
    %c0_0 = arith.constant 0 : index
    %0 = vector.load %arg1[%c0, %c0_0] : memref<8x128xbf16, #tpu.memory_space<vmem>>, vector<8x128xbf16>
    %c0_1 = arith.constant 0 : index
    %c0_2 = arith.constant 0 : index
    %1 = vector.load %arg2[%c0_1, %c0_2] : memref<128x1664xbf16, #tpu.memory_space<vmem>>, vector<128x1664xbf16>
    %cst = arith.constant dense<0.000000e+00> : vector<8x1664xf32>
    %2 = tpu.matmul %0, %1, %cst {dimension_numbers = #tpu.dot_dimension_numbers<[1], [0], [0], [1], [0, 0, 1, 1], [], []>} : vector<8x128xbf16>, vector<128x1664xbf16>, vector<8x1664xf32> -> vector<8x1664xf32>
    %3 = math.tanh %2 : vector<8x1664xf32>
    %c0_3 = arith.constant 0 : index
    %c0_4 = arith.constant 0 : index
    %4 = vector.load %arg3[%c0_3, %c0_4] : memref<8x1664xf32, #tpu.memory_space<vmem>>, vector<8x1664xf32>
    tpu.vector_store %arg3[%c0_3, %c0_4], %3 {strides = array<i32>} : memref<8x1664xf32, #tpu.memory_space<vmem>>, vector<8x1664xf32>,
    return
  }
  func.func @transform_0(%arg0: i32) -> (i32, i32) {
    %c0_i32 = arith.constant 0 : i32
    %c0_i32_0 = arith.constant 0 : i32
    %c0_i32_1 = arith.constant 0 : i32
    return %c0_i32, %c0_i32_0 : i32, i32
  }
  func.func @transform_1(%arg0: i32) -> (i32, i32) {
    %c0_i32 = arith.constant 0 : i32
    %c0_i32_0 = arith.constant 0 : i32
    %c0_i32_1 = arith.constant 0 : i32
    return %c0_i32, %c0_i32_0 : i32, i32
  }
  func.func @transform_2(%arg0: i32) -> (i32, i32) {
    %c0_i32 = arith.constant 0 : i32
    %c0_i32_0 = arith.constant 0 : i32
    %c0_i32_1 = arith.constant 0 : i32
    return %c0_i32, %c0_i32_0 : i32, i32
  }
}

</mosaic_0001>

<llo_original>
// kernel: generator_forward.4
$region0: #{generator_forward.4}
  #allocation0 [shape = 'u32[]', space=smem, size = 0x4, offset = 0x4, fixed_abs, tag = 'smem constant byte address 0x4 - core index']
  #allocation1 [shape = 'u32[144,128]{1,0:T(1,128)}', space=vmem, size = 0x12000, scoped, tag = 'internal scratch']
  %s0 = inlined_call_operand.vmem [shape: bf16[32,256], index: 0, kind: input, shape index: {}]
  %s1 = inlined_call_operand.hbm [shape: bf16[256,128], index: 1, kind: input, shape index: {}]
  %s2 = inlined_call_operand.hbm [shape: f32[1,128], index: 2, kind: input, shape index: {}]
  %s3 = inlined_call_operand.hbm [shape: f32[1,128], index: 3, kind: input, shape index: {}]
  %s4 = inlined_call_operand.vmem [shape: bf16[32,128], index: 4, kind: output, shape index: {}]
  %s5 = sld [smem:[#allocation0]]
  $region38: #{generator_forward.4} parent=0
    _
  %s7 = ssub.s32 1, %s5
  %s8 = scalar_select 0, %s7, %s5
  $region1: #{generator_forward.4} parent=0
    #allocation2 [shape = 'u8[65536]{0}', space=vmem, size = 0x10000, scoped, tag = 'input window, operand 1, single buffered']
    #allocation3 [shape = 's32[1]{0}', space=sflag, size = 0x4, scoped, tag = 'scoped memory for generator_forward.4']
    #allocation4 [shape = 'u8[512]{0}', space=vmem, size = 0x400, scoped, tag = 'input window, operand 2, single buffered']
    #allocation5 [shape = 's32[1]{0}', space=sflag, size = 0x4, scoped, tag = 'scoped memory for generator_forward.4']
    #allocation6 [shape = 'u8[512]{0}', space=vmem, size = 0x400, scoped, tag = 'input window, operand 3, single buffered']
    %9 = vsyncpa [#allocation3], 0
    %10 = vsyncpa [#allocation5], 0
    // Predicated region
    $region2: #{generator_forward.4} parent=1 // pred_check
      _
    $region3: #{generator_forward.4} parent=1 // pred_check_branch
      %12 = sbr.rel (0) target = $region5
    $region4: #{generator_forward.4} parent=1 // pred_region
      _
    $region5: #{generator_forward.4} parent=1 // pred_fallthru
      _
    // Predicated region
    $region6: #{generator_forward.4} parent=1 // pred_check
      _
    $region7: #{generator_forward.4} parent=1 // pred_check_branch
      %14 = sbr.rel (0) target = $region9
    $region8: #{generator_forward.4} parent=1 // pred_region
      %s16 = ssub.s32 2048, 2048
      %17 = vsyncadd [#allocation3], %s16
      %s18 = sshll.u32 [#allocation2], 4
      %s19 = int_to_ptr.vmem [resolvable:$true] %s18
      %24 = dma.hbm_to_vmem [thread:$0]  %s1, 2048, %s19, [#allocation3], 64, 64, 4
    $region9: #{generator_forward.4} parent=1 // pred_fallthru
      _
    // Predicated region
    $region10: #{generator_forward.4} parent=1 // pred_check
      _
    $region11: #{generator_forward.4} parent=1 // pred_check_branch
      %26 = sbr.rel (0) target = $region13
    $region12: #{generator_forward.4} parent=1 // pred_region
      %s28 = ssub.s32 16, 16
      %29 = vsyncadd [#allocation5], %s28
      %s31 = sshll.u32 [#allocation4], 4
      %s32 = int_to_ptr.vmem [resolvable:$true] %s31
      %34 = dma.hbm_to_vmem [thread:$0]  %s2, 16, %s32, [#allocation5]
    $region13: #{generator_forward.4} parent=1 // pred_fallthru
      _
    // Predicated region
    $region14: #{generator_forward.4} parent=1 // pred_check
      _
    $region15: #{generator_forward.4} parent=1 // pred_check_branch
      %36 = sbr.rel (0) target = $region17
    $region16: #{generator_forward.4} parent=1 // pred_region
      %s38 = ssub.s32 16, 16
      %39 = vsyncadd [#allocation5], %s38
      %s41 = sshll.u32 [#allocation6], 4
      %s42 = int_to_ptr.vmem [resolvable:$true] %s41
      %44 = dma.hbm_to_vmem [thread:$0]  %s3, 16, %s42, [#allocation5]
    $region17: #{generator_forward.4} parent=1 // pred_fallthru
      _
    // Predicated region
    $region18: #{generator_forward.4} parent=1 // pred_check
      _
    $region19: #{generator_forward.4} parent=1 // pred_check_branch
      %46 = sbr.rel (0) target = $region21
    $region20: #{generator_forward.4} parent=1 // pred_region
      %47 = dma.done [#allocation3], 2048
    $region21: #{generator_forward.4} parent=1 // pred_fallthru
      _
    // Predicated region
    $region22: #{generator_forward.4} parent=1 // pred_check
      _
    $region23: #{generator_forward.4} parent=1 // pred_check_branch
      %49 = sbr.rel (0) target = $region25
    $region24: #{generator_forward.4} parent=1 // pred_region
      %50 = dma.done [#allocation5], 16
    $region25: #{generator_forward.4} parent=1 // pred_fallthru
      _
    // Predicated region
    $region26: #{generator_forward.4} parent=1 // pred_check
      _
    $region27: #{generator_forward.4} parent=1 // pred_check_branch
      %52 = sbr.rel (0) target = $region29
    $region28: #{generator_forward.4} parent=1 // pred_region
      %53 = dma.done [#allocation5], 16
    $region29: #{generator_forward.4} parent=1 // pred_fallthru
      _
    %v55 = vld [vmem:[%s0] sm:$0xff]
    %v56 = vld [vmem:[%s0 + $0x8] sm:$0xff]
    %v57 = vld [vmem:[%s0 + $0x10] sm:$0xff]
    %v58 = vld [vmem:[%s0 + $0x18] sm:$0xff]
    %v59 = vld [vmem:[#allocation2] sm:$0xf]
    %v60 = vld [vmem:[#allocation2 + $0x4] sm:$0xf]
    %v61 = vld [vmem:[#allocation2 + $0x8] sm:$0xf]
    %v62 = vld [vmem:[#allocation2 + $0xc] sm:$0xf]
    %v63 = vld [vmem:[#allocation2 + $0x10] sm:$0xf]
    %v64 = vld [vmem:[#allocation2 + $0x14] sm:$0xf]
    %v65 = vld [vmem:[#allocation2 + $0x18] sm:$0xf]
    %v66 = vld [vmem:[#allocation2 + $0x1c] sm:$0xf]
    %v67 = vld [vmem:[#allocation2 + $0x20] sm:$0xf]
    %v68 = vld [vmem:[#allocation2 + $0x24] sm:$0xf]
    %v69 = vld [vmem:[#allocation2 + $0x28] sm:$0xf]
    %v70 = vld [vmem:[#allocation2 + $0x2c] sm:$0xf]
    %v71 = vld [vmem:[#allocation2 + $0x30] sm:$0xf]
    %v72 = vld [vmem:[#allocation2 + $0x34] sm:$0xf]
    %v73 = vld [vmem:[#allocation2 + $0x38] sm:$0xf]
    %v74 = vld [vmem:[#allocation2 + $0x3c] sm:$0xf]
    %v75 = vld [vmem:[#allocation2 + $0x40] sm:$0xf]
    %v76 = vld [vmem:[#allocation2 + $0x44] sm:$0xf]
    %v77 = vld [vmem:[#allocation2 + $0x48] sm:$0xf]
    %v78 = vld [vmem:[#allocation2 + $0x4c] sm:$0xf]
    %v79 = vld [vmem:[#allocation2 + $0x50] sm:$0xf]
    %v80 = vld [vmem:[#allocation2 + $0x54] sm:$0xf]
    %v81 = vld [vmem:[#allocation2 + $0x58] sm:$0xf]
    %v82 = vld [vmem:[#allocation2 + $0x5c] sm:$0xf]
    %v83 = vld [vmem:[#allocation2 + $0x60] sm:$0xf]
    %v84 = vld [vmem:[#allocation2 + $0x64] sm:$0xf]
    %v85 = vld [vmem:[#allocation2 + $0x68] sm:$0xf]
    %v86 = vld [vmem:[#allocation2 + $0x6c] sm:$0xf]
    %v87 = vld [vmem:[#allocation2 + $0x70] sm:$0xf]
    %v88 = vld [vmem:[#allocation2 + $0x74] sm:$0xf]
    %v89 = vld [vmem:[#allocation2 + $0x78] sm:$0xf]
    %v90 = vld [vmem:[#allocation2 + $0x7c] sm:$0xf]
    %v95 = vunpack.c.l.b16 %v55
    %v96 = vunpack.c.h.b16 %v55
    %v97 = vunpack.c.l.b16 %v56
    %v98 = vunpack.c.h.b16 %v56
    %v99 = vunpack.c.l.b16 %v57
    %v100 = vunpack.c.h.b16 %v57
    %v101 = vunpack.c.l.b16 %v58
    %v102 = vunpack.c.h.b16 %v58
    %v103 = vpack.c.b16 %v97, %v95
    %v104 = vpack.c.b16 %v98, %v96
    %v105 = vpack.c.b16 %v101, %v99
    %v106 = vpack.c.b16 %v102, %v100
    %v143 = vunpack.c.l.b16 %v59
    %v144 = vunpack.c.l.b16 %v60
    %v145 = vunpack.c.l.b16 %v61
    %v146 = vunpack.c.l.b16 %v62
    %v147 = vunpack.c.l.b16 %v63
    %v148 = vunpack.c.l.b16 %v64
    %v149 = vunpack.c.l.b16 %v65
    %v150 = vunpack.c.l.b16 %v66
    %v151 = vunpack.c.l.b16 %v67
    %v152 = vunpack.c.l.b16 %v68
    %v153 = vunpack.c.l.b16 %v69
    %v154 = vunpack.c.l.b16 %v70
    %v155 = vunpack.c.l.b16 %v71
    %v156 = vunpack.c.l.b16 %v72
    %v157 = vunpack.c.l.b16 %v73
    %v158 = vunpack.c.l.b16 %v74
    %v159 = vunpack.c.l.b16 %v75
    %v160 = vunpack.c.l.b16 %v76
    %v161 = vunpack.c.l.b16 %v77
    %v162 = vunpack.c.l.b16 %v78
    %v163 = vunpack.c.l.b16 %v79
    %v164 = vunpack.c.l.b16 %v80
    %v165 = vunpack.c.l.b16 %v81
    %v166 = vunpack.c.l.b16 %v82
    %v167 = vunpack.c.l.b16 %v83
    %v168 = vunpack.c.l.b16 %v84
    %v169 = vunpack.c.l.b16 %v85
    %v170 = vunpack.c.l.b16 %v86
    %v171 = vunpack.c.l.b16 %v87
    %v172 = vunpack.c.l.b16 %v88
    %v173 = vunpack.c.l.b16 %v89
    %v174 = vunpack.c.l.b16 %v90
    %v175 = vpack.c.b16 %v144, %v143
    %v176 = vpack.c.b16 %v146, %v145
    %v177 = vpack.c.b16 %v148, %v147
    %v178 = vpack.c.b16 %v150, %v149
    %v179 = vpack.c.b16 %v152, %v151
    %v180 = vpack.c.b16 %v154, %v153
    %v181 = vpack.c.b16 %v156, %v155
    %v182 = vpack.c.b16 %v158, %v157
    %v183 = vpack.c.b16 %v160, %v159
    %v184 = vpack.c.b16 %v162, %v161
    %v185 = vpack.c.b16 %v164, %v163
    %v186 = vpack.c.b16 %v166, %v165
    %v187 = vpack.c.b16 %v168, %v167
    %v188 = vpack.c.b16 %v170, %v169
    %v189 = vpack.c.b16 %v172, %v171
    %v190 = vpack.c.b16 %v174, %v173
    %207 = vmatprep.subr.bf16.mxu0 0
    %208 = vmatpush1.bf16.msra.mxu0 %v182
    %209 = vmatprep.subr.bf16.mxu0 0
    %210 = vmatpush1.bf16.msra.mxu0 %v181
    %211 = vmatprep.subr.bf16.mxu0 0
    %212 = vmatpush1.bf16.msra.mxu0 %v180
    %213 = vmatprep.subr.bf16.mxu0 0
    %214 = vmatpush1.bf16.msra.mxu0 %v179
    %215 = vmatprep.subr.bf16.mxu0 0
    %216 = vmatpush1.bf16.msra.mxu0 %v178
    %217 = vmatprep.subr.bf16.mxu0 0
    %218 = vmatpush1.bf16.msra.mxu0 %v177
    %219 = vmatprep.subr.bf16.mxu0 0
    %220 = vmatpush1.bf16.msra.mxu0 %v176
    %221 = vmatprep.subr.bf16.mxu0 0
    %222 = vmatpush1.bf16.msra.mxu0 %v175
    %223 = vmatprep.subr.bf16.mxu0 0
    %224 = vmatpush2.bf16.msra.mxu0 %v190
    %225 = vmatprep.subr.bf16.mxu0 0
    %226 = vmatpush2.bf16.msra.mxu0 %v189
    %227 = vmatprep.subr.bf16.mxu0 0
    %228 = vmatpush2.bf16.msra.mxu0 %v188
    %229 = vmatprep.subr.bf16.mxu0 0
    %230 = vmatpush2.bf16.msra.mxu0 %v187
    %231 = vmatprep.subr.bf16.mxu0 0
    %232 = vmatpush2.bf16.msra.mxu0 %v186
    %233 = vmatprep.subr.bf16.mxu0 0
    %234 = vmatpush2.bf16.msra.mxu0 %v185
    %235 = vmatprep.subr.bf16.mxu0 0
    %236 = vmatpush2.bf16.msra.mxu0 %v184
    %237 = vmatprep.subr.bf16.mxu0 0
    %238 = vmatpush2.bf16.msra.mxu0 %v183
    %239 = vmatprep.mubr.bf16.mxu0 %v104
    %240 = vmatmul.mubr.bf16.gmra.mxu0 %v103
    %v241 = vpop.f32.mrf.mxu0
    %v242 = vadd.f32 0.0, %v241
    %v243 = vpop.f32.mrf.mxu0
    %v244 = vpop.f32.mrf.mxu0
    %v245 = vadd.f32 0.0, %v244
    %v246 = vpop.f32.mrf.mxu0
    %247 = vmatprep.mubr.bf16.mxu0 %v106
    %248 = vmatmul.mubr.bf16.gmra.mxu0 %v105
    %v249 = vpop.f32.mrf.mxu0
    %v250 = vadd.f32 0.0, %v249
    %v251 = vpop.f32.mrf.mxu0
    %v252 = vpop.f32.mrf.mxu0
    %v253 = vadd.f32 0.0, %v252
    %v254 = vpop.f32.mrf.mxu0
    %255 = vdwg.mxu0
    %v256 = vadd.f32 %v242, %v245
    %v257 = vadd.f32 %v256, %v250
    %v258 = vadd.f32 %v257, %v253
    %v259 = vrot.slane %v258, 4
    %v260 = vadd.f32 %v258, %v259
    %v261 = vrot.slane %v260, 2
    %v262 = vadd.f32 %v260, %v261
    %v263 = vrot.slane %v262, 1
    %v264 = vadd.f32 %v262, %v263
    %v265 = vmul.f32 %v264, 0.03125
    %v266 = vlaneseq
    %v267 = vshrl.u32 %v266, 7
    %v268 = vadd.s32 %v267, 8
    %v269 = vadd.s32 %v267, 16
    %v270 = vadd.s32 %v267, 24
    %vm271 = vcmp.lt.s32.totalorder %v267, 32
    %vm272 = vcmp.lt.s32.totalorder %v268, 32
    %vm273 = vcmp.lt.s32.totalorder %v269, 32
    %vm274 = vcmp.lt.s32.totalorder %v270, 32
    %v275 = vsub.f32 %v242, %v265
    %v276 = vsub.f32 %v245, %v265
    %v277 = vsub.f32 %v250, %v265
    %v278 = vsub.f32 %v253, %v265
    %v279 = vsel %vm271, %v275, 0.0
    %v280 = vsel %vm272, %v276, 0.0
    %v281 = vsel %vm273, %v277, 0.0
    %v282 = vsel %vm274, %v278, 0.0
    %v283 = vmul.f32 %v279, %v279
    %v284 = vmul.f32 %v280, %v280
    %v285 = vmul.f32 %v281, %v281
    %v286 = vmul.f32 %v282, %v282
    %v287 = vadd.f32 %v283, %v284
    %v288 = vadd.f32 %v287, %v285
    %v289 = vadd.f32 %v288, %v286
    %v290 = vrot.slane %v289, 4
    %v291 = vadd.f32 %v289, %v290
    %v292 = vrot.slane %v291, 2
    %v293 = vadd.f32 %v291, %v292
    %v294 = vrot.slane %v293, 1
    %v295 = vadd.f32 %v293, %v294
    %v296 = vmul.f32 %v295, 0.03125
    %v297 = vld [vmem:[#allocation4] sm:$0x1]
    %v298 = vadd.f32 %v296, 1e-05
    %v299 = vrsqrt.pop %v298
    %v300 = vmul.f32 %v297, %v299
    %v301 = vld [vmem:[#allocation6] sm:$0x1]
    %v302 = vmul.f32 %v265, %v300
    %v303 = vsub.f32 %v301, %v302
    %v305 = vlaneseq
    %v306 = vshrl.u32 %v305, 7
    %v307 = vsub.s32 0, %v306
    %v308 = vrot.slane %v300, %v307
    %v310 = vmul.f32 %v242, %v308
    %v311 = vmul.f32 %v245, %v308
    %v312 = vmul.f32 %v250, %v308
    %v313 = vmul.f32 %v253, %v308
    %v315 = vlaneseq
    %v316 = vshrl.u32 %v315, 7
    %v317 = vsub.s32 0, %v316
    %v318 = vrot.slane %v303, %v317
    %v320 = vadd.f32 %v310, %v318
    %v321 = vadd.f32 %v311, %v318
    %v322 = vadd.f32 %v312, %v318
    %v323 = vadd.f32 %v313, %v318
    %v324 = vmax.f32 %v320, 0.0
    %v325 = vmax.f32 %v321, 0.0
    %v326 = vmax.f32 %v322, 0.0
    %v327 = vmax.f32 %v323, 0.0
    %v328 = vpack.c.bf16 %v325, %v324
    %v329 = vpack.c.bf16 %v327, %v326
    %v332 = vunpack.c.l.b16 %v328
    %v333 = vunpack.c.h.b16 %v328
    %v334 = vunpack.c.l.b16 %v329
    %v335 = vunpack.c.h.b16 %v329
    %v336 = vpack.c.b16 %v332, %v332
    %v337 = vpack.c.b16 %v333, %v333
    %v338 = vpack.c.b16 %v334, %v334
    %v339 = vpack.c.b16 %v335, %v335
    %344 = vst [vmem:[%s4] sm:$0xf] %v336
    %345 = vst [vmem:[%s4 + $0x4] sm:$0xf] %v337
    %346 = vst [vmem:[%s4 + $0x8] sm:$0xf] %v338
    %347 = vst [vmem:[%s4 + $0xc] sm:$0xf] %v339
    // Predicated region
    $region30: #{generator_forward.4} parent=1 // pred_check
      _
    $region31: #{generator_forward.4} parent=1 // pred_check_branch
      %349 = sbr.rel (0) target = $region33
    $region32: #{generator_forward.4} parent=1 // pred_region
      _
    $region33: #{generator_forward.4} parent=1 // pred_fallthru
      _
    // Predicated region
    $region34: #{generator_forward.4} parent=1 // pred_check
      _
    $region35: #{generator_forward.4} parent=1 // pred_check_branch
      %351 = sbr.rel (0) target = $region37
    $region36: #{generator_forward.4} parent=1 // pred_region
      _
    $region37: #{generator_forward.4} parent=1 // pred_fallthru
      _
    %352 = vsyncpa [#allocation3], 1
    %353 = vsyncpa [#allocation5], 1

// kernel: generator_forward.5
$region0: #{generator_forward.5}
  #allocation0 [shape = 'u32[]', space=smem, size = 0x4, offset = 0x4, fixed_abs, tag = 'smem constant byte address 0x4 - core index']
  #allocation1 [shape = 'u32[144,128]{1,0:T(1,128)}', space=vmem, size = 0x12000, scoped, tag = 'internal scratch']
  %s0 = inlined_call_operand.vmem [shape: bf16[112,384], index: 0, kind: input, shape index: {}]
  %s1 = inlined_call_operand.vmem [shape: bf16[384,128], index: 1, kind: input, shape index: {}]
  %s2 = inlined_call_operand.vmem [shape: f32[1,128], index: 2, kind: input, shape index: {}]
  %s3 = inlined_call_operand.vmem [shape: f32[1,128], index: 3, kind: input, shape index: {}]
  %s4 = inlined_call_operand.vmem [shape: bf16[112,128], index: 4, kind: output, shape index: {}]
  %s5 = sld [smem:[#allocation0]]
  $region26: #{generator_forward.5} parent=0
    _
  %s7 = ssub.s32 1, %s5
  %s8 = scalar_select 0, %s7, %s5
  // Predicated region
  $region2: #{generator_forward.5} parent=0 // pred_check
    _
  $region3: #{generator_forward.5} parent=0 // pred_check_branch
    %10 = sbr.rel (0) target = $region5
  $region4: #{generator_forward.5} parent=0 // pred_region
    _
  $region5: #{generator_forward.5} parent=0 // pred_fallthru
    _
  // Predicated region
  $region6: #{generator_forward.5} parent=0 // pred_check
    _
  $region7: #{generator_forward.5} parent=0 // pred_check_branch
    %12 = sbr.rel (0) target = $region9
  $region8: #{generator_forward.5} parent=0 // pred_region
    _
  $region9: #{generator_forward.5} parent=0 // pred_fallthru
    _
  // Predicated region
  $region10: #{generator_forward.5} parent=0 // pred_check
    _
  $region11: #{generator_forward.5} parent=0 // pred_check_branch
    %14 = sbr.rel (0) target = $region13
  $region12: #{generator_forward.5} parent=0 // pred_region
    _
  $region13: #{generator_forward.5} parent=0 // pred_fallthru
    _
  // Predicated region
  $region14: #{generator_forward.5} parent=0 // pred_check
    _
  $region15: #{generator_forward.5} parent=0 // pred_check_branch
    %16 = sbr.rel (0) target = $region17
  $region16: #{generator_forward.5} parent=0 // pred_region
    _
  $region17: #{generator_forward.5} parent=0 // pred_fallthru
    _
  %v18 = vld [vmem:[%s0] sm:$0xff]
  %v19 = vld [vmem:[%s0 + $0x8] sm:$0xf]
  %v20 = vld [vmem:[%s0 + $0xc] sm:$0xff]
  %v21 = vld [vmem:[%s0 + $0x14] sm:$0xf]
  %v22 = vld [vmem:[%s0 + $0x18] sm:$0xff]
  %v23 = vld [vmem:[%s0 + $0x20] sm:$0xf]
  %v24 = vld [vmem:[%s0 + $0x24] sm:$0xff]
  %v25 = vld [vmem:[%s0 + $0x2c] sm:$0xf]
  %v26 = vld [vmem:[%s0 + $0x30] sm:$0xff]
  %v27 = vld [vmem:[%s0 + $0x38] sm:$0xf]
  %v28 = vld [vmem:[%s0 + $0x3c] sm:$0xff]
  %v29 = vld [vmem:[%s0 + $0x44] sm:$0xf]
  %v30 = vld [vmem:[%s0 + $0x48] sm:$0xff]
  %v31 = vld [vmem:[%s0 + $0x50] sm:$0xf]
  %v32 = vld [vmem:[%s0 + $0x54] sm:$0xff]
  %v33 = vld [vmem:[%s0 + $0x5c] sm:$0xf]
  %v34 = vld [vmem:[%s0 + $0x60] sm:$0xff]
  %v35 = vld [vmem:[%s0 + $0x68] sm:$0xf]
  %v36 = vld [vmem:[%s0 + $0x6c] sm:$0xff]
  %v37 = vld [vmem:[%s0 + $0x74] sm:$0xf]
  %v38 = vld [vmem:[%s0 + $0x78] sm:$0xff]
  %v39 = vld [vmem:[%s0 + $0x80] sm:$0xf]
  %v40 = vld [vmem:[%s0 + $0x84] sm:$0xff]
  %v41 = vld [vmem:[%s0 + $0x8c] sm:$0xf]
  %v42 = vld [vmem:[%s0 + $0x90] sm:$0xff]
  %v43 = vld [vmem:[%s0 + $0x98] sm:$0xf]
  %v44 = vld [vmem:[%s0 + $0x9c] sm:$0xff]
  %v45 = vld [vmem:[%s0 + $0xa4] sm:$0xf]
  %v46 = vld [vmem:[%s1] sm:$0xf]
  %v47 = vld [vmem:[%s1 + $0x4] sm:$0xf]
  %v48 = vld [vmem:[%s1 + $0x8] sm:$0xf]
  %v49 = vld [vmem:[%s1 + $0xc] sm:$0xf]
  %v50 = vld [vmem:[%s1 + $0x10] sm:$0xf]
  %v51 = vld [vmem:[%s1 + $0x14] sm:$0xf]
  %v52 = vld [vmem:[%s1 + $0x18] sm:$0xf]
  %v53 = vld [vmem:[%s1 + $0x1c] sm:$0xf]
  %v54 = vld [vmem:[%s1 + $0x20] sm:$0xf]
  %v55 = vld [vmem:[%s1 + $0x24] sm:$0xf]
  %v56 = vld [vmem:[%s1 + $0x28] sm:$0xf]
  %v57 = vld [vmem:[%s1 + $0x2c] sm:$0xf]
  %v58 = vld [vmem:[%s1 + $0x30] sm:$0xf]
  %v59 = vld [vmem:[%s1 + $0x34] sm:$0xf]
  %v60 = vld [vmem:[%s1 + $0x38] sm:$0xf]
  %v61 = vld [vmem:[%s1 + $0x3c] sm:$0xf]
  %v62 = vld [vmem:[%s1 + $0x40] sm:$0xf]
  %v63 = vld [vmem:[%s1 + $0x44] sm:$0xf]
  %v64 = vld [vmem:[%s1 + $0x48] sm:$0xf]
  %v65 = vld [vmem:[%s1 + $0x4c] sm:$0xf]
  %v66 = vld [vmem:[%s1 + $0x50] sm:$0xf]
  %v67 = vld [vmem:[%s1 + $0x54] sm:$0xf]
  %v68 = vld [vmem:[%s1 + $0x58] sm:$0xf]
  %v69 = vld [vmem:[%s1 + $0x5c] sm:$0xf]
  %v70 = vld [vmem:[%s1 + $0x60] sm:$0xf]
  %v71 = vld [vmem:[%s1 + $0x64] sm:$0xf]
  %v72 = vld [vmem:[%s1 + $0x68] sm:$0xf]
  %v73 = vld [vmem:[%s1 + $0x6c] sm:$0xf]
  %v74 = vld [vmem:[%s1 + $0x70] sm:$0xf]
  %v75 = vld [vmem:[%s1 + $0x74] sm:$0xf]
  %v76 = vld [vmem:[%s1 + $0x78] sm:$0xf]
  %v77 = vld [vmem:[%s1 + $0x7c] sm:$0xf]
  %v78 = vld [vmem:[%s1 + $0x80] sm:$0xf]
  %v79 = vld [vmem:[%s1 + $0x84] sm:$0xf]
  %v80 = vld [vmem:[%s1 + $0x88] sm:$0xf]
  %v81 = vld [vmem:[%s1 + $0x8c] sm:$0xf]
  %v82 = vld [vmem:[%s1 + $0x90] sm:$0xf]
  %v83 = vld [vmem:[%s1 + $0x94] sm:$0xf]
  %v84 = vld [vmem:[%s1 + $0x98] sm:$0xf]
  %v85 = vld [vmem:[%s1 + $0x9c] sm:$0xf]
  %v86 = vld [vmem:[%s1 + $0xa0] sm:$0xf]
  %v87 = vld [vmem:[%s1 + $0xa4] sm:$0xf]
  %v88 = vld [vmem:[%s1 + $0xa8] sm:$0xf]
  %v89 = vld [vmem:[%s1 + $0xac] sm:$0xf]
  %v90 = vld [vmem:[%s1 + $0xb0] sm:$0xf]
  %v91 = vld [vmem:[%s1 + $0xb4] sm:$0xf]
  %v92 = vld [vmem:[%s1 + $0xb8] sm:$0xf]
  %v93 = vld [vmem:[%s1 + $0xbc] sm:$0xf]
  %v122 = vunpack.c.l.b16 %v18
  %v123 = vunpack.c.h.b16 %v18
  %v124 = vunpack.c.l.b16 %v19
  %v125 = vunpack.c.l.b16 %v20
  %v126 = vunpack.c.h.b16 %v20
  %v127 = vunpack.c.l.b16 %v21
  %v128 = vunpack.c.l.b16 %v22
  %v129 = vunpack.c.h.b16 %v22
  %v130 = vunpack.c.l.b16 %v23
  %v131 = vunpack.c.l.b16 %v24
  %v132 = vunpack.c.h.b16 %v24
  %v133 = vunpack.c.l.b16 %v25
  %v134 = vunpack.c.l.b16 %v26
  %v135 = vunpack.c.h.b16 %v26
  %v136 = vunpack.c.l.b16 %v27
  %v137 = vunpack.c.l.b16 %v28
  %v138 = vunpack.c.h.b16 %v28
  %v139 = vunpack.c.l.b16 %v29
  %v140 = vunpack.c.l.b16 %v30
  %v141 = vunpack.c.h.b16 %v30
  %v142 = vunpack.c.l.b16 %v31
  %v143 = vunpack.c.l.b16 %v32
  %v144 = vunpack.c.h.b16 %v32
  %v145 = vunpack.c.l.b16 %v33
  %v146 = vunpack.c.l.b16 %v34
  %v147 = vunpack.c.h.b16 %v34
  %v148 = vunpack.c.l.b16 %v35
  %v149 = vunpack.c.l.b16 %v36
  %v150 = vunpack.c.h.b16 %v36
  %v151 = vunpack.c.l.b16 %v37
  %v152 = vunpack.c.l.b16 %v38
  %v153 = vunpack.c.h.b16 %v38
  %v154 = vunpack.c.l.b16 %v39
  %v155 = vunpack.c.l.b16 %v40
  %v156 = vunpack.c.h.b16 %v40
  %v157 = vunpack.c.l.b16 %v41
  %v158 = vunpack.c.l.b16 %v42
  %v159 = vunpack.c.h.b16 %v42
  %v160 = vunpack.c.l.b16 %v43
  %v161 = vunpack.c.l.b16 %v44
  %v162 = vunpack.c.h.b16 %v44
  %v163 = vunpack.c.l.b16 %v45
  %v164 = vpack.c.b16 %v125, %v122
  %v165 = vpack.c.b16 %v126, %v123
  %v166 = vpack.c.b16 %v127, %v124
  %v167 = vpack.c.b16 %v131, %v128
  %v168 = vpack.c.b16 %v132, %v129
  %v169 = vpack.c.b16 %v133, %v130
  %v170 = vpack.c.b16 %v137, %v134
  %v171 = vpack.c.b16 %v138, %v135
  %v172 = vpack.c.b16 %v139, %v136
  %v173 = vpack.c.b16 %v143, %v140
  %v174 = vpack.c.b16 %v144, %v141
  %v175 = vpack.c.b16 %v145, %v142
  %v176 = vpack.c.b16 %v149, %v146
  %v177 = vpack.c.b16 %v150, %v147
  %v178 = vpack.c.b16 %v151, %v148
  %v179 = vpack.c.b16 %v155, %v152
  %v180 = vpack.c.b16 %v156, %v153
  %v181 = vpack.c.b16 %v157, %v154
  %v182 = vpack.c.b16 %v161, %v158
  %v183 = vpack.c.b16 %v162, %v159
  %v184 = vpack.c.b16 %v163, %v160
  %v254 = vunpack.c.l.b16 %v46
  %v255 = vunpack.c.l.b16 %v47
  %v256 = vunpack.c.l.b16 %v48
  %v257 = vunpack.c.l.b16 %v49
  %v258 = vunpack.c.l.b16 %v50
  %v259 = vunpack.c.l.b16 %v51
  %v260 = vunpack.c.l.b16 %v52
  %v261 = vunpack.c.l.b16 %v53
  %v262 = vunpack.c.l.b16 %v54
  %v263 = vunpack.c.l.b16 %v55
  %v264 = vunpack.c.l.b16 %v56
  %v265 = vunpack.c.l.b16 %v57
  %v266 = vunpack.c.l.b16 %v58
  %v267 = vunpack.c.l.b16 %v59
  %v268 = vunpack.c.l.b16 %v60
  %v269 = vunpack.c.l.b16 %v61
  %v270 = vunpack.c.l.b16 %v62
  %v271 = vunpack.c.l.b16 %v63
  %v272 = vunpack.c.l.b16 %v64
  %v273 = vunpack.c.l.b16 %v65
  %v274 = vunpack.c.l.b16 %v66
  %v275 = vunpack.c.l.b16 %v67
  %v276 = vunpack.c.l.b16 %v68
  %v277 = vunpack.c.l.b16 %v69
  %v278 = vunpack.c.l.b16 %v70
  %v279 = vunpack.c.l.b16 %v71
  %v280 = vunpack.c.l.b16 %v72
  %v281 = vunpack.c.l.b16 %v73
  %v282 = vunpack.c.l.b16 %v74
  %v283 = vunpack.c.l.b16 %v75
  %v284 = vunpack.c.l.b16 %v76
  %v285 = vunpack.c.l.b16 %v77
  %v286 = vunpack.c.l.b16 %v78
  %v287 = vunpack.c.l.b16 %v79
  %v288 = vunpack.c.l.b16 %v80
  %v289 = vunpack.c.l.b16 %v81
  %v290 = vunpack.c.l.b16 %v82
  %v291 = vunpack.c.l.b16 %v83
  %v292 = vunpack.c.l.b16 %v84
  %v293 = vunpack.c.l.b16 %v85
  %v294 = vunpack.c.l.b16 %v86
  %v295 = vunpack.c.l.b16 %v87
  %v296 = vunpack.c.l.b16 %v88
  %v297 = vunpack.c.l.b16 %v89
  %v298 = vunpack.c.l.b16 %v90
  %v299 = vunpack.c.l.b16 %v91
  %v300 = vunpack.c.l.b16 %v92
  %v301 = vunpack.c.l.b16 %v93
  %v302 = vpack.c.b16 %v255, %v254
  %v303 = vpack.c.b16 %v257, %v256
  %v304 = vpack.c.b16 %v259, %v258
  %v305 = vpack.c.b16 %v261, %v260
  %v306 = vpack.c.b16 %v263, %v262
  %v307 = vpack.c.b16 %v265, %v264
  %v308 = vpack.c.b16 %v267, %v266
  %v309 = vpack.c.b16 %v269, %v268
  %v310 = vpack.c.b16 %v271, %v270
  %v311 = vpack.c.b16 %v273, %v272
  %v312 = vpack.c.b16 %v275, %v274
  %v313 = vpack.c.b16 %v277, %v276
  %v314 = vpack.c.b16 %v279, %v278
  %v315 = vpack.c.b16 %v281, %v280
  %v316 = vpack.c.b16 %v283, %v282
  %v317 = vpack.c.b16 %v285, %v284
  %v318 = vpack.c.b16 %v287, %v286
  %v319 = vpack.c.b16 %v289, %v288
  %v320 = vpack.c.b16 %v291, %v290
  %v321 = vpack.c.b16 %v293, %v292
  %v322 = vpack.c.b16 %v295, %v294
  %v323 = vpack.c.b16 %v297, %v296
  %v324 = vpack.c.b16 %v299, %v298
  %v325 = vpack.c.b16 %v301, %v300
  %350 = vmatprep.subr.bf16.mxu0 0
  %351 = vmatpush1.bf16.msra.mxu0 %v309
  %352 = vmatprep.subr.bf16.mxu0 0
  %353 = vmatpush1.bf16.msra.mxu0 %v308
  %354 = vmatprep.subr.bf16.mxu0 0
  %355 = vmatpush1.bf16.msra.mxu0 %v307
  %356 = vmatprep.subr.bf16.mxu0 0
  %357 = vmatpush1.bf16.msra.mxu0 %v306
  %358 = vmatprep.subr.bf16.mxu0 0
  %359 = vmatpush1.bf16.msra.mxu0 %v305
  %360 = vmatprep.subr.bf16.mxu0 0
  %361 = vmatpush1.bf16.msra.mxu0 %v304
  %362 = vmatprep.subr.bf16.mxu0 0
  %363 = vmatpush1.bf16.msra.mxu0 %v303
  %364 = vmatprep.subr.bf16.mxu0 0
  %365 = vmatpush1.bf16.msra.mxu0 %v302
  %366 = vmatprep.subr.bf16.mxu0 0
  %367 = vmatpush2.bf16.msra.mxu0 %v317
  %368 = vmatprep.subr.bf16.mxu0 0
  %369 = vmatpush2.bf16.msra.mxu0 %v316
  %370 = vmatprep.subr.bf16.mxu0 0
  %371 = vmatpush2.bf16.msra.mxu0 %v315
  %372 = vmatprep.subr.bf16.mxu0 0
  %373 = vmatpush2.bf16.msra.mxu0 %v314
  %374 = vmatprep.subr.bf16.mxu0 0
  %375 = vmatpush2.bf16.msra.mxu0 %v313
  %376 = vmatprep.subr.bf16.mxu0 0
  %377 = vmatpush2.bf16.msra.mxu0 %v312
  %378 = vmatprep.subr.bf16.mxu0 0
  %379 = vmatpush2.bf16.msra.mxu0 %v311
  %380 = vmatprep.subr.bf16.mxu0 0
  %381 = vmatpush2.bf16.msra.mxu0 %v310
  %382 = vmatprep.mubr.bf16.mxu0 %v165
  %383 = vmatmul.mubr.bf16.gmra.mxu0 %v164
  %v384 = vpop.f32.mrf.mxu0
  %v385 = vadd.f32 0.0, %v384
  %v386 = vpop.f32.mrf.mxu0
  %v387 = vpop.f32.mrf.mxu0
  %v388 = vadd.f32 0.0, %v387
  %v389 = vpop.f32.mrf.mxu0
  %390 = vmatprep.mubr.bf16.mxu0 %v168
  %391 = vmatmul.mubr.bf16.gmra.mxu0 %v167
  %v392 = vpop.f32.mrf.mxu0
  %v393 = vadd.f32 0.0, %v392
  %v394 = vpop.f32.mrf.mxu0
  %v395 = vpop.f32.mrf.mxu0
  %v396 = vadd.f32 0.0, %v395
  %v397 = vpop.f32.mrf.mxu0
  %398 = vmatprep.mubr.bf16.mxu0 %v171
  %399 = vmatmul.mubr.bf16.gmra.mxu0 %v170
  %v400 = vpop.f32.mrf.mxu0
  %v401 = vadd.f32 0.0, %v400
  %v402 = vpop.f32.mrf.mxu0
  %v403 = vpop.f32.mrf.mxu0
  %v404 = vadd.f32 0.0, %v403
  %v405 = vpop.f32.mrf.mxu0
  %406 = vmatprep.mubr.bf16.mxu0 %v174
  %407 = vmatmul.mubr.bf16.gmra.mxu0 %v173
  %v408 = vpop.f32.mrf.mxu0
  %v409 = vadd.f32 0.0, %v408
  %v410 = vpop.f32.mrf.mxu0
  %v411 = vpop.f32.mrf.mxu0
  %v412 = vadd.f32 0.0, %v411
  %v413 = vpop.f32.mrf.mxu0
  %414 = vmatprep.mubr.bf16.mxu0 %v177
  %415 = vmatmul.mubr.bf16.gmra.mxu0 %v176
  %v416 = vpop.f32.mrf.mxu0
  %v417 = vadd.f32 0.0, %v416
  %v418 = vpop.f32.mrf.mxu0
  %v419 = vpop.f32.mrf.mxu0
  %v420 = vadd.f32 0.0, %v419
  %v421 = vpop.f32.mrf.mxu0
  %422 = vmatprep.mubr.bf16.mxu0 %v180
  %423 = vmatmul.mubr.bf16.gmra.mxu0 %v179
  %v424 = vpop.f32.mrf.mxu0
  %v425 = vadd.f32 0.0, %v424
  %v426 = vpop.f32.mrf.mxu0
  %v427 = vpop.f32.mrf.mxu0
  %v428 = vadd.f32 0.0, %v427
  %v429 = vpop.f32.mrf.mxu0
  %430 = vmatprep.mubr.bf16.mxu0 %v183
  %431 = vmatmul.mubr.bf16.gmra.mxu0 %v182
  %v432 = vpop.f32.mrf.mxu0
  %v433 = vadd.f32 0.0, %v432
  %v434 = vpop.f32.mrf.mxu0
  %v435 = vpop.f32.mrf.mxu0
  %v436 = vadd.f32 0.0, %v435
  %v437 = vpop.f32.mrf.mxu0
  %438 = vdwg.mxu0
  %439 = vmatprep.subr.bf16.mxu0 0
  %440 = vmatpush1.bf16.msra.mxu0 %v325
  %441 = vmatprep.subr.bf16.mxu0 0
  %442 = vmatpush1.bf16.msra.mxu0 %v324
  %443 = vmatprep.subr.bf16.mxu0 0
  %444 = vmatpush1.bf16.msra.mxu0 %v323
  %445 = vmatprep.subr.bf16.mxu0 0
  %446 = vmatpush1.bf16.msra.mxu0 %v322
  %447 = vmatprep.subr.bf16.mxu0 0
  %448 = vmatpush1.bf16.msra.mxu0 %v321
  %449 = vmatprep.subr.bf16.mxu0 0
  %450 = vmatpush1.bf16.msra.mxu0 %v320
  %451 = vmatprep.subr.bf16.mxu0 0
  %452 = vmatpush1.bf16.msra.mxu0 %v319
  %453 = vmatprep.subr.bf16.mxu0 0
  %454 = vmatpush1.bf16.msra.mxu0 %v318
  %455 = vmatprep.subr.bf16.mxu0 0
  %456 = vmatpush2.bf16.msra.mxu0 0
  %457 = vmatprep.subr.bf16.mxu0 0
  %458 = vmatpush2.bf16.msra.mxu0 0
  %459 = vmatprep.subr.bf16.mxu0 0
  %460 = vmatpush2.bf16.msra.mxu0 0
  %461 = vmatprep.subr.bf16.mxu0 0
  %462 = vmatpush2.bf16.msra.mxu0 0
  %463 = vmatprep.subr.bf16.mxu0 0
  %464 = vmatpush2.bf16.msra.mxu0 0
  %465 = vmatprep.subr.bf16.mxu0 0
  %466 = vmatpush2.bf16.msra.mxu0 0
  %467 = vmatprep.subr.bf16.mxu0 0
  %468 = vmatpush2.bf16.msra.mxu0 0
  %469 = vmatprep.subr.bf16.mxu0 0
  %470 = vmatpush2.bf16.msra.mxu0 0
  %471 = vmatprep.mubr.bf16.mxu0 0
  %472 = vmatmul.mubr.bf16.gmra.mxu0 %v166
  %v473 = vpop.f32.mrf.mxu0
  %v474 = vadd.f32 %v385, %v473
  %v475 = vpop.f32.mrf.mxu0
  %v476 = vpop.f32.mrf.mxu0
  %v477 = vadd.f32 %v388, %v476
  %v478 = vpop.f32.mrf.mxu0
  %479 = vmatprep.mubr.bf16.mxu0 0
  %480 = vmatmul.mubr.bf16.gmra.mxu0 %v169
  %v481 = vpop.f32.mrf.mxu0
  %v482 = vadd.f32 %v393, %v481
  %v483 = vpop.f32.mrf.mxu0
  %v484 = vpop.f32.mrf.mxu0
  %v485 = vadd.f32 %v396, %v484
  %v486 = vpop.f32.mrf.mxu0
  %487 = vmatprep.mubr.bf16.mxu0 0
  %488 = vmatmul.mubr.bf16.gmra.mxu0 %v172
  %v489 = vpop.f32.mrf.mxu0
  %v490 = vadd.f32 %v401, %v489
  %v491 = vpop.f32.mrf.mxu0
  %v492 = vpop.f32.mrf.mxu0
  %v493 = vadd.f32 %v404, %v492
  %v494 = vpop.f32.mrf.mxu0
  %495 = vmatprep.mubr.bf16.mxu0 0
  %496 = vmatmul.mubr.bf16.gmra.mxu0 %v175
  %v497 = vpop.f32.mrf.mxu0
  %v498 = vadd.f32 %v409, %v497
  %v499 = vpop.f32.mrf.mxu0
  %v500 = vpop.f32.mrf.mxu0
  %v501 = vadd.f32 %v412, %v500
  %v502 = vpop.f32.mrf.mxu0
  %503 = vmatprep.mubr.bf16.mxu0 0
  %504 = vmatmul.mubr.bf16.gmra.mxu0 %v178
  %v505 = vpop.f32.mrf.mxu0
  %v506 = vadd.f32 %v417, %v505
  %v507 = vpop.f32.mrf.mxu0
  %v508 = vpop.f32.mrf.mxu0
  %v509 = vadd.f32 %v420, %v508
  %v510 = vpop.f32.mrf.mxu0
  %511 = vmatprep.mubr.bf16.mxu0 0
  %512 = vmatmul.mubr.bf16.gmra.mxu0 %v181
  %v513 = vpop.f32.mrf.mxu0
  %v514 = vadd.f32 %v425, %v513
  %v515 = vpop.f32.mrf.mxu0
  %v516 = vpop.f32.mrf.mxu0
  %v517 = vadd.f32 %v428, %v516
  %v518 = vpop.f32.mrf.mxu0
  %519 = vmatprep.mubr.bf16.mxu0 0
  %520 = vmatmul.mubr.bf16.gmra.mxu0 %v184
  %v521 = vpop.f32.mrf.mxu0
  %v522 = vadd.f32 %v433, %v521
  %v523 = vpop.f32.mrf.mxu0
  %v524 = vpop.f32.mrf.mxu0
  %v525 = vadd.f32 %v436, %v524
  %v526 = vpop.f32.mrf.mxu0
  %527 = vdwg.mxu0
  %v528 = vadd.f32 %v474, %v477
  %v529 = vadd.f32 %v528, %v482
  %v530 = vadd.f32 %v529, %v485
  %v531 = vadd.f32 %v530, %v490
  %v532 = vadd.f32 %v531, %v493
  %v533 = vadd.f32 %v532, %v498
  %v534 = vadd.f32 %v533, %v501
  %v535 = vadd.f32 %v534, %v506
  %v536 = vadd.f32 %v535, %v509
  %v537 = vadd.f32 %v536, %v514
  %v538 = vadd.f32 %v537, %v517
  %v539 = vadd.f32 %v538, %v522
  %v540 = vadd.f32 %v539, %v525
  %v541 = vrot.slane %v540, 4
  %v542 = vadd.f32 %v540, %v541
  %v543 = vrot.slane %v542, 2
  %v544 = vadd.f32 %v542, %v543
  %v545 = vrot.slane %v544, 1
  %v546 = vadd.f32 %v544, %v545
  %v547 = vmul.f32 %v546, 0.010204081
  %v548 = vlaneseq
  %v549 = vshrl.u32 %v548, 7
  %v550 = vadd.s32 %v549, 8
  %v551 = vadd.s32 %v549, 16
  %v552 = vadd.s32 %v549, 24
  %v553 = vadd.s32 %v549, 32
  %v554 = vadd.s32 %v549, 40
  %v555 = vadd.s32 %v549, 48
  %v556 = vadd.s32 %v549, 56
  %v557 = vadd.s32 %v549, 64
  %v558 = vadd.s32 %v549, 72
  %v559 = vadd.s32 %v549, 80
  %v560 = vadd.s32 %v549, 88
  %v561 = vadd.s32 %v549, 96
  %v562 = vadd.s32 %v549, 104
  %vm563 = vcmp.lt.s32.totalorder %v549, 98
  %vm564 = vcmp.lt.s32.totalorder %v550, 98
  %vm565 = vcmp.lt.s32.totalorder %v551, 98
  %vm566 = vcmp.lt.s32.totalorder %v552, 98
  %vm567 = vcmp.lt.s32.totalorder %v553, 98
  %vm568 = vcmp.lt.s32.totalorder %v554, 98
  %vm569 = vcmp.lt.s32.totalorder %v555, 98
  %vm570 = vcmp.lt.s32.totalorder %v556, 98
  %vm571 = vcmp.lt.s32.totalorder %v557, 98
  %vm572 = vcmp.lt.s32.totalorder %v558, 98
  %vm573 = vcmp.lt.s32.totalorder %v559, 98
  %vm574 = vcmp.lt.s32.totalorder %v560, 98
  %vm575 = vcmp.lt.s32.totalorder %v561, 98
  %vm576 = vcmp.lt.s32.totalorder %v562, 98
  %v577 = vsub.f32 %v474, %v547
  %v578 = vsub.f32 %v477, %v547
  %v579 = vsub.f32 %v482, %v547
  %v580 = vsub.f32 %v485, %v547
  %v581 = vsub.f32 %v490, %v547
  %v582 = vsub.f32 %v493, %v547
  %v583 = vsub.f32 %v498, %v547
  %v584 = vsub.f32 %v501, %v547
  %v585 = vsub.f32 %v506, %v547
  %v586 = vsub.f32 %v509, %v547
  %v587 = vsub.f32 %v514, %v547
  %v588 = vsub.f32 %v517, %v547
  %v589 = vsub.f32 %v522, %v547
  %v590 = vsub.f32 %v525, %v547
  %v591 = vsel %vm563, %v577, 0.0
  %v592 = vsel %vm564, %v578, 0.0
  %v593 = vsel %vm565, %v579, 0.0
  %v594 = vsel %vm566, %v580, 0.0
  %v595 = vsel %vm567, %v581, 0.0
  %v596 = vsel %vm568, %v582, 0.0
  %v597 = vsel %vm569, %v583, 0.0
  %v598 = vsel %vm570, %v584, 0.0
  %v599 = vsel %vm571, %v585, 0.0
  %v600 = vsel %vm572, %v586, 0.0
  %v601 = vsel %vm573, %v587, 0.0
  %v602 = vsel %vm574, %v588, 0.0
  %v603 = vsel %vm575, %v589, 0.0
  %v604 = vsel %vm576, %v590, 0.0
  %v605 = vmul.f32 %v591, %v591
  %v606 = vmul.f32 %v592, %v592
  %v607 = vmul.f32 %v593, %v593
  %v608 = vmul.f32 %v594, %v594
  %v609 = vmul.f32 %v595, %v595
  %v610 = vmul.f32 %v596, %v596
  %v611 = vmul.f32 %v597, %v597
  %v612 = vmul.f32 %v598, %v598
  %v613 = vmul.f32 %v599, %v599
  %v614 = vmul.f32 %v600, %v600
  %v615 = vmul.f32 %v601, %v601
  %v616 = vmul.f32 %v602, %v602
  %v617 = vmul.f32 %v603, %v603
  %v618 = vmul.f32 %v604, %v604
  %v619 = vadd.f32 %v605, %v606
  %v620 = vadd.f32 %v619, %v607
  %v621 = vadd.f32 %v620, %v608
  %v622 = vadd.f32 %v621, %v609
  %v623 = vadd.f32 %v622, %v610
  %v624 = vadd.f32 %v623, %v611
  %v625 = vadd.f32 %v624, %v612
  %v626 = vadd.f32 %v625, %v613
  %v627 = vadd.f32 %v626, %v614
  %v628 = vadd.f32 %v627, %v615
  %v629 = vadd.f32 %v628, %v616
  %v630 = vadd.f32 %v629, %v617
  %v631 = vadd.f32 %v630, %v618
  %v632 = vrot.slane %v631, 4
  %v633 = vadd.f32 %v631, %v632
  %v634 = vrot.slane %v633, 2
  %v635 = vadd.f32 %v633, %v634
  %v636 = vrot.slane %v635, 1
  %v637 = vadd.f32 %v635, %v636
  %v638 = vmul.f32 %v637, 0.010204081
  %v639 = vld [vmem:[%s2] sm:$0x1]
  %v640 = vadd.f32 %v638, 1e-05
  %v641 = vrsqrt.pop %v640
  %v642 = vmul.f32 %v639, %v641
  %v643 = vld [vmem:[%s3] sm:$0x1]
  %v644 = vmul.f32 %v547, %v642
  %v645 = vsub.f32 %v643, %v644
  %v647 = vlaneseq
  %v648 = vshrl.u32 %v647, 7
  %v649 = vsub.s32 0, %v648
  %v650 = vrot.slane %v642, %v649
  %v652 = vmul.f32 %v474, %v650
  %v653 = vmul.f32 %v477, %v650
  %v654 = vmul.f32 %v482, %v650
  %v655 = vmul.f32 %v485, %v650
  %v656 = vmul.f32 %v490, %v650
  %v657 = vmul.f32 %v493, %v650
  %v658 = vmul.f32 %v498, %v650
  %v659 = vmul.f32 %v501, %v650
  %v660 = vmul.f32 %v506, %v650
  %v661 = vmul.f32 %v509, %v650
  %v662 = vmul.f32 %v514, %v650
  %v663 = vmul.f32 %v517, %v650
  %v664 = vmul.f32 %v522, %v650
  %v665 = vmul.f32 %v525, %v650
  %v667 = vlaneseq
  %v668 = vshrl.u32 %v667, 7
  %v669 = vsub.s32 0, %v668
  %v670 = vrot.slane %v645, %v669
  %v672 = vadd.f32 %v652, %v670
  %v673 = vadd.f32 %v653, %v670
  %v674 = vadd.f32 %v654, %v670
  %v675 = vadd.f32 %v655, %v670
  %v676 = vadd.f32 %v656, %v670
  %v677 = vadd.f32 %v657, %v670
  %v678 = vadd.f32 %v658, %v670
  %v679 = vadd.f32 %v659, %v670
  %v680 = vadd.f32 %v660, %v670
  %v681 = vadd.f32 %v661, %v670
  %v682 = vadd.f32 %v662, %v670
  %v683 = vadd.f32 %v663, %v670
  %v684 = vadd.f32 %v664, %v670
  %v685 = vadd.f32 %v665, %v670
  %v686 = vmax.f32 %v672, 0.0
  %v687 = vmax.f32 %v673, 0.0
  %v688 = vmax.f32 %v674, 0.0
  %v689 = vmax.f32 %v675, 0.0
  %v690 = vmax.f32 %v676, 0.0
  %v691 = vmax.f32 %v677, 0.0
  %v692 = vmax.f32 %v678, 0.0
  %v693 = vmax.f32 %v679, 0.0
  %v694 = vmax.f32 %v680, 0.0
  %v695 = vmax.f32 %v681, 0.0
  %v696 = vmax.f32 %v682, 0.0
  %v697 = vmax.f32 %v683, 0.0
  %v698 = vmax.f32 %v684, 0.0
  %v699 = vmax.f32 %v685, 0.0
  %v700 = vpack.c.bf16 %v687, %v686
  %v701 = vpack.c.bf16 %v689, %v688
  %v702 = vpack.c.bf16 %v691, %v690
  %v703 = vpack.c.bf16 %v693, %v692
  %v704 = vpack.c.bf16 %v695, %v694
  %v705 = vpack.c.bf16 %v697, %v696
  %v706 = vpack.c.bf16 %v699, %v698
  %v714 = vunpack.c.l.b16 %v700
  %v715 = vunpack.c.h.b16 %v700
  %v716 = vunpack.c.l.b16 %v701
  %v717 = vunpack.c.h.b16 %v701
  %v718 = vunpack.c.l.b16 %v702
  %v719 = vunpack.c.h.b16 %v702
  %v720 = vunpack.c.l.b16 %v703
  %v721 = vunpack.c.h.b16 %v703
  %v722 = vunpack.c.l.b16 %v704
  %v723 = vunpack.c.h.b16 %v704
  %v724 = vunpack.c.l.b16 %v705
  %v725 = vunpack.c.h.b16 %v705
  %v726 = vunpack.c.l.b16 %v706
  %v727 = vunpack.c.h.b16 %v706
  %v728 = vpack.c.b16 %v714, %v714
  %v729 = vpack.c.b16 %v715, %v715
  %v730 = vpack.c.b16 %v716, %v716
  %v731 = vpack.c.b16 %v717, %v717
  %v732 = vpack.c.b16 %v718, %v718
  %v733 = vpack.c.b16 %v719, %v719
  %v734 = vpack.c.b16 %v720, %v720
  %v735 = vpack.c.b16 %v721, %v721
  %v736 = vpack.c.b16 %v722, %v722
  %v737 = vpack.c.b16 %v723, %v723
  %v738 = vpack.c.b16 %v724, %v724
  %v739 = vpack.c.b16 %v725, %v725
  %v740 = vpack.c.b16 %v726, %v726
  %v741 = vpack.c.b16 %v727, %v727
  %756 = vst [vmem:[%s4] sm:$0xf] %v728
  %757 = vst [vmem:[%s4 + $0x4] sm:$0xf] %v729
  %758 = vst [vmem:[%s4 + $0x8] sm:$0xf] %v730
  %759 = vst [vmem:[%s4 + $0xc] sm:$0xf] %v731
  %760 = vst [vmem:[%s4 + $0x10] sm:$0xf] %v732
  %761 = vst [vmem:[%s4 + $0x14] sm:$0xf] %v733
  %762 = vst [vmem:[%s4 + $0x18] sm:$0xf] %v734
  %763 = vst [vmem:[%s4 + $0x1c] sm:$0xf] %v735
  %764 = vst [vmem:[%s4 + $0x20] sm:$0xf] %v736
  %765 = vst [vmem:[%s4 + $0x24] sm:$0xf] %v737
  %766 = vst [vmem:[%s4 + $0x28] sm:$0xf] %v738
  %767 = vst [vmem:[%s4 + $0x2c] sm:$0xf] %v739
  %768 = vst [vmem:[%s4 + $0x30] sm:$0xf] %v740
  %769 = vst [vmem:[%s4 + $0x34] sm:$0xf] %v741
  // Predicated region
  $region18: #{generator_forward.5} parent=0 // pred_check
    _
  $region19: #{generator_forward.5} parent=0 // pred_check_branch
    %771 = sbr.rel (0) target = $region21
  $region20: #{generator_forward.5} parent=0 // pred_region
    _
  $region21: #{generator_forward.5} parent=0 // pred_fallthru
    _
  // Predicated region
  $region22: #{generator_forward.5} parent=0 // pred_check
    _
  $region23: #{generator_forward.5} parent=0 // pred_check_branch
    %773 = sbr.rel (0) target = $region25
  $region24: #{generator_forward.5} parent=0 // pred_region
    _
  $region25: #{generator_forward.5} parent=0 // pred_fallthru
    _

// kernel: generator_forward.6
$region0: #{generator_forward.6}
  #allocation0 [shape = 'u32[]', space=smem, size = 0x4, offset = 0x4, fixed_abs, tag = 'smem constant byte address 0x4 - core index']
  #allocation1 [shape = 'u32[144,128]{1,0:T(1,128)}', space=vmem, size = 0x12000, scoped, tag = 'internal scratch']
  %s0 = inlined_call_operand.vmem [shape: bf16[400,256], index: 0, kind: input, shape index: {}]
  %s1 = inlined_call_operand.vmem [shape: bf16[256,128], index: 1, kind: input, shape index: {}]
  %s2 = inlined_call_operand.vmem [shape: f32[1,128], index: 2, kind: input, shape index: {}]
  %s3 = inlined_call_operand.vmem [shape: f32[1,128], index: 3, kind: input, shape index: {}]
  %s4 = inlined_call_operand.vmem [shape: bf16[400,128], index: 4, kind: output, shape index: {}]
  %s5 = sld [smem:[#allocation0]]
  $region26: #{generator_forward.6} parent=0
    _
  %s7 = ssub.s32 1, %s5
  %s8 = scalar_select 0, %s7, %s5
  // Predicated region
  $region2: #{generator_forward.6} parent=0 // pred_check
    _
  $region3: #{generator_forward.6} parent=0 // pred_check_branch
    %10 = sbr.rel (0) target = $region5
  $region4: #{generator_forward.6} parent=0 // pred_region
    _
  $region5: #{generator_forward.6} parent=0 // pred_fallthru
    _
  // Predicated region
  $region6: #{generator_forward.6} parent=0 // pred_check
    _
  $region7: #{generator_forward.6} parent=0 // pred_check_branch
    %12 = sbr.rel (0) target = $region9
  $region8: #{generator_forward.6} parent=0 // pred_region
    _
  $region9: #{generator_forward.6} parent=0 // pred_fallthru
    _
  // Predicated region
  $region10: #{generator_forward.6} parent=0 // pred_check
    _
  $region11: #{generator_forward.6} parent=0 // pred_check_branch
    %14 = sbr.rel (0) target = $region13
  $region12: #{generator_forward.6} parent=0 // pred_region
    _
  $region13: #{generator_forward.6} parent=0 // pred_fallthru
    _
  // Predicated region
  $region14: #{generator_forward.6} parent=0 // pred_check
    _
  $region15: #{generator_forward.6} parent=0 // pred_check_branch
    %16 = sbr.rel (0) target = $region17
  $region16: #{generator_forward.6} parent=0 // pred_region
    _
  $region17: #{generator_forward.6} parent=0 // pred_fallthru
    _
  %v18 = vld [vmem:[%s0] sm:$0xff]
  %v19 = vld [vmem:[%s0 + $0x8] sm:$0xff]
  %v20 = vld [vmem:[%s0 + $0x10] sm:$0xff]
  %v21 = vld [vmem:[%s0 + $0x18] sm:$0xff]
  %v22 = vld [vmem:[%s0 + $0x20] sm:$0xff]
  %v23 = vld [vmem:[%s0 + $0x28] sm:$0xff]
  %v24 = vld [vmem:[%s0 + $0x30] sm:$0xff]
  %v25 = vld [vmem:[%s0 + $0x38] sm:$0xff]
  %v26 = vld [vmem:[%s0 + $0x40] sm:$0xff]
  %v27 = vld [vmem:[%s0 + $0x48] sm:$0xff]
  %v28 = vld [vmem:[%s0 + $0x50] sm:$0xff]
  %v29 = vld [vmem:[%s0 + $0x58] sm:$0xff]
  %v30 = vld [vmem:[%s0 + $0x60] sm:$0xff]
  %v31 = vld [vmem:[%s0 + $0x68] sm:$0xff]
  %v32 = vld [vmem:[%s0 + $0x70] sm:$0xff]
  %v33 = vld [vmem:[%s0 + $0x78] sm:$0xff]
  %v34 = vld [vmem:[%s0 + $0x80] sm:$0xff]
  %v35 = vld [vmem:[%s0 + $0x88] sm:$0xff]
  %v36 = vld [vmem:[%s0 + $0x90] sm:$0xff]
  %v37 = vld [vmem:[%s0 + $0x98] sm:$0xff]
  %v38 = vld [vmem:[%s0 + $0xa0] sm:$0xff]
  %v39 = vld [vmem:[%s0 + $0xa8] sm:$0xff]
  %v40 = vld [vmem:[%s0 + $0xb0] sm:$0xff]
  %v41 = vld [vmem:[%s0 + $0xb8] sm:$0xff]
  %v42 = vld [vmem:[%s0 + $0xc0] sm:$0xff]
  %v43 = vld [vmem:[%s0 + $0xc8] sm:$0xff]
  %v44 = vld [vmem:[%s0 + $0xd0] sm:$0xff]
  %v45 = vld [vmem:[%s0 + $0xd8] sm:$0xff]
  %v46 = vld [vmem:[%s0 + $0xe0] sm:$0xff]
  %v47 = vld [vmem:[%s0 + $0xe8] sm:$0xff]
  %v48 = vld [vmem:[%s0 + $0xf0] sm:$0xff]
  %v49 = vld [vmem:[%s0 + $0xf8] sm:$0xff]
  %v50 = vld [vmem:[%s0 + $0x100] sm:$0xff]
  %v51 = vld [vmem:[%s0 + $0x108] sm:$0xff]
  %v52 = vld [vmem:[%s0 + $0x110] sm:$0xff]
  %v53 = vld [vmem:[%s0 + $0x118] sm:$0xff]
  %v54 = vld [vmem:[%s0 + $0x120] sm:$0xff]
  %v55 = vld [vmem:[%s0 + $0x128] sm:$0xff]
  %v56 = vld [vmem:[%s0 + $0x130] sm:$0xff]
  %v57 = vld [vmem:[%s0 + $0x138] sm:$0xff]
  %v58 = vld [vmem:[%s0 + $0x140] sm:$0xff]
  %v59 = vld [vmem:[%s0 + $0x148] sm:$0xff]
  %v60 = vld [vmem:[%s0 + $0x150] sm:$0xff]
  %v61 = vld [vmem:[%s0 + $0x158] sm:$0xff]
  %v62 = vld [vmem:[%s0 + $0x160] sm:$0xff]
  %v63 = vld [vmem:[%s0 + $0x168] sm:$0xff]
  %v64 = vld [vmem:[%s0 + $0x170] sm:$0xff]
  %v65 = vld [vmem:[%s0 + $0x178] sm:$0xff]
  %v66 = vld [vmem:[%s0 + $0x180] sm:$0xff]
  %v67 = vld [vmem:[%s0 + $0x188] sm:$0xff]
  %v68 = vld [vmem:[%s1] sm:$0xf]
  %v69 = vld [vmem:[%s1 + $0x4] sm:$0xf]
  %v70 = vld [vmem:[%s1 + $0x8] sm:$0xf]
  %v71 = vld [vmem:[%s1 + $0xc] sm:$0xf]
  %v72 = vld [vmem:[%s1 + $0x10] sm:$0xf]
  %v73 = vld [vmem:[%s1 + $0x14] sm:$0xf]
  %v74 = vld [vmem:[%s1 + $0x18] sm:$0xf]
  %v75 = vld [vmem:[%s1 + $0x1c] sm:$0xf]
  %v76 = vld [vmem:[%s1 + $0x20] sm:$0xf]
  %v77 = vld [vmem:[%s1 + $0x24] sm:$0xf]
  %v78 = vld [vmem:[%s1 + $0x28] sm:$0xf]
  %v79 = vld [vmem:[%s1 + $0x2c] sm:$0xf]
  %v80 = vld [vmem:[%s1 + $0x30] sm:$0xf]
  %v81 = vld [vmem:[%s1 + $0x34] sm:$0xf]
  %v82 = vld [vmem:[%s1 + $0x38] sm:$0xf]
  %v83 = vld [vmem:[%s1 + $0x3c] sm:$0xf]
  %v84 = vld [vmem:[%s1 + $0x40] sm:$0xf]
  %v85 = vld [vmem:[%s1 + $0x44] sm:$0xf]
  %v86 = vld [vmem:[%s1 + $0x48] sm:$0xf]
  %v87 = vld [vmem:[%s1 + $0x4c] sm:$0xf]
  %v88 = vld [vmem:[%s1 + $0x50] sm:$0xf]
  %v89 = vld [vmem:[%s1 + $0x54] sm:$0xf]
  %v90 = vld [vmem:[%s1 + $0x58] sm:$0xf]
  %v91 = vld [vmem:[%s1 + $0x5c] sm:$0xf]
  %v92 = vld [vmem:[%s1 + $0x60] sm:$0xf]
  %v93 = vld [vmem:[%s1 + $0x64] sm:$0xf]
  %v94 = vld [vmem:[%s1 + $0x68] sm:$0xf]
  %v95 = vld [vmem:[%s1 + $0x6c] sm:$0xf]
  %v96 = vld [vmem:[%s1 + $0x70] sm:$0xf]
  %v97 = vld [vmem:[%s1 + $0x74] sm:$0xf]
  %v98 = vld [vmem:[%s1 + $0x78] sm:$0xf]
  %v99 = vld [vmem:[%s1 + $0x7c] sm:$0xf]
  %v150 = vunpack.c.l.b16 %v18
  %v151 = vunpack.c.h.b16 %v18
  %v152 = vunpack.c.l.b16 %v19
  %v153 = vunpack.c.h.b16 %v19
  %v154 = vunpack.c.l.b16 %v20
  %v155 = vunpack.c.h.b16 %v20
  %v156 = vunpack.c.l.b16 %v21
  %v157 = vunpack.c.h.b16 %v21
  %v158 = vunpack.c.l.b16 %v22
  %v159 = vunpack.c.h.b16 %v22
  %v160 = vunpack.c.l.b16 %v23
  %v161 = vunpack.c.h.b16 %v23
  %v162 = vunpack.c.l.b16 %v24
  %v163 = vunpack.c.h.b16 %v24
  %v164 = vunpack.c.l.b16 %v25
  %v165 = vunpack.c.h.b16 %v25
  %v166 = vunpack.c.l.b16 %v26
  %v167 = vunpack.c.h.b16 %v26
  %v168 = vunpack.c.l.b16 %v27
  %v169 = vunpack.c.h.b16 %v27
  %v170 = vunpack.c.l.b16 %v28
  %v171 = vunpack.c.h.b16 %v28
  %v172 = vunpack.c.l.b16 %v29
  %v173 = vunpack.c.h.b16 %v29
  %v174 = vunpack.c.l.b16 %v30
  %v175 = vunpack.c.h.b16 %v30
  %v176 = vunpack.c.l.b16 %v31
  %v177 = vunpack.c.h.b16 %v31
  %v178 = vunpack.c.l.b16 %v32
  %v179 = vunpack.c.h.b16 %v32
  %v180 = vunpack.c.l.b16 %v33
  %v181 = vunpack.c.h.b16 %v33
  %v182 = vunpack.c.l.b16 %v34
  %v183 = vunpack.c.h.b16 %v34
  %v184 = vunpack.c.l.b16 %v35
  %v185 = vunpack.c.h.b16 %v35
  %v186 = vunpack.c.l.b16 %v36
  %v187 = vunpack.c.h.b16 %v36
  %v188 = vunpack.c.l.b16 %v37
  %v189 = vunpack.c.h.b16 %v37
  %v190 = vunpack.c.l.b16 %v38
  %v191 = vunpack.c.h.b16 %v38
  %v192 = vunpack.c.l.b16 %v39
  %v193 = vunpack.c.h.b16 %v39
  %v194 = vunpack.c.l.b16 %v40
  %v195 = vunpack.c.h.b16 %v40
  %v196 = vunpack.c.l.b16 %v41
  %v197 = vunpack.c.h.b16 %v41
  %v198 = vunpack.c.l.b16 %v42
  %v199 = vunpack.c.h.b16 %v42
  %v200 = vunpack.c.l.b16 %v43
  %v201 = vunpack.c.h.b16 %v43
  %v202 = vunpack.c.l.b16 %v44
  %v203 = vunpack.c.h.b16 %v44
  %v204 = vunpack.c.l.b16 %v45
  %v205 = vunpack.c.h.b16 %v45
  %v206 = vunpack.c.l.b16 %v46
  %v207 = vunpack.c.h.b16 %v46
  %v208 = vunpack.c.l.b16 %v47
  %v209 = vunpack.c.h.b16 %v47
  %v210 = vunpack.c.l.b16 %v48
  %v211 = vunpack.c.h.b16 %v48
  %v212 = vunpack.c.l.b16 %v49
  %v213 = vunpack.c.h.b16 %v49
  %v214 = vunpack.c.l.b16 %v50
  %v215 = vunpack.c.h.b16 %v50
  %v216 = vunpack.c.l.b16 %v51
  %v217 = vunpack.c.h.b16 %v51
  %v218 = vunpack.c.l.b16 %v52
  %v219 = vunpack.c.h.b16 %v52
  %v220 = vunpack.c.l.b16 %v53
  %v221 = vunpack.c.h.b16 %v53
  %v222 = vunpack.c.l.b16 %v54
  %v223 = vunpack.c.h.b16 %v54
  %v224 = vunpack.c.l.b16 %v55
  %v225 = vunpack.c.h.b16 %v55
  %v226 = vunpack.c.l.b16 %v56
  %v227 = vunpack.c.h.b16 %v56
  %v228 = vunpack.c.l.b16 %v57
  %v229 = vunpack.c.h.b16 %v57
  %v230 = vunpack.c.l.b16 %v58
  %v231 = vunpack.c.h.b16 %v58
  %v232 = vunpack.c.l.b16 %v59
  %v233 = vunpack.c.h.b16 %v59
  %v234 = vunpack.c.l.b16 %v60
  %v235 = vunpack.c.h.b16 %v60
  %v236 = vunpack.c.l.b16 %v61
  %v237 = vunpack.c.h.b16 %v61
  %v238 = vunpack.c.l.b16 %v62
  %v239 = vunpack.c.h.b16 %v62
  %v240 = vunpack.c.l.b16 %v63
  %v241 = vunpack.c.h.b16 %v63
  %v242 = vunpack.c.l.b16 %v64
  %v243 = vunpack.c.h.b16 %v64
  %v244 = vunpack.c.l.b16 %v65
  %v245 = vunpack.c.h.b16 %v65
  %v246 = vunpack.c.l.b16 %v66
  %v247 = vunpack.c.h.b16 %v66
  %v248 = vunpack.c.l.b16 %v67
  %v249 = vunpack.c.h.b16 %v67
  %v250 = vpack.c.b16 %v152, %v150
  %v251 = vpack.c.b16 %v153, %v151
  %v252 = vpack.c.b16 %v156, %v154
  %v253 = vpack.c.b16 %v157, %v155
  %v254 = vpack.c.b16 %v160, %v158
  %v255 = vpack.c.b16 %v161, %v159
  %v256 = vpack.c.b16 %v164, %v162
  %v257 = vpack.c.b16 %v165, %v163
  %v258 = vpack.c.b16 %v168, %v166
  %v259 = vpack.c.b16 %v169, %v167
  %v260 = vpack.c.b16 %v172, %v170
  %v261 = vpack.c.b16 %v173, %v171
  %v262 = vpack.c.b16 %v176, %v174
  %v263 = vpack.c.b16 %v177, %v175
  %v264 = vpack.c.b16 %v180, %v178
  %v265 = vpack.c.b16 %v181, %v179
  %v266 = vpack.c.b16 %v184, %v182
  %v267 = vpack.c.b16 %v185, %v183
  %v268 = vpack.c.b16 %v188, %v186
  %v269 = vpack.c.b16 %v189, %v187
  %v270 = vpack.c.b16 %v192, %v190
  %v271 = vpack.c.b16 %v193, %v191
  %v272 = vpack.c.b16 %v196, %v194
  %v273 = vpack.c.b16 %v197, %v195
  %v274 = vpack.c.b16 %v200, %v198
  %v275 = vpack.c.b16 %v201, %v199
  %v276 = vpack.c.b16 %v204, %v202
  %v277 = vpack.c.b16 %v205, %v203
  %v278 = vpack.c.b16 %v208, %v206
  %v279 = vpack.c.b16 %v209, %v207
  %v280 = vpack.c.b16 %v212, %v210
  %v281 = vpack.c.b16 %v213, %v211
  %v282 = vpack.c.b16 %v216, %v214
  %v283 = vpack.c.b16 %v217, %v215
  %v284 = vpack.c.b16 %v220, %v218
  %v285 = vpack.c.b16 %v221, %v219
  %v286 = vpack.c.b16 %v224, %v222
  %v287 = vpack.c.b16 %v225, %v223
  %v288 = vpack.c.b16 %v228, %v226
  %v289 = vpack.c.b16 %v229, %v227
  %v290 = vpack.c.b16 %v232, %v230
  %v291 = vpack.c.b16 %v233, %v231
  %v292 = vpack.c.b16 %v236, %v234
  %v293 = vpack.c.b16 %v237, %v235
  %v294 = vpack.c.b16 %v240, %v238
  %v295 = vpack.c.b16 %v241, %v239
  %v296 = vpack.c.b16 %v244, %v242
  %v297 = vpack.c.b16 %v245, %v243
  %v298 = vpack.c.b16 %v248, %v246
  %v299 = vpack.c.b16 %v249, %v247
  %v382 = vunpack.c.l.b16 %v68
  %v383 = vunpack.c.l.b16 %v69
  %v384 = vunpack.c.l.b16 %v70
  %v385 = vunpack.c.l.b16 %v71
  %v386 = vunpack.c.l.b16 %v72
  %v387 = vunpack.c.l.b16 %v73
  %v388 = vunpack.c.l.b16 %v74
  %v389 = vunpack.c.l.b16 %v75
  %v390 = vunpack.c.l.b16 %v76
  %v391 = vunpack.c.l.b16 %v77
  %v392 = vunpack.c.l.b16 %v78
  %v393 = vunpack.c.l.b16 %v79
  %v394 = vunpack.c.l.b16 %v80
  %v395 = vunpack.c.l.b16 %v81
  %v396 = vunpack.c.l.b16 %v82
  %v397 = vunpack.c.l.b16 %v83
  %v398 = vunpack.c.l.b16 %v84
  %v399 = vunpack.c.l.b16 %v85
  %v400 = vunpack.c.l.b16 %v86
  %v401 = vunpack.c.l.b16 %v87
  %v402 = vunpack.c.l.b16 %v88
  %v403 = vunpack.c.l.b16 %v89
  %v404 = vunpack.c.l.b16 %v90
  %v405 = vunpack.c.l.b16 %v91
  %v406 = vunpack.c.l.b16 %v92
  %v407 = vunpack.c.l.b16 %v93
  %v408 = vunpack.c.l.b16 %v94
  %v409 = vunpack.c.l.b16 %v95
  %v410 = vunpack.c.l.b16 %v96
  %v411 = vunpack.c.l.b16 %v97
  %v412 = vunpack.c.l.b16 %v98
  %v413 = vunpack.c.l.b16 %v99
  %v414 = vpack.c.b16 %v383, %v382
  %v415 = vpack.c.b16 %v385, %v384
  %v416 = vpack.c.b16 %v387, %v386
  %v417 = vpack.c.b16 %v389, %v388
  %v418 = vpack.c.b16 %v391, %v390
  %v419 = vpack.c.b16 %v393, %v392
  %v420 = vpack.c.b16 %v395, %v394
  %v421 = vpack.c.b16 %v397, %v396
  %v422 = vpack.c.b16 %v399, %v398
  %v423 = vpack.c.b16 %v401, %v400
  %v424 = vpack.c.b16 %v403, %v402
  %v425 = vpack.c.b16 %v405, %v404
  %v426 = vpack.c.b16 %v407, %v406
  %v427 = vpack.c.b16 %v409, %v408
  %v428 = vpack.c.b16 %v411, %v410
  %v429 = vpack.c.b16 %v413, %v412
  %446 = vmatprep.subr.bf16.mxu0 0
  %447 = vmatpush1.bf16.msra.mxu0 %v421
  %448 = vmatprep.subr.bf16.mxu0 0
  %449 = vmatpush1.bf16.msra.mxu0 %v420
  %450 = vmatprep.subr.bf16.mxu0 0
  %451 = vmatpush1.bf16.msra.mxu0 %v419
  %452 = vmatprep.subr.bf16.mxu0 0
  %453 = vmatpush1.bf16.msra.mxu0 %v418
  %454 = vmatprep.subr.bf16.mxu0 0
  %455 = vmatpush1.bf16.msra.mxu0 %v417
  %456 = vmatprep.subr.bf16.mxu0 0
  %457 = vmatpush1.bf16.msra.mxu0 %v416
  %458 = vmatprep.subr.bf16.mxu0 0
  %459 = vmatpush1.bf16.msra.mxu0 %v415
  %460 = vmatprep.subr.bf16.mxu0 0
  %461 = vmatpush1.bf16.msra.mxu0 %v414
  %462 = vmatprep.subr.bf16.mxu0 0
  %463 = vmatpush2.bf16.msra.mxu0 %v429
  %464 = vmatprep.subr.bf16.mxu0 0
  %465 = vmatpush2.bf16.msra.mxu0 %v428
  %466 = vmatprep.subr.bf16.mxu0 0
  %467 = vmatpush2.bf16.msra.mxu0 %v427
  %468 = vmatprep.subr.bf16.mxu0 0
  %469 = vmatpush2.bf16.msra.mxu0 %v426
  %470 = vmatprep.subr.bf16.mxu0 0
  %471 = vmatpush2.bf16.msra.mxu0 %v425
  %472 = vmatprep.subr.bf16.mxu0 0
  %473 = vmatpush2.bf16.msra.mxu0 %v424
  %474 = vmatprep.subr.bf16.mxu0 0
  %475 = vmatpush2.bf16.msra.mxu0 %v423
  %476 = vmatprep.subr.bf16.mxu0 0
  %477 = vmatpush2.bf16.msra.mxu0 %v422
  %478 = vmatprep.mubr.bf16.mxu0 %v251
  %479 = vmatmul.mubr.bf16.gmra.mxu0 %v250
  %v480 = vpop.f32.mrf.mxu0
  %v481 = vadd.f32 0.0, %v480
  %v482 = vpop.f32.mrf.mxu0
  %v483 = vpop.f32.mrf.mxu0
  %v484 = vadd.f32 0.0, %v483
  %v485 = vpop.f32.mrf.mxu0
  %486 = vmatprep.mubr.bf16.mxu0 %v253
  %487 = vmatmul.mubr.bf16.gmra.mxu0 %v252
  %v488 = vpop.f32.mrf.mxu0
  %v489 = vadd.f32 0.0, %v488
  %v490 = vpop.f32.mrf.mxu0
  %v491 = vpop.f32.mrf.mxu0
  %v492 = vadd.f32 0.0, %v491
  %v493 = vpop.f32.mrf.mxu0
  %494 = vmatprep.mubr.bf16.mxu0 %v255
  %495 = vmatmul.mubr.bf16.gmra.mxu0 %v254
  %v496 = vpop.f32.mrf.mxu0
  %v497 = vadd.f32 0.0, %v496
  %v498 = vpop.f32.mrf.mxu0
  %v499 = vpop.f32.mrf.mxu0
  %v500 = vadd.f32 0.0, %v499
  %v501 = vpop.f32.mrf.mxu0
  %502 = vmatprep.mubr.bf16.mxu0 %v257
  %503 = vmatmul.mubr.bf16.gmra.mxu0 %v256
  %v504 = vpop.f32.mrf.mxu0
  %v505 = vadd.f32 0.0, %v504
  %v506 = vpop.f32.mrf.mxu0
  %v507 = vpop.f32.mrf.mxu0
  %v508 = vadd.f32 0.0, %v507
  %v509 = vpop.f32.mrf.mxu0
  %510 = vmatprep.mubr.bf16.mxu0 %v259
  %511 = vmatmul.mubr.bf16.gmra.mxu0 %v258
  %v512 = vpop.f32.mrf.mxu0
  %v513 = vadd.f32 0.0, %v512
  %v514 = vpop.f32.mrf.mxu0
  %v515 = vpop.f32.mrf.mxu0
  %v516 = vadd.f32 0.0, %v515
  %v517 = vpop.f32.mrf.mxu0
  %518 = vmatprep.mubr.bf16.mxu0 %v261
  %519 = vmatmul.mubr.bf16.gmra.mxu0 %v260
  %v520 = vpop.f32.mrf.mxu0
  %v521 = vadd.f32 0.0, %v520
  %v522 = vpop.f32.mrf.mxu0
  %v523 = vpop.f32.mrf.mxu0
  %v524 = vadd.f32 0.0, %v523
  %v525 = vpop.f32.mrf.mxu0
  %526 = vmatprep.mubr.bf16.mxu0 %v263
  %527 = vmatmul.mubr.bf16.gmra.mxu0 %v262
  %v528 = vpop.f32.mrf.mxu0
  %v529 = vadd.f32 0.0, %v528
  %v530 = vpop.f32.mrf.mxu0
  %v531 = vpop.f32.mrf.mxu0
  %v532 = vadd.f32 0.0, %v531
  %v533 = vpop.f32.mrf.mxu0
  %534 = vmatprep.mubr.bf16.mxu0 %v265
  %535 = vmatmul.mubr.bf16.gmra.mxu0 %v264
  %v536 = vpop.f32.mrf.mxu0
  %v537 = vadd.f32 0.0, %v536
  %v538 = vpop.f32.mrf.mxu0
  %v539 = vpop.f32.mrf.mxu0
  %v540 = vadd.f32 0.0, %v539
  %v541 = vpop.f32.mrf.mxu0
  %542 = vmatprep.mubr.bf16.mxu0 %v267
  %543 = vmatmul.mubr.bf16.gmra.mxu0 %v266
  %v544 = vpop.f32.mrf.mxu0
  %v545 = vadd.f32 0.0, %v544
  %v546 = vpop.f32.mrf.mxu0
  %v547 = vpop.f32.mrf.mxu0
  %v548 = vadd.f32 0.0, %v547
  %v549 = vpop.f32.mrf.mxu0
  %550 = vmatprep.mubr.bf16.mxu0 %v269
  %551 = vmatmul.mubr.bf16.gmra.mxu0 %v268
  %v552 = vpop.f32.mrf.mxu0
  %v553 = vadd.f32 0.0, %v552
  %v554 = vpop.f32.mrf.mxu0
  %v555 = vpop.f32.mrf.mxu0
  %v556 = vadd.f32 0.0, %v555
  %v557 = vpop.f32.mrf.mxu0
  %558 = vmatprep.mubr.bf16.mxu0 %v271
  %559 = vmatmul.mubr.bf16.gmra.mxu0 %v270
  %v560 = vpop.f32.mrf.mxu0
  %v561 = vadd.f32 0.0, %v560
  %v562 = vpop.f32.mrf.mxu0
  %v563 = vpop.f32.mrf.mxu0
  %v564 = vadd.f32 0.0, %v563
  %v565 = vpop.f32.mrf.mxu0
  %566 = vmatprep.mubr.bf16.mxu0 %v273
  %567 = vmatmul.mubr.bf16.gmra.mxu0 %v272
  %v568 = vpop.f32.mrf.mxu0
  %v569 = vadd.f32 0.0, %v568
  %v570 = vpop.f32.mrf.mxu0
  %v571 = vpop.f32.mrf.mxu0
  %v572 = vadd.f32 0.0, %v571
  %v573 = vpop.f32.mrf.mxu0
  %574 = vmatprep.mubr.bf16.mxu0 %v275
  %575 = vmatmul.mubr.bf16.gmra.mxu0 %v274
  %v576 = vpop.f32.mrf.mxu0
  %v577 = vadd.f32 0.0, %v576
  %v578 = vpop.f32.mrf.mxu0
  %v579 = vpop.f32.mrf.mxu0
  %v580 = vadd.f32 0.0, %v579
  %v581 = vpop.f32.mrf.mxu0
  %582 = vmatprep.mubr.bf16.mxu0 %v277
  %583 = vmatmul.mubr.bf16.gmra.mxu0 %v276
  %v584 = vpop.f32.mrf.mxu0
  %v585 = vadd.f32 0.0, %v584
  %v586 = vpop.f32.mrf.mxu0
  %v587 = vpop.f32.mrf.mxu0
  %v588 = vadd.f32 0.0, %v587
  %v589 = vpop.f32.mrf.mxu0
  %590 = vmatprep.mubr.bf16.mxu0 %v279
  %591 = vmatmul.mubr.bf16.gmra.mxu0 %v278
  %v592 = vpop.f32.mrf.mxu0
  %v593 = vadd.f32 0.0, %v592
  %v594 = vpop.f32.mrf.mxu0
  %v595 = vpop.f32.mrf.mxu0
  %v596 = vadd.f32 0.0, %v595
  %v597 = vpop.f32.mrf.mxu0
  %598 = vmatprep.mubr.bf16.mxu0 %v281
  %599 = vmatmul.mubr.bf16.gmra.mxu0 %v280
  %v600 = vpop.f32.mrf.mxu0
  %v601 = vadd.f32 0.0, %v600
  %v602 = vpop.f32.mrf.mxu0
  %v603 = vpop.f32.mrf.mxu0
  %v604 = vadd.f32 0.0, %v603
  %v605 = vpop.f32.mrf.mxu0
  %606 = vmatprep.mubr.bf16.mxu0 %v283
  %607 = vmatmul.mubr.bf16.gmra.mxu0 %v282
  %v608 = vpop.f32.mrf.mxu0
  %v609 = vadd.f32 0.0, %v608
  %v610 = vpop.f32.mrf.mxu0
  %v611 = vpop.f32.mrf.mxu0
  %v612 = vadd.f32 0.0, %v611
  %v613 = vpop.f32.mrf.mxu0
  %614 = vmatprep.mubr.bf16.mxu0 %v285
  %615 = vmatmul.mubr.bf16.gmra.mxu0 %v284
  %v616 = vpop.f32.mrf.mxu0
  %v617 = vadd.f32 0.0, %v616
  %v618 = vpop.f32.mrf.mxu0
  %v619 = vpop.f32.mrf.mxu0
  %v620 = vadd.f32 0.0, %v619
  %v621 = vpop.f32.mrf.mxu0
  %622 = vmatprep.mubr.bf16.mxu0 %v287
  %623 = vmatmul.mubr.bf16.gmra.mxu0 %v286
  %v624 = vpop.f32.mrf.mxu0
  %v625 = vadd.f32 0.0, %v624
  %v626 = vpop.f32.mrf.mxu0
  %v627 = vpop.f32.mrf.mxu0
  %v628 = vadd.f32 0.0, %v627
  %v629 = vpop.f32.mrf.mxu0
  %630 = vmatprep.mubr.bf16.mxu0 %v289
  %631 = vmatmul.mubr.bf16.gmra.mxu0 %v288
  %v632 = vpop.f32.mrf.mxu0
  %v633 = vadd.f32 0.0, %v632
  %v634 = vpop.f32.mrf.mxu0
  %v635 = vpop.f32.mrf.mxu0
  %v636 = vadd.f32 0.0, %v635
  %v637 = vpop.f32.mrf.mxu0
  %638 = vmatprep.mubr.bf16.mxu0 %v291
  %639 = vmatmul.mubr.bf16.gmra.mxu0 %v290
  %v640 = vpop.f32.mrf.mxu0
  %v641 = vadd.f32 0.0, %v640
  %v642 = vpop.f32.mrf.mxu0
  %v643 = vpop.f32.mrf.mxu0
  %v644 = vadd.f32 0.0, %v643
  %v645 = vpop.f32.mrf.mxu0
  %646 = vmatprep.mubr.bf16.mxu0 %v293
  %647 = vmatmul.mubr.bf16.gmra.mxu0 %v292
  %v648 = vpop.f32.mrf.mxu0
  %v649 = vadd.f32 0.0, %v648
  %v650 = vpop.f32.mrf.mxu0
  %v651 = vpop.f32.mrf.mxu0
  %v652 = vadd.f32 0.0, %v651
  %v653 = vpop.f32.mrf.mxu0
  %654 = vmatprep.mubr.bf16.mxu0 %v295
  %655 = vmatmul.mubr.bf16.gmra.mxu0 %v294
  %v656 = vpop.f32.mrf.mxu0
  %v657 = vadd.f32 0.0, %v656
  %v658 = vpop.f32.mrf.mxu0
  %v659 = vpop.f32.mrf.mxu0
  %v660 = vadd.f32 0.0, %v659
  %v661 = vpop.f32.mrf.mxu0
  %662 = vmatprep.mubr.bf16.mxu0 %v297
  %663 = vmatmul.mubr.bf16.gmra.mxu0 %v296
  %v664 = vpop.f32.mrf.mxu0
  %v665 = vadd.f32 0.0, %v664
  %v666 = vpop.f32.mrf.mxu0
  %v667 = vpop.f32.mrf.mxu0
  %v668 = vadd.f32 0.0, %v667
  %v669 = vpop.f32.mrf.mxu0
  %670 = vmatprep.mubr.bf16.mxu0 %v299
  %671 = vmatmul.mubr.bf16.gmra.mxu0 %v298
  %v672 = vpop.f32.mrf.mxu0
  %v673 = vadd.f32 0.0, %v672
  %v674 = vpop.f32.mrf.mxu0
  %v675 = vpop.f32.mrf.mxu0
  %v676 = vadd.f32 0.0, %v675
  %v677 = vpop.f32.mrf.mxu0
  %678 = vdwg.mxu0
  %v679 = vadd.f32 %v481, %v484
  %v680 = vadd.f32 %v679, %v489
  %v681 = vadd.f32 %v680, %v492
  %v682 = vadd.f32 %v681, %v497
  %v683 = vadd.f32 %v682, %v500
  %v684 = vadd.f32 %v683, %v505
  %v685 = vadd.f32 %v684, %v508
  %v686 = vadd.f32 %v685, %v513
  %v687 = vadd.f32 %v686, %v516
  %v688 = vadd.f32 %v687, %v521
  %v689 = vadd.f32 %v688, %v524
  %v690 = vadd.f32 %v689, %v529
  %v691 = vadd.f32 %v690, %v532
  %v692 = vadd.f32 %v691, %v537
  %v693 = vadd.f32 %v692, %v540
  %v694 = vadd.f32 %v693, %v545
  %v695 = vadd.f32 %v694, %v548
  %v696 = vadd.f32 %v695, %v553
  %v697 = vadd.f32 %v696, %v556
  %v698 = vadd.f32 %v697, %v561
  %v699 = vadd.f32 %v698, %v564
  %v700 = vadd.f32 %v699, %v569
  %v701 = vadd.f32 %v700, %v572
  %v702 = vadd.f32 %v701, %v577
  %v703 = vadd.f32 %v702, %v580
  %v704 = vadd.f32 %v703, %v585
  %v705 = vadd.f32 %v704, %v588
  %v706 = vadd.f32 %v705, %v593
  %v707 = vadd.f32 %v706, %v596
  %v708 = vadd.f32 %v707, %v601
  %v709 = vadd.f32 %v708, %v604
  %v710 = vadd.f32 %v709, %v609
  %v711 = vadd.f32 %v710, %v612
  %v712 = vadd.f32 %v711, %v617
  %v713 = vadd.f32 %v712, %v620
  %v714 = vadd.f32 %v713, %v625
  %v715 = vadd.f32 %v714, %v628
  %v716 = vadd.f32 %v715, %v633
  %v717 = vadd.f32 %v716, %v636
  %v718 = vadd.f32 %v717, %v641
  %v719 = vadd.f32 %v718, %v644
  %v720 = vadd.f32 %v719, %v649
  %v721 = vadd.f32 %v720, %v652
  %v722 = vadd.f32 %v721, %v657
  %v723 = vadd.f32 %v722, %v660
  %v724 = vadd.f32 %v723, %v665
  %v725 = vadd.f32 %v724, %v668
  %v726 = vadd.f32 %v725, %v673
  %v727 = vadd.f32 %v726, %v676
  %v728 = vrot.slane %v727, 4
  %v729 = vadd.f32 %v727, %v728
  %v730 = vrot.slane %v729, 2
  %v731 = vadd.f32 %v729, %v730
  %v732 = vrot.slane %v731, 1
  %v733 = vadd.f32 %v731, %v732
  %v734 = vmul.f32 %v733, 0.0025510204
  %v735 = vlaneseq
  %v736 = vshrl.u32 %v735, 7
  %v737 = vadd.s32 %v736, 8
  %v738 = vadd.s32 %v736, 16
  %v739 = vadd.s32 %v736, 24
  %v740 = vadd.s32 %v736, 32
  %v741 = vadd.s32 %v736, 40
  %v742 = vadd.s32 %v736, 48
  %v743 = vadd.s32 %v736, 56
  %v744 = vadd.s32 %v736, 64
  %v745 = vadd.s32 %v736, 72
  %v746 = vadd.s32 %v736, 80
  %v747 = vadd.s32 %v736, 88
  %v748 = vadd.s32 %v736, 96
  %v749 = vadd.s32 %v736, 104
  %v750 = vadd.s32 %v736, 112
  %v751 = vadd.s32 %v736, 120
  %v752 = vadd.s32 %v736, 128
  %v753 = vadd.s32 %v736, 136
  %v754 = vadd.s32 %v736, 144
  %v755 = vadd.s32 %v736, 152
  %v756 = vadd.s32 %v736, 160
  %v757 = vadd.s32 %v736, 168
  %v758 = vadd.s32 %v736, 176
  %v759 = vadd.s32 %v736, 184
  %v760 = vadd.s32 %v736, 192
  %v761 = vadd.s32 %v736, 200
  %v762 = vadd.s32 %v736, 208
  %v763 = vadd.s32 %v736, 216
  %v764 = vadd.s32 %v736, 224
  %v765 = vadd.s32 %v736, 232
  %v766 = vadd.s32 %v736, 240
  %v767 = vadd.s32 %v736, 248
  %v768 = vadd.s32 %v736, 256
  %v769 = vadd.s32 %v736, 264
  %v770 = vadd.s32 %v736, 272
  %v771 = vadd.s32 %v736, 280
  %v772 = vadd.s32 %v736, 288
  %v773 = vadd.s32 %v736, 296
  %v774 = vadd.s32 %v736, 304
  %v775 = vadd.s32 %v736, 312
  %v776 = vadd.s32 %v736, 320
  %v777 = vadd.s32 %v736, 328
  %v778 = vadd.s32 %v736, 336
  %v779 = vadd.s32 %v736, 344
  %v780 = vadd.s32 %v736, 352
  %v781 = vadd.s32 %v736, 360
  %v782 = vadd.s32 %v736, 368
  %v783 = vadd.s32 %v736, 376
  %v784 = vadd.s32 %v736, 384
  %v785 = vadd.s32 %v736, 392
  %vm786 = vcmp.lt.s32.totalorder %v736, 392
  %vm787 = vcmp.lt.s32.totalorder %v737, 392
  %vm788 = vcmp.lt.s32.totalorder %v738, 392
  %vm789 = vcmp.lt.s32.totalorder %v739, 392
  %vm790 = vcmp.lt.s32.totalorder %v740, 392
  %vm791 = vcmp.lt.s32.totalorder %v741, 392
  %vm792 = vcmp.lt.s32.totalorder %v742, 392
  %vm793 = vcmp.lt.s32.totalorder %v743, 392
  %vm794 = vcmp.lt.s32.totalorder %v744, 392
  %vm795 = vcmp.lt.s32.totalorder %v745, 392
  %vm796 = vcmp.lt.s32.totalorder %v746, 392
  %vm797 = vcmp.lt.s32.totalorder %v747, 392
  %vm798 = vcmp.lt.s32.totalorder %v748, 392
  %vm799 = vcmp.lt.s32.totalorder %v749, 392
  %vm800 = vcmp.lt.s32.totalorder %v750, 392
  %vm801 = vcmp.lt.s32.totalorder %v751, 392
  %vm802 = vcmp.lt.s32.totalorder %v752, 392
  %vm803 = vcmp.lt.s32.totalorder %v753, 392
  %vm804 = vcmp.lt.s32.totalorder %v754, 392
  %vm805 = vcmp.lt.s32.totalorder %v755, 392
  %vm806 = vcmp.lt.s32.totalorder %v756, 392
  %vm807 = vcmp.lt.s32.totalorder %v757, 392
  %vm808 = vcmp.lt.s32.totalorder %v758, 392
  %vm809 = vcmp.lt.s32.totalorder %v759, 392
  %vm810 = vcmp.lt.s32.totalorder %v760, 392
  %vm811 = vcmp.lt.s32.totalorder %v761, 392
  %vm812 = vcmp.lt.s32.totalorder %v762, 392
  %vm813 = vcmp.lt.s32.totalorder %v763, 392
  %vm814 = vcmp.lt.s32.totalorder %v764, 392
  %vm815 = vcmp.lt.s32.totalorder %v765, 392
  %vm816 = vcmp.lt.s32.totalorder %v766, 392
  %vm817 = vcmp.lt.s32.totalorder %v767, 392
  %vm818 = vcmp.lt.s32.totalorder %v768, 392
  %vm819 = vcmp.lt.s32.totalorder %v769, 392
  %vm820 = vcmp.lt.s32.totalorder %v770, 392
  %vm821 = vcmp.lt.s32.totalorder %v771, 392
  %vm822 = vcmp.lt.s32.totalorder %v772, 392
  %vm823 = vcmp.lt.s32.totalorder %v773, 392
  %vm824 = vcmp.lt.s32.totalorder %v774, 392
  %vm825 = vcmp.lt.s32.totalorder %v775, 392
  %vm826 = vcmp.lt.s32.totalorder %v776, 392
  %vm827 = vcmp.lt.s32.totalorder %v777, 392
  %vm828 = vcmp.lt.s32.totalorder %v778, 392
  %vm829 = vcmp.lt.s32.totalorder %v779, 392
  %vm830 = vcmp.lt.s32.totalorder %v780, 392
  %vm831 = vcmp.lt.s32.totalorder %v781, 392
  %vm832 = vcmp.lt.s32.totalorder %v782, 392
  %vm833 = vcmp.lt.s32.totalorder %v783, 392
  %vm834 = vcmp.lt.s32.totalorder %v784, 392
  %vm835 = vcmp.lt.s32.totalorder %v785, 392
  %v836 = vsub.f32 %v481, %v734
  %v837 = vsub.f32 %v484, %v734
  %v838 = vsub.f32 %v489, %v734
  %v839 = vsub.f32 %v492, %v734
  %v840 = vsub.f32 %v497, %v734
  %v841 = vsub.f32 %v500, %v734
  %v842 = vsub.f32 %v505, %v734
  %v843 = vsub.f32 %v508, %v734
  %v844 = vsub.f32 %v513, %v734
  %v845 = vsub.f32 %v516, %v734
  %v846 = vsub.f32 %v521, %v734
  %v847 = vsub.f32 %v524, %v734
  %v848 = vsub.f32 %v529, %v734
  %v849 = vsub.f32 %v532, %v734
  %v850 = vsub.f32 %v537, %v734
  %v851 = vsub.f32 %v540, %v734
  %v852 = vsub.f32 %v545, %v734
  %v853 = vsub.f32 %v548, %v734
  %v854 = vsub.f32 %v553, %v734
  %v855 = vsub.f32 %v556, %v734
  %v856 = vsub.f32 %v561, %v734
  %v857 = vsub.f32 %v564, %v734
  %v858 = vsub.f32 %v569, %v734
  %v859 = vsub.f32 %v572, %v734
  %v860 = vsub.f32 %v577, %v734
  %v861 = vsub.f32 %v580, %v734
  %v862 = vsub.f32 %v585, %v734
  %v863 = vsub.f32 %v588, %v734
  %v864 = vsub.f32 %v593, %v734
  %v865 = vsub.f32 %v596, %v734
  %v866 = vsub.f32 %v601, %v734
  %v867 = vsub.f32 %v604, %v734
  %v868 = vsub.f32 %v609, %v734
  %v869 = vsub.f32 %v612, %v734
  %v870 = vsub.f32 %v617, %v734
  %v871 = vsub.f32 %v620, %v734
  %v872 = vsub.f32 %v625, %v734
  %v873 = vsub.f32 %v628, %v734
  %v874 = vsub.f32 %v633, %v734
  %v875 = vsub.f32 %v636, %v734
  %v876 = vsub.f32 %v641, %v734
  %v877 = vsub.f32 %v644, %v734
  %v878 = vsub.f32 %v649, %v734
  %v879 = vsub.f32 %v652, %v734
  %v880 = vsub.f32 %v657, %v734
  %v881 = vsub.f32 %v660, %v734
  %v882 = vsub.f32 %v665, %v734
  %v883 = vsub.f32 %v668, %v734
  %v884 = vsub.f32 %v673, %v734
  %v885 = vsub.f32 %v676, %v734
  %v886 = vsel %vm786, %v836, 0.0
  %v887 = vsel %vm787, %v837, 0.0
  %v888 = vsel %vm788, %v838, 0.0
  %v889 = vsel %vm789, %v839, 0.0
  %v890 = vsel %vm790, %v840, 0.0
  %v891 = vsel %vm791, %v841, 0.0
  %v892 = vsel %vm792, %v842, 0.0
  %v893 = vsel %vm793, %v843, 0.0
  %v894 = vsel %vm794, %v844, 0.0
  %v895 = vsel %vm795, %v845, 0.0
  %v896 = vsel %vm796, %v846, 0.0
  %v897 = vsel %vm797, %v847, 0.0
  %v898 = vsel %vm798, %v848, 0.0
  %v899 = vsel %vm799, %v849, 0.0
  %v900 = vsel %vm800, %v850, 0.0
  %v901 = vsel %vm801, %v851, 0.0
  %v902 = vsel %vm802, %v852, 0.0
  %v903 = vsel %vm803, %v853, 0.0
  %v904 = vsel %vm804, %v854, 0.0
  %v905 = vsel %vm805, %v855, 0.0
  %v906 = vsel %vm806, %v856, 0.0
  %v907 = vsel %vm807, %v857, 0.0
  %v908 = vsel %vm808, %v858, 0.0
  %v909 = vsel %vm809, %v859, 0.0
  %v910 = vsel %vm810, %v860, 0.0
  %v911 = vsel %vm811, %v861, 0.0
  %v912 = vsel %vm812, %v862, 0.0
  %v913 = vsel %vm813, %v863, 0.0
  %v914 = vsel %vm814, %v864, 0.0
  %v915 = vsel %vm815, %v865, 0.0
  %v916 = vsel %vm816, %v866, 0.0
  %v917 = vsel %vm817, %v867, 0.0
  %v918 = vsel %vm818, %v868, 0.0
  %v919 = vsel %vm819, %v869, 0.0
  %v920 = vsel %vm820, %v870, 0.0
  %v921 = vsel %vm821, %v871, 0.0
  %v922 = vsel %vm822, %v872, 0.0
  %v923 = vsel %vm823, %v873, 0.0
  %v924 = vsel %vm824, %v874, 0.0
  %v925 = vsel %vm825, %v875, 0.0
  %v926 = vsel %vm826, %v876, 0.0
  %v927 = vsel %vm827, %v877, 0.0
  %v928 = vsel %vm828, %v878, 0.0
  %v929 = vsel %vm829, %v879, 0.0
  %v930 = vsel %vm830, %v880, 0.0
  %v931 = vsel %vm831, %v881, 0.0
  %v932 = vsel %vm832, %v882, 0.0
  %v933 = vsel %vm833, %v883, 0.0
  %v934 = vsel %vm834, %v884, 0.0
  %v935 = vsel %vm835, %v885, 0.0
  %v936 = vmul.f32 %v886, %v886
  %v937 = vmul.f32 %v887, %v887
  %v938 = vmul.f32 %v888, %v888
  %v939 = vmul.f32 %v889, %v889
  %v940 = vmul.f32 %v890, %v890
  %v941 = vmul.f32 %v891, %v891
  %v942 = vmul.f32 %v892, %v892
  %v943 = vmul.f32 %v893, %v893
  %v944 = vmul.f32 %v894, %v894
  %v945 = vmul.f32 %v895, %v895
  %v946 = vmul.f32 %v896, %v896
  %v947 = vmul.f32 %v897, %v897
  %v948 = vmul.f32 %v898, %v898
  %v949 = vmul.f32 %v899, %v899
  %v950 = vmul.f32 %v900, %v900
  %v951 = vmul.f32 %v901, %v901
  %v952 = vmul.f32 %v902, %v902
  %v953 = vmul.f32 %v903, %v903
  %v954 = vmul.f32 %v904, %v904
  %v955 = vmul.f32 %v905, %v905
  %v956 = vmul.f32 %v906, %v906
  %v957 = vmul.f32 %v907, %v907
  %v958 = vmul.f32 %v908, %v908
  %v959 = vmul.f32 %v909, %v909
  %v960 = vmul.f32 %v910, %v910
  %v961 = vmul.f32 %v911, %v911
  %v962 = vmul.f32 %v912, %v912
  %v963 = vmul.f32 %v913, %v913
  %v964 = vmul.f32 %v914, %v914
  %v965 = vmul.f32 %v915, %v915
  %v966 = vmul.f32 %v916, %v916
  %v967 = vmul.f32 %v917, %v917
  %v968 = vmul.f32 %v918, %v918
  %v969 = vmul.f32 %v919, %v919
  %v970 = vmul.f32 %v920, %v920
  %v971 = vmul.f32 %v921, %v921
  %v972 = vmul.f32 %v922, %v922
  %v973 = vmul.f32 %v923, %v923
  %v974 = vmul.f32 %v924, %v924
  %v975 = vmul.f32 %v925, %v925
  %v976 = vmul.f32 %v926, %v926
  %v977 = vmul.f32 %v927, %v927
  %v978 = vmul.f32 %v928, %v928
  %v979 = vmul.f32 %v929, %v929
  %v980 = vmul.f32 %v930, %v930
  %v981 = vmul.f32 %v931, %v931
  %v982 = vmul.f32 %v932, %v932
  %v983 = vmul.f32 %v933, %v933
  %v984 = vmul.f32 %v934, %v934
  %v985 = vmul.f32 %v935, %v935
  %v986 = vadd.f32 %v936, %v937
  %v987 = vadd.f32 %v986, %v938
  %v988 = vadd.f32 %v987, %v939
  %v989 = vadd.f32 %v988, %v940
  %v990 = vadd.f32 %v989, %v941
  %v991 = vadd.f32 %v990, %v942
  %v992 = vadd.f32 %v991, %v943
  %v993 = vadd.f32 %v992, %v944
  %v994 = vadd.f32 %v993, %v945
  %v995 = vadd.f32 %v994, %v946
  %v996 = vadd.f32 %v995, %v947
  %v997 = vadd.f32 %v996, %v948
  %v998 = vadd.f32 %v997, %v949
  %v999 = vadd.f32 %v998, %v950
  %v1000 = vadd.f32 %v999, %v951
  %v1001 = vadd.f32 %v1000, %v952
  %v1002 = vadd.f32 %v1001, %v953
  %v1003 = vadd.f32 %v1002, %v954
  %v1004 = vadd.f32 %v1003, %v955
  %v1005 = vadd.f32 %v1004, %v956
  %v1006 = vadd.f32 %v1005, %v957
  %v1007 = vadd.f32 %v1006, %v958
  %v1008 = vadd.f32 %v1007, %v959
  %v1009 = vadd.f32 %v1008, %v960
  %v1010 = vadd.f32 %v1009, %v961
  %v1011 = vadd.f32 %v1010, %v962
  %v1012 = vadd.f32 %v1011, %v963
  %v1013 = vadd.f32 %v1012, %v964
  %v1014 = vadd.f32 %v1013, %v965
  %v1015 = vadd.f32 %v1014, %v966
  %v1016 = vadd.f32 %v1015, %v967
  %v1017 = vadd.f32 %v1016, %v968
  %v1018 = vadd.f32 %v1017, %v969
  %v1019 = vadd.f32 %v1018, %v970
  %v1020 = vadd.f32 %v1019, %v971
  %v1021 = vadd.f32 %v1020, %v972
  %v1022 = vadd.f32 %v1021, %v973
  %v1023 = vadd.f32 %v1022, %v974
  %v1024 = vadd.f32 %v1023, %v975
  %v1025 = vadd.f32 %v1024, %v976
  %v1026 = vadd.f32 %v1025, %v977
  %v1027 = vadd.f32 %v1026, %v978
  %v1028 = vadd.f32 %v1027, %v979
  %v1029 = vadd.f32 %v1028, %v980
  %v1030 = vadd.f32 %v1029, %v981
  %v1031 = vadd.f32 %v1030, %v982
  %v1032 = vadd.f32 %v1031, %v983
  %v1033 = vadd.f32 %v1032, %v984
  %v1034 = vadd.f32 %v1033, %v985
  %v1035 = vrot.slane %v1034, 4
  %v1036 = vadd.f32 %v1034, %v1035
  %v1037 = vrot.slane %v1036, 2
  %v1038 = vadd.f32 %v1036, %v1037
  %v1039 = vrot.slane %v1038, 1
  %v1040 = vadd.f32 %v1038, %v1039
  %v1041 = vmul.f32 %v1040, 0.0025510204
  %v1042 = vld [vmem:[%s2] sm:$0x1]
  %v1043 = vadd.f32 %v1041, 1e-05
  %v1044 = vrsqrt.pop %v1043
  %v1045 = vmul.f32 %v1042, %v1044
  %v1046 = vld [vmem:[%s3] sm:$0x1]
  %v1047 = vmul.f32 %v734, %v1045
  %v1048 = vsub.f32 %v1046, %v1047
  %v1050 = vlaneseq
  %v1051 = vshrl.u32 %v1050, 7
  %v1052 = vsub.s32 0, %v1051
  %v1053 = vrot.slane %v1045, %v1052
  %v1055 = vmul.f32 %v481, %v1053
  %v1056 = vmul.f32 %v484, %v1053
  %v1057 = vmul.f32 %v489, %v1053
  %v1058 = vmul.f32 %v492, %v1053
  %v1059 = vmul.f32 %v497, %v1053
  %v1060 = vmul.f32 %v500, %v1053
  %v1061 = vmul.f32 %v505, %v1053
  %v1062 = vmul.f32 %v508, %v1053
  %v1063 = vmul.f32 %v513, %v1053
  %v1064 = vmul.f32 %v516, %v1053
  %v1065 = vmul.f32 %v521, %v1053
  %v1066 = vmul.f32 %v524, %v1053
  %v1067 = vmul.f32 %v529, %v1053
  %v1068 = vmul.f32 %v532, %v1053
  %v1069 = vmul.f32 %v537, %v1053
  %v1070 = vmul.f32 %v540, %v1053
  %v1071 = vmul.f32 %v545, %v1053
  %v1072 = vmul.f32 %v548, %v1053
  %v1073 = vmul.f32 %v553, %v1053
  %v1074 = vmul.f32 %v556, %v1053
  %v1075 = vmul.f32 %v561, %v1053
  %v1076 = vmul.f32 %v564, %v1053
  %v1077 = vmul.f32 %v569, %v1053
  %v1078 = vmul.f32 %v572, %v1053
  %v1079 = vmul.f32 %v577, %v1053
  %v1080 = vmul.f32 %v580, %v1053
  %v1081 = vmul.f32 %v585, %v1053
  %v1082 = vmul.f32 %v588, %v1053
  %v1083 = vmul.f32 %v593, %v1053
  %v1084 = vmul.f32 %v596, %v1053
  %v1085 = vmul.f32 %v601, %v1053
  %v1086 = vmul.f32 %v604, %v1053
  %v1087 = vmul.f32 %v609, %v1053
  %v1088 = vmul.f32 %v612, %v1053
  %v1089 = vmul.f32 %v617, %v1053
  %v1090 = vmul.f32 %v620, %v1053
  %v1091 = vmul.f32 %v625, %v1053
  %v1092 = vmul.f32 %v628, %v1053
  %v1093 = vmul.f32 %v633, %v1053
  %v1094 = vmul.f32 %v636, %v1053
  %v1095 = vmul.f32 %v641, %v1053
  %v1096 = vmul.f32 %v644, %v1053
  %v1097 = vmul.f32 %v649, %v1053
  %v1098 = vmul.f32 %v652, %v1053
  %v1099 = vmul.f32 %v657, %v1053
  %v1100 = vmul.f32 %v660, %v1053
  %v1101 = vmul.f32 %v665, %v1053
  %v1102 = vmul.f32 %v668, %v1053
  %v1103 = vmul.f32 %v673, %v1053
  %v1104 = vmul.f32 %v676, %v1053
  %v1106 = vlaneseq
  %v1107 = vshrl.u32 %v1106, 7
  %v1108 = vsub.s32 0, %v1107
  %v1109 = vrot.slane %v1048, %v1108
  %v1111 = vadd.f32 %v1055, %v1109
  %v1112 = vadd.f32 %v1056, %v1109
  %v1113 = vadd.f32 %v1057, %v1109
  %v1114 = vadd.f32 %v1058, %v1109
  %v1115 = vadd.f32 %v1059, %v1109
  %v1116 = vadd.f32 %v1060, %v1109
  %v1117 = vadd.f32 %v1061, %v1109
  %v1118 = vadd.f32 %v1062, %v1109
  %v1119 = vadd.f32 %v1063, %v1109
  %v1120 = vadd.f32 %v1064, %v1109
  %v1121 = vadd.f32 %v1065, %v1109
  %v1122 = vadd.f32 %v1066, %v1109
  %v1123 = vadd.f32 %v1067, %v1109
  %v1124 = vadd.f32 %v1068, %v1109
  %v1125 = vadd.f32 %v1069, %v1109
  %v1126 = vadd.f32 %v1070, %v1109
  %v1127 = vadd.f32 %v1071, %v1109
  %v1128 = vadd.f32 %v1072, %v1109
  %v1129 = vadd.f32 %v1073, %v1109
  %v1130 = vadd.f32 %v1074, %v1109
  %v1131 = vadd.f32 %v1075, %v1109
  %v1132 = vadd.f32 %v1076, %v1109
  %v1133 = vadd.f32 %v1077, %v1109
  %v1134 = vadd.f32 %v1078, %v1109
  %v1135 = vadd.f32 %v1079, %v1109
  %v1136 = vadd.f32 %v1080, %v1109
  %v1137 = vadd.f32 %v1081, %v1109
  %v1138 = vadd.f32 %v1082, %v1109
  %v1139 = vadd.f32 %v1083, %v1109
  %v1140 = vadd.f32 %v1084, %v1109
  %v1141 = vadd.f32 %v1085, %v1109
  %v1142 = vadd.f32 %v1086, %v1109
  %v1143 = vadd.f32 %v1087, %v1109
  %v1144 = vadd.f32 %v1088, %v1109
  %v1145 = vadd.f32 %v1089, %v1109
  %v1146 = vadd.f32 %v1090, %v1109
  %v1147 = vadd.f32 %v1091, %v1109
  %v1148 = vadd.f32 %v1092, %v1109
  %v1149 = vadd.f32 %v1093, %v1109
  %v1150 = vadd.f32 %v1094, %v1109
  %v1151 = vadd.f32 %v1095, %v1109
  %v1152 = vadd.f32 %v1096, %v1109
  %v1153 = vadd.f32 %v1097, %v1109
  %v1154 = vadd.f32 %v1098, %v1109
  %v1155 = vadd.f32 %v1099, %v1109
  %v1156 = vadd.f32 %v1100, %v1109
  %v1157 = vadd.f32 %v1101, %v1109
  %v1158 = vadd.f32 %v1102, %v1109
  %v1159 = vadd.f32 %v1103, %v1109
  %v1160 = vadd.f32 %v1104, %v1109
  %v1161 = vmax.f32 %v1111, 0.0
  %v1162 = vmax.f32 %v1112, 0.0
  %v1163 = vmax.f32 %v1113, 0.0
  %v1164 = vmax.f32 %v1114, 0.0
  %v1165 = vmax.f32 %v1115, 0.0
  %v1166 = vmax.f32 %v1116, 0.0
  %v1167 = vmax.f32 %v1117, 0.0
  %v1168 = vmax.f32 %v1118, 0.0
  %v1169 = vmax.f32 %v1119, 0.0
  %v1170 = vmax.f32 %v1120, 0.0
  %v1171 = vmax.f32 %v1121, 0.0
  %v1172 = vmax.f32 %v1122, 0.0
  %v1173 = vmax.f32 %v1123, 0.0
  %v1174 = vmax.f32 %v1124, 0.0
  %v1175 = vmax.f32 %v1125, 0.0
  %v1176 = vmax.f32 %v1126, 0.0
  %v1177 = vmax.f32 %v1127, 0.0
  %v1178 = vmax.f32 %v1128, 0.0
  %v1179 = vmax.f32 %v1129, 0.0
  %v1180 = vmax.f32 %v1130, 0.0
  %v1181 = vmax.f32 %v1131, 0.0
  %v1182 = vmax.f32 %v1132, 0.0
  %v1183 = vmax.f32 %v1133, 0.0
  %v1184 = vmax.f32 %v1134, 0.0
  %v1185 = vmax.f32 %v1135, 0.0
  %v1186 = vmax.f32 %v1136, 0.0
  %v1187 = vmax.f32 %v1137, 0.0
  %v1188 = vmax.f32 %v1138, 0.0
  %v1189 = vmax.f32 %v1139, 0.0
  %v1190 = vmax.f32 %v1140, 0.0
  %v1191 = vmax.f32 %v1141, 0.0
  %v1192 = vmax.f32 %v1142, 0.0
  %v1193 = vmax.f32 %v1143, 0.0
  %v1194 = vmax.f32 %v1144, 0.0
  %v1195 = vmax.f32 %v1145, 0.0
  %v1196 = vmax.f32 %v1146, 0.0
  %v1197 = vmax.f32 %v1147, 0.0
  %v1198 = vmax.f32 %v1148, 0.0
  %v1199 = vmax.f32 %v1149, 0.0
  %v1200 = vmax.f32 %v1150, 0.0
  %v1201 = vmax.f32 %v1151, 0.0
  %v1202 = vmax.f32 %v1152, 0.0
  %v1203 = vmax.f32 %v1153, 0.0
  %v1204 = vmax.f32 %v1154, 0.0
  %v1205 = vmax.f32 %v1155, 0.0
  %v1206 = vmax.f32 %v1156, 0.0
  %v1207 = vmax.f32 %v1157, 0.0
  %v1208 = vmax.f32 %v1158, 0.0
  %v1209 = vmax.f32 %v1159, 0.0
  %v1210 = vmax.f32 %v1160, 0.0
  %v1211 = vpack.c.bf16 %v1162, %v1161
  %v1212 = vpack.c.bf16 %v1164, %v1163
  %v1213 = vpack.c.bf16 %v1166, %v1165
  %v1214 = vpack.c.bf16 %v1168, %v1167
  %v1215 = vpack.c.bf16 %v1170, %v1169
  %v1216 = vpack.c.bf16 %v1172, %v1171
  %v1217 = vpack.c.bf16 %v1174, %v1173
  %v1218 = vpack.c.bf16 %v1176, %v1175
  %v1219 = vpack.c.bf16 %v1178, %v1177
  %v1220 = vpack.c.bf16 %v1180, %v1179
  %v1221 = vpack.c.bf16 %v1182, %v1181
  %v1222 = vpack.c.bf16 %v1184, %v1183
  %v1223 = vpack.c.bf16 %v1186, %v1185
  %v1224 = vpack.c.bf16 %v1188, %v1187
  %v1225 = vpack.c.bf16 %v1190, %v1189
  %v1226 = vpack.c.bf16 %v1192, %v1191
  %v1227 = vpack.c.bf16 %v1194, %v1193
  %v1228 = vpack.c.bf16 %v1196, %v1195
  %v1229 = vpack.c.bf16 %v1198, %v1197
  %v1230 = vpack.c.bf16 %v1200, %v1199
  %v1231 = vpack.c.bf16 %v1202, %v1201
  %v1232 = vpack.c.bf16 %v1204, %v1203
  %v1233 = vpack.c.bf16 %v1206, %v1205
  %v1234 = vpack.c.bf16 %v1208, %v1207
  %v1235 = vpack.c.bf16 %v1210, %v1209
  %v1261 = vunpack.c.l.b16 %v1211
  %v1262 = vunpack.c.h.b16 %v1211
  %v1263 = vunpack.c.l.b16 %v1212
  %v1264 = vunpack.c.h.b16 %v1212
  %v1265 = vunpack.c.l.b16 %v1213
  %v1266 = vunpack.c.h.b16 %v1213
  %v1267 = vunpack.c.l.b16 %v1214
  %v1268 = vunpack.c.h.b16 %v1214
  %v1269 = vunpack.c.l.b16 %v1215
  %v1270 = vunpack.c.h.b16 %v1215
  %v1271 = vunpack.c.l.b16 %v1216
  %v1272 = vunpack.c.h.b16 %v1216
  %v1273 = vunpack.c.l.b16 %v1217
  %v1274 = vunpack.c.h.b16 %v1217
  %v1275 = vunpack.c.l.b16 %v1218
  %v1276 = vunpack.c.h.b16 %v1218
  %v1277 = vunpack.c.l.b16 %v1219
  %v1278 = vunpack.c.h.b16 %v1219
  %v1279 = vunpack.c.l.b16 %v1220
  %v1280 = vunpack.c.h.b16 %v1220
  %v1281 = vunpack.c.l.b16 %v1221
  %v1282 = vunpack.c.h.b16 %v1221
  %v1283 = vunpack.c.l.b16 %v1222
  %v1284 = vunpack.c.h.b16 %v1222
  %v1285 = vunpack.c.l.b16 %v1223
  %v1286 = vunpack.c.h.b16 %v1223
  %v1287 = vunpack.c.l.b16 %v1224
  %v1288 = vunpack.c.h.b16 %v1224
  %v1289 = vunpack.c.l.b16 %v1225
  %v1290 = vunpack.c.h.b16 %v1225
  %v1291 = vunpack.c.l.b16 %v1226
  %v1292 = vunpack.c.h.b16 %v1226
  %v1293 = vunpack.c.l.b16 %v1227
  %v1294 = vunpack.c.h.b16 %v1227
  %v1295 = vunpack.c.l.b16 %v1228
  %v1296 = vunpack.c.h.b16 %v1228
  %v1297 = vunpack.c.l.b16 %v1229
  %v1298 = vunpack.c.h.b16 %v1229
  %v1299 = vunpack.c.l.b16 %v1230
  %v1300 = vunpack.c.h.b16 %v1230
  %v1301 = vunpack.c.l.b16 %v1231
  %v1302 = vunpack.c.h.b16 %v1231
  %v1303 = vunpack.c.l.b16 %v1232
  %v1304 = vunpack.c.h.b16 %v1232
  %v1305 = vunpack.c.l.b16 %v1233
  %v1306 = vunpack.c.h.b16 %v1233
  %v1307 = vunpack.c.l.b16 %v1234
  %v1308 = vunpack.c.h.b16 %v1234
  %v1309 = vunpack.c.l.b16 %v1235
  %v1310 = vunpack.c.h.b16 %v1235
  %v1311 = vpack.c.b16 %v1261, %v1261
  %v1312 = vpack.c.b16 %v1262, %v1262
  %v1313 = vpack.c.b16 %v1263, %v1263
  %v1314 = vpack.c.b16 %v1264, %v1264
  %v1315 = vpack.c.b16 %v1265, %v1265
  %v1316 = vpack.c.b16 %v1266, %v1266
  %v1317 = vpack.c.b16 %v1267, %v1267
  %v1318 = vpack.c.b16 %v1268, %v1268
  %v1319 = vpack.c.b16 %v1269, %v1269
  %v1320 = vpack.c.b16 %v1270, %v1270
  %v1321 = vpack.c.b16 %v1271, %v1271
  %v1322 = vpack.c.b16 %v1272, %v1272
  %v1323 = vpack.c.b16 %v1273, %v1273
  %v1324 = vpack.c.b16 %v1274, %v1274
  %v1325 = vpack.c.b16 %v1275, %v1275
  %v1326 = vpack.c.b16 %v1276, %v1276
  %v1327 = vpack.c.b16 %v1277, %v1277
  %v1328 = vpack.c.b16 %v1278, %v1278
  %v1329 = vpack.c.b16 %v1279, %v1279
  %v1330 = vpack.c.b16 %v1280, %v1280
  %v1331 = vpack.c.b16 %v1281, %v1281
  %v1332 = vpack.c.b16 %v1282, %v1282
  %v1333 = vpack.c.b16 %v1283, %v1283
  %v1334 = vpack.c.b16 %v1284, %v1284
  %v1335 = vpack.c.b16 %v1285, %v1285
  %v1336 = vpack.c.b16 %v1286, %v1286
  %v1337 = vpack.c.b16 %v1287, %v1287
  %v1338 = vpack.c.b16 %v1288, %v1288
  %v1339 = vpack.c.b16 %v1289, %v1289
  %v1340 = vpack.c.b16 %v1290, %v1290
  %v1341 = vpack.c.b16 %v1291, %v1291
  %v1342 = vpack.c.b16 %v1292, %v1292
  %v1343 = vpack.c.b16 %v1293, %v1293
  %v1344 = vpack.c.b16 %v1294, %v1294
  %v1345 = vpack.c.b16 %v1295, %v1295
  %v1346 = vpack.c.b16 %v1296, %v1296
  %v1347 = vpack.c.b16 %v1297, %v1297
  %v1348 = vpack.c.b16 %v1298, %v1298
  %v1349 = vpack.c.b16 %v1299, %v1299
  %v1350 = vpack.c.b16 %v1300, %v1300
  %v1351 = vpack.c.b16 %v1301, %v1301
  %v1352 = vpack.c.b16 %v1302, %v1302
  %v1353 = vpack.c.b16 %v1303, %v1303
  %v1354 = vpack.c.b16 %v1304, %v1304
  %v1355 = vpack.c.b16 %v1305, %v1305
  %v1356 = vpack.c.b16 %v1306, %v1306
  %v1357 = vpack.c.b16 %v1307, %v1307
  %v1358 = vpack.c.b16 %v1308, %v1308
  %v1359 = vpack.c.b16 %v1309, %v1309
  %v1360 = vpack.c.b16 %v1310, %v1310
  %1411 = vst [vmem:[%s4] sm:$0xf] %v1311
  %1412 = vst [vmem:[%s4 + $0x4] sm:$0xf] %v1312
  %1413 = vst [vmem:[%s4 + $0x8] sm:$0xf] %v1313
  %1414 = vst [vmem:[%s4 + $0xc] sm:$0xf] %v1314
  %1415 = vst [vmem:[%s4 + $0x10] sm:$0xf] %v1315
  %1416 = vst [vmem:[%s4 + $0x14] sm:$0xf] %v1316
  %1417 = vst [vmem:[%s4 + $0x18] sm:$0xf] %v1317
  %1418 = vst [vmem:[%s4 + $0x1c] sm:$0xf] %v1318
  %1419 = vst [vmem:[%s4 + $0x20] sm:$0xf] %v1319
  %1420 = vst [vmem:[%s4 + $0x24] sm:$0xf] %v1320
  %1421 = vst [vmem:[%s4 + $0x28] sm:$0xf] %v1321
  %1422 = vst [vmem:[%s4 + $0x2c] sm:$0xf] %v1322
  %1423 = vst [vmem:[%s4 + $0x30] sm:$0xf] %v1323
  %1424 = vst [vmem:[%s4 + $0x34] sm:$0xf] %v1324
  %1425 = vst [vmem:[%s4 + $0x38] sm:$0xf] %v1325
  %1426 = vst [vmem:[%s4 + $0x3c] sm:$0xf] %v1326
  %1427 = vst [vmem:[%s4 + $0x40] sm:$0xf] %v1327
  %1428 = vst [vmem:[%s4 + $0x44] sm:$0xf] %v1328
  %1429 = vst [vmem:[%s4 + $0x48] sm:$0xf] %v1329
  %1430 = vst [vmem:[%s4 + $0x4c] sm:$0xf] %v1330
  %1431 = vst [vmem:[%s4 + $0x50] sm:$0xf] %v1331
  %1432 = vst [vmem:[%s4 + $0x54] sm:$0xf] %v1332
  %1433 = vst [vmem:[%s4 + $0x58] sm:$0xf] %v1333
  %1434 = vst [vmem:[%s4 + $0x5c] sm:$0xf] %v1334
  %1435 = vst [vmem:[%s4 + $0x60] sm:$0xf] %v1335
  %1436 = vst [vmem:[%s4 + $0x64] sm:$0xf] %v1336
  %1437 = vst [vmem:[%s4 + $0x68] sm:$0xf] %v1337
  %1438 = vst [vmem:[%s4 + $0x6c] sm:$0xf] %v1338
  %1439 = vst [vmem:[%s4 + $0x70] sm:$0xf] %v1339
  %1440 = vst [vmem:[%s4 + $0x74] sm:$0xf] %v1340
  %1441 = vst [vmem:[%s4 + $0x78] sm:$0xf] %v1341
  %1442 = vst [vmem:[%s4 + $0x7c] sm:$0xf] %v1342
  %1443 = vst [vmem:[%s4 + $0x80] sm:$0xf] %v1343
  %1444 = vst [vmem:[%s4 + $0x84] sm:$0xf] %v1344
  %1445 = vst [vmem:[%s4 + $0x88] sm:$0xf] %v1345
  %1446 = vst [vmem:[%s4 + $0x8c] sm:$0xf] %v1346
  %1447 = vst [vmem:[%s4 + $0x90] sm:$0xf] %v1347
  %1448 = vst [vmem:[%s4 + $0x94] sm:$0xf] %v1348
  %1449 = vst [vmem:[%s4 + $0x98] sm:$0xf] %v1349
  %1450 = vst [vmem:[%s4 + $0x9c] sm:$0xf] %v1350
  %1451 = vst [vmem:[%s4 + $0xa0] sm:$0xf] %v1351
  %1452 = vst [vmem:[%s4 + $0xa4] sm:$0xf] %v1352
  %1453 = vst [vmem:[%s4 + $0xa8] sm:$0xf] %v1353
  %1454 = vst [vmem:[%s4 + $0xac] sm:$0xf] %v1354
  %1455 = vst [vmem:[%s4 + $0xb0] sm:$0xf] %v1355
  %1456 = vst [vmem:[%s4 + $0xb4] sm:$0xf] %v1356
  %1457 = vst [vmem:[%s4 + $0xb8] sm:$0xf] %v1357
  %1458 = vst [vmem:[%s4 + $0xbc] sm:$0xf] %v1358
  %1459 = vst [vmem:[%s4 + $0xc0] sm:$0xf] %v1359
  %1460 = vst [vmem:[%s4 + $0xc4] sm:$0xf] %v1360
  // Predicated region
  $region18: #{generator_forward.6} parent=0 // pred_check
    _
  $region19: #{generator_forward.6} parent=0 // pred_check_branch
    %1462 = sbr.rel (0) target = $region21
  $region20: #{generator_forward.6} parent=0 // pred_region
    _
  $region21: #{generator_forward.6} parent=0 // pred_fallthru
    _
  // Predicated region
  $region22: #{generator_forward.6} parent=0 // pred_check
    _
  $region23: #{generator_forward.6} parent=0 // pred_check_branch
    %1464 = sbr.rel (0) target = $region25
  $region24: #{generator_forward.6} parent=0 // pred_region
    _
  $region25: #{generator_forward.6} parent=0 // pred_fallthru
    _

// kernel: generator_forward.7
$region0: #{generator_forward.7}
  #allocation0 [shape = 'u32[]', space=smem, size = 0x4, offset = 0x4, fixed_abs, tag = 'smem constant byte address 0x4 - core index']
  #allocation1 [shape = 'u32[144,128]{1,0:T(1,128)}', space=vmem, size = 0x12000, scoped, tag = 'internal scratch']
  %s0 = inlined_call_operand.vmem [shape: bf16[8,128], index: 0, kind: input, shape index: {}]
  %s1 = inlined_call_operand.vmem [shape: bf16[128,1664], index: 1, kind: input, shape index: {}]
  %s2 = inlined_call_operand.vmem [shape: f32[8,1664], index: 2, kind: output, shape index: {}]
  %s3 = sld [smem:[#allocation0]]
  $region18: #{generator_forward.7} parent=0
    _
  %s5 = ssub.s32 1, %s3
  %s6 = scalar_select 0, %s5, %s3
  // Predicated region
  $region2: #{generator_forward.7} parent=0 // pred_check
    _
  $region3: #{generator_forward.7} parent=0 // pred_check_branch
    %8 = sbr.rel (0) target = $region5
  $region4: #{generator_forward.7} parent=0 // pred_region
    _
  $region5: #{generator_forward.7} parent=0 // pred_fallthru
    _
  // Predicated region
  $region6: #{generator_forward.7} parent=0 // pred_check
    _
  $region7: #{generator_forward.7} parent=0 // pred_check_branch
    %10 = sbr.rel (0) target = $region9
  $region8: #{generator_forward.7} parent=0 // pred_region
    _
  $region9: #{generator_forward.7} parent=0 // pred_fallthru
    _
  %v12 = vld [vmem:[%s0] sm:$0xf]
  %v13 = vld [vmem:[%s1] sm:$0xff]
  %v14 = vld [vmem:[%s1 + $0x8] sm:$0xff]
  %v15 = vld [vmem:[%s1 + $0x10] sm:$0xff]
  %v16 = vld [vmem:[%s1 + $0x18] sm:$0xff]
  %v17 = vld [vmem:[%s1 + $0x20] sm:$0xff]
  %v18 = vld [vmem:[%s1 + $0x28] sm:$0xff]
  %v19 = vld [vmem:[%s1 + $0x30] sm:$0xf]
  %v20 = vld [vmem:[%s1 + $0x34] sm:$0xff]
  %v21 = vld [vmem:[%s1 + $0x3c] sm:$0xff]
  %v22 = vld [vmem:[%s1 + $0x44] sm:$0xff]
  %v23 = vld [vmem:[%s1 + $0x4c] sm:$0xff]
  %v24 = vld [vmem:[%s1 + $0x54] sm:$0xff]
  %v25 = vld [vmem:[%s1 + $0x5c] sm:$0xff]
  %v26 = vld [vmem:[%s1 + $0x64] sm:$0xf]
  %v27 = vld [vmem:[%s1 + $0x68] sm:$0xff]
  %v28 = vld [vmem:[%s1 + $0x70] sm:$0xff]
  %v29 = vld [vmem:[%s1 + $0x78] sm:$0xff]
  %v30 = vld [vmem:[%s1 + $0x80] sm:$0xff]
  %v31 = vld [vmem:[%s1 + $0x88] sm:$0xff]
  %v32 = vld [vmem:[%s1 + $0x90] sm:$0xff]
  %v33 = vld [vmem:[%s1 + $0x98] sm:$0xf]
  %v34 = vld [vmem:[%s1 + $0x9c] sm:$0xff]
  %v35 = vld [vmem:[%s1 + $0xa4] sm:$0xff]
  %v36 = vld [vmem:[%s1 + $0xac] sm:$0xff]
  %v37 = vld [vmem:[%s1 + $0xb4] sm:$0xff]
  %v38 = vld [vmem:[%s1 + $0xbc] sm:$0xff]
  %v39 = vld [vmem:[%s1 + $0xc4] sm:$0xff]
  %v40 = vld [vmem:[%s1 + $0xcc] sm:$0xf]
  %v41 = vld [vmem:[%s1 + $0xd0] sm:$0xff]
  %v42 = vld [vmem:[%s1 + $0xd8] sm:$0xff]
  %v43 = vld [vmem:[%s1 + $0xe0] sm:$0xff]
  %v44 = vld [vmem:[%s1 + $0xe8] sm:$0xff]
  %v45 = vld [vmem:[%s1 + $0xf0] sm:$0xff]
  %v46 = vld [vmem:[%s1 + $0xf8] sm:$0xff]
  %v47 = vld [vmem:[%s1 + $0x100] sm:$0xf]
  %v48 = vld [vmem:[%s1 + $0x104] sm:$0xff]
  %v49 = vld [vmem:[%s1 + $0x10c] sm:$0xff]
  %v50 = vld [vmem:[%s1 + $0x114] sm:$0xff]
  %v51 = vld [vmem:[%s1 + $0x11c] sm:$0xff]
  %v52 = vld [vmem:[%s1 + $0x124] sm:$0xff]
  %v53 = vld [vmem:[%s1 + $0x12c] sm:$0xff]
  %v54 = vld [vmem:[%s1 + $0x134] sm:$0xf]
  %v55 = vld [vmem:[%s1 + $0x138] sm:$0xff]
  %v56 = vld [vmem:[%s1 + $0x140] sm:$0xff]
  %v57 = vld [vmem:[%s1 + $0x148] sm:$0xff]
  %v58 = vld [vmem:[%s1 + $0x150] sm:$0xff]
  %v59 = vld [vmem:[%s1 + $0x158] sm:$0xff]
  %v60 = vld [vmem:[%s1 + $0x160] sm:$0xff]
  %v61 = vld [vmem:[%s1 + $0x168] sm:$0xf]
  %v62 = vld [vmem:[%s1 + $0x16c] sm:$0xff]
  %v63 = vld [vmem:[%s1 + $0x174] sm:$0xff]
  %v64 = vld [vmem:[%s1 + $0x17c] sm:$0xff]
  %v65 = vld [vmem:[%s1 + $0x184] sm:$0xff]
  %v66 = vld [vmem:[%s1 + $0x18c] sm:$0xff]
  %v67 = vld [vmem:[%s1 + $0x194] sm:$0xff]
  %v68 = vld [vmem:[%s1 + $0x19c] sm:$0xf]
  %v69 = vld [vmem:[%s1 + $0x1a0] sm:$0xff]
  %v70 = vld [vmem:[%s1 + $0x1a8] sm:$0xff]
  %v71 = vld [vmem:[%s1 + $0x1b0] sm:$0xff]
  %v72 = vld [vmem:[%s1 + $0x1b8] sm:$0xff]
  %v73 = vld [vmem:[%s1 + $0x1c0] sm:$0xff]
  %v74 = vld [vmem:[%s1 + $0x1c8] sm:$0xff]
  %v75 = vld [vmem:[%s1 + $0x1d0] sm:$0xf]
  %v76 = vld [vmem:[%s1 + $0x1d4] sm:$0xff]
  %v77 = vld [vmem:[%s1 + $0x1dc] sm:$0xff]
  %v78 = vld [vmem:[%s1 + $0x1e4] sm:$0xff]
  %v79 = vld [vmem:[%s1 + $0x1ec] sm:$0xff]
  %v80 = vld [vmem:[%s1 + $0x1f4] sm:$0xff]
  %v81 = vld [vmem:[%s1 + $0x1fc] sm:$0xff]
  %v82 = vld [vmem:[%s1 + $0x204] sm:$0xf]
  %v83 = vld [vmem:[%s1 + $0x208] sm:$0xff]
  %v84 = vld [vmem:[%s1 + $0x210] sm:$0xff]
  %v85 = vld [vmem:[%s1 + $0x218] sm:$0xff]
  %v86 = vld [vmem:[%s1 + $0x220] sm:$0xff]
  %v87 = vld [vmem:[%s1 + $0x228] sm:$0xff]
  %v88 = vld [vmem:[%s1 + $0x230] sm:$0xff]
  %v89 = vld [vmem:[%s1 + $0x238] sm:$0xf]
  %v90 = vld [vmem:[%s1 + $0x23c] sm:$0xff]
  %v91 = vld [vmem:[%s1 + $0x244] sm:$0xff]
  %v92 = vld [vmem:[%s1 + $0x24c] sm:$0xff]
  %v93 = vld [vmem:[%s1 + $0x254] sm:$0xff]
  %v94 = vld [vmem:[%s1 + $0x25c] sm:$0xff]
  %v95 = vld [vmem:[%s1 + $0x264] sm:$0xff]
  %v96 = vld [vmem:[%s1 + $0x26c] sm:$0xf]
  %v97 = vld [vmem:[%s1 + $0x270] sm:$0xff]
  %v98 = vld [vmem:[%s1 + $0x278] sm:$0xff]
  %v99 = vld [vmem:[%s1 + $0x280] sm:$0xff]
  %v100 = vld [vmem:[%s1 + $0x288] sm:$0xff]
  %v101 = vld [vmem:[%s1 + $0x290] sm:$0xff]
  %v102 = vld [vmem:[%s1 + $0x298] sm:$0xff]
  %v103 = vld [vmem:[%s1 + $0x2a0] sm:$0xf]
  %v104 = vld [vmem:[%s1 + $0x2a4] sm:$0xff]
  %v105 = vld [vmem:[%s1 + $0x2ac] sm:$0xff]
  %v106 = vld [vmem:[%s1 + $0x2b4] sm:$0xff]
  %v107 = vld [vmem:[%s1 + $0x2bc] sm:$0xff]
  %v108 = vld [vmem:[%s1 + $0x2c4] sm:$0xff]
  %v109 = vld [vmem:[%s1 + $0x2cc] sm:$0xff]
  %v110 = vld [vmem:[%s1 + $0x2d4] sm:$0xf]
  %v111 = vld [vmem:[%s1 + $0x2d8] sm:$0xff]
  %v112 = vld [vmem:[%s1 + $0x2e0] sm:$0xff]
  %v113 = vld [vmem:[%s1 + $0x2e8] sm:$0xff]
  %v114 = vld [vmem:[%s1 + $0x2f0] sm:$0xff]
  %v115 = vld [vmem:[%s1 + $0x2f8] sm:$0xff]
  %v116 = vld [vmem:[%s1 + $0x300] sm:$0xff]
  %v117 = vld [vmem:[%s1 + $0x308] sm:$0xf]
  %v118 = vld [vmem:[%s1 + $0x30c] sm:$0xff]
  %v119 = vld [vmem:[%s1 + $0x314] sm:$0xff]
  %v120 = vld [vmem:[%s1 + $0x31c] sm:$0xff]
  %v121 = vld [vmem:[%s1 + $0x324] sm:$0xff]
  %v122 = vld [vmem:[%s1 + $0x32c] sm:$0xff]
  %v123 = vld [vmem:[%s1 + $0x334] sm:$0xff]
  %v124 = vld [vmem:[%s1 + $0x33c] sm:$0xf]
  %v237 = vunpack.c.l.b16 %v13
  %v238 = vunpack.c.h.b16 %v13
  %v239 = vunpack.c.l.b16 %v14
  %v240 = vunpack.c.h.b16 %v14
  %v241 = vunpack.c.l.b16 %v15
  %v242 = vunpack.c.h.b16 %v15
  %v243 = vunpack.c.l.b16 %v16
  %v244 = vunpack.c.h.b16 %v16
  %v245 = vunpack.c.l.b16 %v17
  %v246 = vunpack.c.h.b16 %v17
  %v247 = vunpack.c.l.b16 %v18
  %v248 = vunpack.c.h.b16 %v18
  %v249 = vunpack.c.l.b16 %v19
  %v250 = vunpack.c.l.b16 %v20
  %v251 = vunpack.c.h.b16 %v20
  %v252 = vunpack.c.l.b16 %v21
  %v253 = vunpack.c.h.b16 %v21
  %v254 = vunpack.c.l.b16 %v22
  %v255 = vunpack.c.h.b16 %v22
  %v256 = vunpack.c.l.b16 %v23
  %v257 = vunpack.c.h.b16 %v23
  %v258 = vunpack.c.l.b16 %v24
  %v259 = vunpack.c.h.b16 %v24
  %v260 = vunpack.c.l.b16 %v25
  %v261 = vunpack.c.h.b16 %v25
  %v262 = vunpack.c.l.b16 %v26
  %v263 = vunpack.c.l.b16 %v27
  %v264 = vunpack.c.h.b16 %v27
  %v265 = vunpack.c.l.b16 %v28
  %v266 = vunpack.c.h.b16 %v28
  %v267 = vunpack.c.l.b16 %v29
  %v268 = vunpack.c.h.b16 %v29
  %v269 = vunpack.c.l.b16 %v30
  %v270 = vunpack.c.h.b16 %v30
  %v271 = vunpack.c.l.b16 %v31
  %v272 = vunpack.c.h.b16 %v31
  %v273 = vunpack.c.l.b16 %v32
  %v274 = vunpack.c.h.b16 %v32
  %v275 = vunpack.c.l.b16 %v33
  %v276 = vunpack.c.l.b16 %v34
  %v277 = vunpack.c.h.b16 %v34
  %v278 = vunpack.c.l.b16 %v35
  %v279 = vunpack.c.h.b16 %v35
  %v280 = vunpack.c.l.b16 %v36
  %v281 = vunpack.c.h.b16 %v36
  %v282 = vunpack.c.l.b16 %v37
  %v283 = vunpack.c.h.b16 %v37
  %v284 = vunpack.c.l.b16 %v38
  %v285 = vunpack.c.h.b16 %v38
  %v286 = vunpack.c.l.b16 %v39
  %v287 = vunpack.c.h.b16 %v39
  %v288 = vunpack.c.l.b16 %v40
  %v289 = vunpack.c.l.b16 %v41
  %v290 = vunpack.c.h.b16 %v41
  %v291 = vunpack.c.l.b16 %v42
  %v292 = vunpack.c.h.b16 %v42
  %v293 = vunpack.c.l.b16 %v43
  %v294 = vunpack.c.h.b16 %v43
  %v295 = vunpack.c.l.b16 %v44
  %v296 = vunpack.c.h.b16 %v44
  %v297 = vunpack.c.l.b16 %v45
  %v298 = vunpack.c.h.b16 %v45
  %v299 = vunpack.c.l.b16 %v46
  %v300 = vunpack.c.h.b16 %v46
  %v301 = vunpack.c.l.b16 %v47
  %v302 = vunpack.c.l.b16 %v48
  %v303 = vunpack.c.h.b16 %v48
  %v304 = vunpack.c.l.b16 %v49
  %v305 = vunpack.c.h.b16 %v49
  %v306 = vunpack.c.l.b16 %v50
  %v307 = vunpack.c.h.b16 %v50
  %v308 = vunpack.c.l.b16 %v51
  %v309 = vunpack.c.h.b16 %v51
  %v310 = vunpack.c.l.b16 %v52
  %v311 = vunpack.c.h.b16 %v52
  %v312 = vunpack.c.l.b16 %v53
  %v313 = vunpack.c.h.b16 %v53
  %v314 = vunpack.c.l.b16 %v54
  %v315 = vunpack.c.l.b16 %v55
  %v316 = vunpack.c.h.b16 %v55
  %v317 = vunpack.c.l.b16 %v56
  %v318 = vunpack.c.h.b16 %v56
  %v319 = vunpack.c.l.b16 %v57
  %v320 = vunpack.c.h.b16 %v57
  %v321 = vunpack.c.l.b16 %v58
  %v322 = vunpack.c.h.b16 %v58
  %v323 = vunpack.c.l.b16 %v59
  %v324 = vunpack.c.h.b16 %v59
  %v325 = vunpack.c.l.b16 %v60
  %v326 = vunpack.c.h.b16 %v60
  %v327 = vunpack.c.l.b16 %v61
  %v328 = vunpack.c.l.b16 %v62
  %v329 = vunpack.c.h.b16 %v62
  %v330 = vunpack.c.l.b16 %v63
  %v331 = vunpack.c.h.b16 %v63
  %v332 = vunpack.c.l.b16 %v64
  %v333 = vunpack.c.h.b16 %v64
  %v334 = vunpack.c.l.b16 %v65
  %v335 = vunpack.c.h.b16 %v65
  %v336 = vunpack.c.l.b16 %v66
  %v337 = vunpack.c.h.b16 %v66
  %v338 = vunpack.c.l.b16 %v67
  %v339 = vunpack.c.h.b16 %v67
  %v340 = vunpack.c.l.b16 %v68
  %v341 = vunpack.c.l.b16 %v69
  %v342 = vunpack.c.h.b16 %v69
  %v343 = vunpack.c.l.b16 %v70
  %v344 = vunpack.c.h.b16 %v70
  %v345 = vunpack.c.l.b16 %v71
  %v346 = vunpack.c.h.b16 %v71
  %v347 = vunpack.c.l.b16 %v72
  %v348 = vunpack.c.h.b16 %v72
  %v349 = vunpack.c.l.b16 %v73
  %v350 = vunpack.c.h.b16 %v73
  %v351 = vunpack.c.l.b16 %v74
  %v352 = vunpack.c.h.b16 %v74
  %v353 = vunpack.c.l.b16 %v75
  %v354 = vunpack.c.l.b16 %v76
  %v355 = vunpack.c.h.b16 %v76
  %v356 = vunpack.c.l.b16 %v77
  %v357 = vunpack.c.h.b16 %v77
  %v358 = vunpack.c.l.b16 %v78
  %v359 = vunpack.c.h.b16 %v78
  %v360 = vunpack.c.l.b16 %v79
  %v361 = vunpack.c.h.b16 %v79
  %v362 = vunpack.c.l.b16 %v80
  %v363 = vunpack.c.h.b16 %v80
  %v364 = vunpack.c.l.b16 %v81
  %v365 = vunpack.c.h.b16 %v81
  %v366 = vunpack.c.l.b16 %v82
  %v367 = vunpack.c.l.b16 %v83
  %v368 = vunpack.c.h.b16 %v83
  %v369 = vunpack.c.l.b16 %v84
  %v370 = vunpack.c.h.b16 %v84
  %v371 = vunpack.c.l.b16 %v85
  %v372 = vunpack.c.h.b16 %v85
  %v373 = vunpack.c.l.b16 %v86
  %v374 = vunpack.c.h.b16 %v86
  %v375 = vunpack.c.l.b16 %v87
  %v376 = vunpack.c.h.b16 %v87
  %v377 = vunpack.c.l.b16 %v88
  %v378 = vunpack.c.h.b16 %v88
  %v379 = vunpack.c.l.b16 %v89
  %v380 = vunpack.c.l.b16 %v90
  %v381 = vunpack.c.h.b16 %v90
  %v382 = vunpack.c.l.b16 %v91
  %v383 = vunpack.c.h.b16 %v91
  %v384 = vunpack.c.l.b16 %v92
  %v385 = vunpack.c.h.b16 %v92
  %v386 = vunpack.c.l.b16 %v93
  %v387 = vunpack.c.h.b16 %v93
  %v388 = vunpack.c.l.b16 %v94
  %v389 = vunpack.c.h.b16 %v94
  %v390 = vunpack.c.l.b16 %v95
  %v391 = vunpack.c.h.b16 %v95
  %v392 = vunpack.c.l.b16 %v96
  %v393 = vunpack.c.l.b16 %v97
  %v394 = vunpack.c.h.b16 %v97
  %v395 = vunpack.c.l.b16 %v98
  %v396 = vunpack.c.h.b16 %v98
  %v397 = vunpack.c.l.b16 %v99
  %v398 = vunpack.c.h.b16 %v99
  %v399 = vunpack.c.l.b16 %v100
  %v400 = vunpack.c.h.b16 %v100
  %v401 = vunpack.c.l.b16 %v101
  %v402 = vunpack.c.h.b16 %v101
  %v403 = vunpack.c.l.b16 %v102
  %v404 = vunpack.c.h.b16 %v102
  %v405 = vunpack.c.l.b16 %v103
  %v406 = vunpack.c.l.b16 %v104
  %v407 = vunpack.c.h.b16 %v104
  %v408 = vunpack.c.l.b16 %v105
  %v409 = vunpack.c.h.b16 %v105
  %v410 = vunpack.c.l.b16 %v106
  %v411 = vunpack.c.h.b16 %v106
  %v412 = vunpack.c.l.b16 %v107
  %v413 = vunpack.c.h.b16 %v107
  %v414 = vunpack.c.l.b16 %v108
  %v415 = vunpack.c.h.b16 %v108
  %v416 = vunpack.c.l.b16 %v109
  %v417 = vunpack.c.h.b16 %v109
  %v418 = vunpack.c.l.b16 %v110
  %v419 = vunpack.c.l.b16 %v111
  %v420 = vunpack.c.h.b16 %v111
  %v421 = vunpack.c.l.b16 %v112
  %v422 = vunpack.c.h.b16 %v112
  %v423 = vunpack.c.l.b16 %v113
  %v424 = vunpack.c.h.b16 %v113
  %v425 = vunpack.c.l.b16 %v114
  %v426 = vunpack.c.h.b16 %v114
  %v427 = vunpack.c.l.b16 %v115
  %v428 = vunpack.c.h.b16 %v115
  %v429 = vunpack.c.l.b16 %v116
  %v430 = vunpack.c.h.b16 %v116
  %v431 = vunpack.c.l.b16 %v117
  %v432 = vunpack.c.l.b16 %v118
  %v433 = vunpack.c.h.b16 %v118
  %v434 = vunpack.c.l.b16 %v119
  %v435 = vunpack.c.h.b16 %v119
  %v436 = vunpack.c.l.b16 %v120
  %v437 = vunpack.c.h.b16 %v120
  %v438 = vunpack.c.l.b16 %v121
  %v439 = vunpack.c.h.b16 %v121
  %v440 = vunpack.c.l.b16 %v122
  %v441 = vunpack.c.h.b16 %v122
  %v442 = vunpack.c.l.b16 %v123
  %v443 = vunpack.c.h.b16 %v123
  %v444 = vunpack.c.l.b16 %v124
  %v445 = vpack.c.b16 %v250, %v237
  %v446 = vpack.c.b16 %v251, %v238
  %v447 = vpack.c.b16 %v252, %v239
  %v448 = vpack.c.b16 %v253, %v240
  %v449 = vpack.c.b16 %v254, %v241
  %v450 = vpack.c.b16 %v255, %v242
  %v451 = vpack.c.b16 %v256, %v243
  %v452 = vpack.c.b16 %v257, %v244
  %v453 = vpack.c.b16 %v258, %v245
  %v454 = vpack.c.b16 %v259, %v246
  %v455 = vpack.c.b16 %v260, %v247
  %v456 = vpack.c.b16 %v261, %v248
  %v457 = vpack.c.b16 %v262, %v249
  %v458 = vpack.c.b16 %v276, %v263
  %v459 = vpack.c.b16 %v277, %v264
  %v460 = vpack.c.b16 %v278, %v265
  %v461 = vpack.c.b16 %v279, %v266
  %v462 = vpack.c.b16 %v280, %v267
  %v463 = vpack.c.b16 %v281, %v268
  %v464 = vpack.c.b16 %v282, %v269
  %v465 = vpack.c.b16 %v283, %v270
  %v466 = vpack.c.b16 %v284, %v271
  %v467 = vpack.c.b16 %v285, %v272
  %v468 = vpack.c.b16 %v286, %v273
  %v469 = vpack.c.b16 %v287, %v274
  %v470 = vpack.c.b16 %v288, %v275
  %v471 = vpack.c.b16 %v302, %v289
  %v472 = vpack.c.b16 %v303, %v290
  %v473 = vpack.c.b16 %v304, %v291
  %v474 = vpack.c.b16 %v305, %v292
  %v475 = vpack.c.b16 %v306, %v293
  %v476 = vpack.c.b16 %v307, %v294
  %v477 = vpack.c.b16 %v308, %v295
  %v478 = vpack.c.b16 %v309, %v296
  %v479 = vpack.c.b16 %v310, %v297
  %v480 = vpack.c.b16 %v311, %v298
  %v481 = vpack.c.b16 %v312, %v299
  %v482 = vpack.c.b16 %v313, %v300
  %v483 = vpack.c.b16 %v314, %v301
  %v484 = vpack.c.b16 %v328, %v315
  %v485 = vpack.c.b16 %v329, %v316
  %v486 = vpack.c.b16 %v330, %v317
  %v487 = vpack.c.b16 %v331, %v318
  %v488 = vpack.c.b16 %v332, %v319
  %v489 = vpack.c.b16 %v333, %v320
  %v490 = vpack.c.b16 %v334, %v321
  %v491 = vpack.c.b16 %v335, %v322
  %v492 = vpack.c.b16 %v336, %v323
  %v493 = vpack.c.b16 %v337, %v324
  %v494 = vpack.c.b16 %v338, %v325
  %v495 = vpack.c.b16 %v339, %v326
  %v496 = vpack.c.b16 %v340, %v327
  %v497 = vpack.c.b16 %v354, %v341
  %v498 = vpack.c.b16 %v355, %v342
  %v499 = vpack.c.b16 %v356, %v343
  %v500 = vpack.c.b16 %v357, %v344
  %v501 = vpack.c.b16 %v358, %v345
  %v502 = vpack.c.b16 %v359, %v346
  %v503 = vpack.c.b16 %v360, %v347
  %v504 = vpack.c.b16 %v361, %v348
  %v505 = vpack.c.b16 %v362, %v349
  %v506 = vpack.c.b16 %v363, %v350
  %v507 = vpack.c.b16 %v364, %v351
  %v508 = vpack.c.b16 %v365, %v352
  %v509 = vpack.c.b16 %v366, %v353
  %v510 = vpack.c.b16 %v380, %v367
  %v511 = vpack.c.b16 %v381, %v368
  %v512 = vpack.c.b16 %v382, %v369
  %v513 = vpack.c.b16 %v383, %v370
  %v514 = vpack.c.b16 %v384, %v371
  %v515 = vpack.c.b16 %v385, %v372
  %v516 = vpack.c.b16 %v386, %v373
  %v517 = vpack.c.b16 %v387, %v374
  %v518 = vpack.c.b16 %v388, %v375
  %v519 = vpack.c.b16 %v389, %v376
  %v520 = vpack.c.b16 %v390, %v377
  %v521 = vpack.c.b16 %v391, %v378
  %v522 = vpack.c.b16 %v392, %v379
  %v523 = vpack.c.b16 %v406, %v393
  %v524 = vpack.c.b16 %v407, %v394
  %v525 = vpack.c.b16 %v408, %v395
  %v526 = vpack.c.b16 %v409, %v396
  %v527 = vpack.c.b16 %v410, %v397
  %v528 = vpack.c.b16 %v411, %v398
  %v529 = vpack.c.b16 %v412, %v399
  %v530 = vpack.c.b16 %v413, %v400
  %v531 = vpack.c.b16 %v414, %v401
  %v532 = vpack.c.b16 %v415, %v402
  %v533 = vpack.c.b16 %v416, %v403
  %v534 = vpack.c.b16 %v417, %v404
  %v535 = vpack.c.b16 %v418, %v405
  %v536 = vpack.c.b16 %v432, %v419
  %v537 = vpack.c.b16 %v433, %v420
  %v538 = vpack.c.b16 %v434, %v421
  %v539 = vpack.c.b16 %v435, %v422
  %v540 = vpack.c.b16 %v436, %v423
  %v541 = vpack.c.b16 %v437, %v424
  %v542 = vpack.c.b16 %v438, %v425
  %v543 = vpack.c.b16 %v439, %v426
  %v544 = vpack.c.b16 %v440, %v427
  %v545 = vpack.c.b16 %v441, %v428
  %v546 = vpack.c.b16 %v442, %v429
  %v547 = vpack.c.b16 %v443, %v430
  %v548 = vpack.c.b16 %v444, %v431
  %653 = vmatprep.subr.bf16.mxu0 %v537
  %654 = vmatpush1.bf16.msra.mxu0 %v536
  %655 = vmatprep.subr.bf16.mxu0 %v524
  %656 = vmatpush1.bf16.msra.mxu0 %v523
  %657 = vmatprep.subr.bf16.mxu0 %v511
  %658 = vmatpush1.bf16.msra.mxu0 %v510
  %659 = vmatprep.subr.bf16.mxu0 %v498
  %660 = vmatpush1.bf16.msra.mxu0 %v497
  %661 = vmatprep.subr.bf16.mxu0 %v485
  %662 = vmatpush1.bf16.msra.mxu0 %v484
  %663 = vmatprep.subr.bf16.mxu0 %v472
  %664 = vmatpush1.bf16.msra.mxu0 %v471
  %665 = vmatprep.subr.bf16.mxu0 %v459
  %666 = vmatpush1.bf16.msra.mxu0 %v458
  %667 = vmatprep.subr.bf16.mxu0 %v446
  %668 = vmatpush1.bf16.msra.mxu0 %v445
  %669 = vmatprep.subr.bf16.mxu0 0
  %670 = vmatpush2.bf16.msra.mxu0 0
  %671 = vmatprep.subr.bf16.mxu0 0
  %672 = vmatpush2.bf16.msra.mxu0 0
  %673 = vmatprep.subr.bf16.mxu0 0
  %674 = vmatpush2.bf16.msra.mxu0 0
  %675 = vmatprep.subr.bf16.mxu0 0
  %676 = vmatpush2.bf16.msra.mxu0 0
  %677 = vmatprep.subr.bf16.mxu0 0
  %678 = vmatpush2.bf16.msra.mxu0 0
  %679 = vmatprep.subr.bf16.mxu0 0
  %680 = vmatpush2.bf16.msra.mxu0 0
  %681 = vmatprep.subr.bf16.mxu0 0
  %682 = vmatpush2.bf16.msra.mxu0 0
  %683 = vmatprep.subr.bf16.mxu0 0
  %684 = vmatpush2.bf16.msra.mxu0 0
  %685 = vmatprep.mubr.bf16.mxu0 0
  %686 = vmatmul.mubr.bf16.gmra.mxu0 %v12
  %v687 = vpop.f32.mrf.mxu0
  %v688 = vadd.f32 0.0, %v687
  %v689 = vpop.f32.mrf.mxu0
  %v690 = vadd.f32 0.0, %v689
  %v691 = vpop.f32.mrf.mxu0
  %v692 = vpop.f32.mrf.mxu0
  %693 = vdwg.mxu0
  %694 = vmatprep.subr.bf16.mxu0 %v539
  %695 = vmatpush1.bf16.msra.mxu0 %v538
  %696 = vmatprep.subr.bf16.mxu0 %v526
  %697 = vmatpush1.bf16.msra.mxu0 %v525
  %698 = vmatprep.subr.bf16.mxu0 %v513
  %699 = vmatpush1.bf16.msra.mxu0 %v512
  %700 = vmatprep.subr.bf16.mxu0 %v500
  %701 = vmatpush1.bf16.msra.mxu0 %v499
  %702 = vmatprep.subr.bf16.mxu0 %v487
  %703 = vmatpush1.bf16.msra.mxu0 %v486
  %704 = vmatprep.subr.bf16.mxu0 %v474
  %705 = vmatpush1.bf16.msra.mxu0 %v473
  %706 = vmatprep.subr.bf16.mxu0 %v461
  %707 = vmatpush1.bf16.msra.mxu0 %v460
  %708 = vmatprep.subr.bf16.mxu0 %v448
  %709 = vmatpush1.bf16.msra.mxu0 %v447
  %710 = vmatprep.subr.bf16.mxu0 0
  %711 = vmatpush2.bf16.msra.mxu0 0
  %712 = vmatprep.subr.bf16.mxu0 0
  %713 = vmatpush2.bf16.msra.mxu0 0
  %714 = vmatprep.subr.bf16.mxu0 0
  %715 = vmatpush2.bf16.msra.mxu0 0
  %716 = vmatprep.subr.bf16.mxu0 0
  %717 = vmatpush2.bf16.msra.mxu0 0
  %718 = vmatprep.subr.bf16.mxu0 0
  %719 = vmatpush2.bf16.msra.mxu0 0
  %720 = vmatprep.subr.bf16.mxu0 0
  %721 = vmatpush2.bf16.msra.mxu0 0
  %722 = vmatprep.subr.bf16.mxu0 0
  %723 = vmatpush2.bf16.msra.mxu0 0
  %724 = vmatprep.subr.bf16.mxu0 0
  %725 = vmatpush2.bf16.msra.mxu0 0
  %726 = vmatprep.mubr.bf16.mxu0 0
  %727 = vmatmul.mubr.bf16.gmra.mxu0 %v12
  %v728 = vpop.f32.mrf.mxu0
  %v729 = vadd.f32 0.0, %v728
  %v730 = vpop.f32.mrf.mxu0
  %v731 = vadd.f32 0.0, %v730
  %v732 = vpop.f32.mrf.mxu0
  %v733 = vpop.f32.mrf.mxu0
  %734 = vdwg.mxu0
  %735 = vmatprep.subr.bf16.mxu0 %v541
  %736 = vmatpush1.bf16.msra.mxu0 %v540
  %737 = vmatprep.subr.bf16.mxu0 %v528
  %738 = vmatpush1.bf16.msra.mxu0 %v527
  %739 = vmatprep.subr.bf16.mxu0 %v515
  %740 = vmatpush1.bf16.msra.mxu0 %v514
  %741 = vmatprep.subr.bf16.mxu0 %v502
  %742 = vmatpush1.bf16.msra.mxu0 %v501
  %743 = vmatprep.subr.bf16.mxu0 %v489
  %744 = vmatpush1.bf16.msra.mxu0 %v488
  %745 = vmatprep.subr.bf16.mxu0 %v476
  %746 = vmatpush1.bf16.msra.mxu0 %v475
  %747 = vmatprep.subr.bf16.mxu0 %v463
  %748 = vmatpush1.bf16.msra.mxu0 %v462
  %749 = vmatprep.subr.bf16.mxu0 %v450
  %750 = vmatpush1.bf16.msra.mxu0 %v449
  %751 = vmatprep.subr.bf16.mxu0 0
  %752 = vmatpush2.bf16.msra.mxu0 0
  %753 = vmatprep.subr.bf16.mxu0 0
  %754 = vmatpush2.bf16.msra.mxu0 0
  %755 = vmatprep.subr.bf16.mxu0 0
  %756 = vmatpush2.bf16.msra.mxu0 0
  %757 = vmatprep.subr.bf16.mxu0 0
  %758 = vmatpush2.bf16.msra.mxu0 0
  %759 = vmatprep.subr.bf16.mxu0 0
  %760 = vmatpush2.bf16.msra.mxu0 0
  %761 = vmatprep.subr.bf16.mxu0 0
  %762 = vmatpush2.bf16.msra.mxu0 0
  %763 = vmatprep.subr.bf16.mxu0 0
  %764 = vmatpush2.bf16.msra.mxu0 0
  %765 = vmatprep.subr.bf16.mxu0 0
  %766 = vmatpush2.bf16.msra.mxu0 0
  %767 = vmatprep.mubr.bf16.mxu0 0
  %768 = vmatmul.mubr.bf16.gmra.mxu0 %v12
  %v769 = vpop.f32.mrf.mxu0
  %v770 = vadd.f32 0.0, %v769
  %v771 = vpop.f32.mrf.mxu0
  %v772 = vadd.f32 0.0, %v771
  %v773 = vpop.f32.mrf.mxu0
  %v774 = vpop.f32.mrf.mxu0
  %775 = vdwg.mxu0
  %776 = vmatprep.subr.bf16.mxu0 %v543
  %777 = vmatpush1.bf16.msra.mxu0 %v542
  %778 = vmatprep.subr.bf16.mxu0 %v530
  %779 = vmatpush1.bf16.msra.mxu0 %v529
  %780 = vmatprep.subr.bf16.mxu0 %v517
  %781 = vmatpush1.bf16.msra.mxu0 %v516
  %782 = vmatprep.subr.bf16.mxu0 %v504
  %783 = vmatpush1.bf16.msra.mxu0 %v503
  %784 = vmatprep.subr.bf16.mxu0 %v491
  %785 = vmatpush1.bf16.msra.mxu0 %v490
  %786 = vmatprep.subr.bf16.mxu0 %v478
  %787 = vmatpush1.bf16.msra.mxu0 %v477
  %788 = vmatprep.subr.bf16.mxu0 %v465
  %789 = vmatpush1.bf16.msra.mxu0 %v464
  %790 = vmatprep.subr.bf16.mxu0 %v452
  %791 = vmatpush1.bf16.msra.mxu0 %v451
  %792 = vmatprep.subr.bf16.mxu0 0
  %793 = vmatpush2.bf16.msra.mxu0 0
  %794 = vmatprep.subr.bf16.mxu0 0
  %795 = vmatpush2.bf16.msra.mxu0 0
  %796 = vmatprep.subr.bf16.mxu0 0
  %797 = vmatpush2.bf16.msra.mxu0 0
  %798 = vmatprep.subr.bf16.mxu0 0
  %799 = vmatpush2.bf16.msra.mxu0 0
  %800 = vmatprep.subr.bf16.mxu0 0
  %801 = vmatpush2.bf16.msra.mxu0 0
  %802 = vmatprep.subr.bf16.mxu0 0
  %803 = vmatpush2.bf16.msra.mxu0 0
  %804 = vmatprep.subr.bf16.mxu0 0
  %805 = vmatpush2.bf16.msra.mxu0 0
  %806 = vmatprep.subr.bf16.mxu0 0
  %807 = vmatpush2.bf16.msra.mxu0 0
  %808 = vmatprep.mubr.bf16.mxu0 0
  %809 = vmatmul.mubr.bf16.gmra.mxu0 %v12
  %v810 = vpop.f32.mrf.mxu0
  %v811 = vadd.f32 0.0, %v810
  %v812 = vpop.f32.mrf.mxu0
  %v813 = vadd.f32 0.0, %v812
  %v814 = vpop.f32.mrf.mxu0
  %v815 = vpop.f32.mrf.mxu0
  %816 = vdwg.mxu0
  %817 = vmatprep.subr.bf16.mxu0 %v545
  %818 = vmatpush1.bf16.msra.mxu0 %v544
  %819 = vmatprep.subr.bf16.mxu0 %v532
  %820 = vmatpush1.bf16.msra.mxu0 %v531
  %821 = vmatprep.subr.bf16.mxu0 %v519
  %822 = vmatpush1.bf16.msra.mxu0 %v518
  %823 = vmatprep.subr.bf16.mxu0 %v506
  %824 = vmatpush1.bf16.msra.mxu0 %v505
  %825 = vmatprep.subr.bf16.mxu0 %v493
  %826 = vmatpush1.bf16.msra.mxu0 %v492
  %827 = vmatprep.subr.bf16.mxu0 %v480
  %828 = vmatpush1.bf16.msra.mxu0 %v479
  %829 = vmatprep.subr.bf16.mxu0 %v467
  %830 = vmatpush1.bf16.msra.mxu0 %v466
  %831 = vmatprep.subr.bf16.mxu0 %v454
  %832 = vmatpush1.bf16.msra.mxu0 %v453
  %833 = vmatprep.subr.bf16.mxu0 0
  %834 = vmatpush2.bf16.msra.mxu0 0
  %835 = vmatprep.subr.bf16.mxu0 0
  %836 = vmatpush2.bf16.msra.mxu0 0
  %837 = vmatprep.subr.bf16.mxu0 0
  %838 = vmatpush2.bf16.msra.mxu0 0
  %839 = vmatprep.subr.bf16.mxu0 0
  %840 = vmatpush2.bf16.msra.mxu0 0
  %841 = vmatprep.subr.bf16.mxu0 0
  %842 = vmatpush2.bf16.msra.mxu0 0
  %843 = vmatprep.subr.bf16.mxu0 0
  %844 = vmatpush2.bf16.msra.mxu0 0
  %845 = vmatprep.subr.bf16.mxu0 0
  %846 = vmatpush2.bf16.msra.mxu0 0
  %847 = vmatprep.subr.bf16.mxu0 0
  %848 = vmatpush2.bf16.msra.mxu0 0
  %849 = vmatprep.mubr.bf16.mxu0 0
  %850 = vmatmul.mubr.bf16.gmra.mxu0 %v12
  %v851 = vpop.f32.mrf.mxu0
  %v852 = vadd.f32 0.0, %v851
  %v853 = vpop.f32.mrf.mxu0
  %v854 = vadd.f32 0.0, %v853
  %v855 = vpop.f32.mrf.mxu0
  %v856 = vpop.f32.mrf.mxu0
  %857 = vdwg.mxu0
  %858 = vmatprep.subr.bf16.mxu0 %v547
  %859 = vmatpush1.bf16.msra.mxu0 %v546
  %860 = vmatprep.subr.bf16.mxu0 %v534
  %861 = vmatpush1.bf16.msra.mxu0 %v533
  %862 = vmatprep.subr.bf16.mxu0 %v521
  %863 = vmatpush1.bf16.msra.mxu0 %v520
  %864 = vmatprep.subr.bf16.mxu0 %v508
  %865 = vmatpush1.bf16.msra.mxu0 %v507
  %866 = vmatprep.subr.bf16.mxu0 %v495
  %867 = vmatpush1.bf16.msra.mxu0 %v494
  %868 = vmatprep.subr.bf16.mxu0 %v482
  %869 = vmatpush1.bf16.msra.mxu0 %v481
  %870 = vmatprep.subr.bf16.mxu0 %v469
  %871 = vmatpush1.bf16.msra.mxu0 %v468
  %872 = vmatprep.subr.bf16.mxu0 %v456
  %873 = vmatpush1.bf16.msra.mxu0 %v455
  %874 = vmatprep.subr.bf16.mxu0 0
  %875 = vmatpush2.bf16.msra.mxu0 0
  %876 = vmatprep.subr.bf16.mxu0 0
  %877 = vmatpush2.bf16.msra.mxu0 0
  %878 = vmatprep.subr.bf16.mxu0 0
  %879 = vmatpush2.bf16.msra.mxu0 0
  %880 = vmatprep.subr.bf16.mxu0 0
  %881 = vmatpush2.bf16.msra.mxu0 0
  %882 = vmatprep.subr.bf16.mxu0 0
  %883 = vmatpush2.bf16.msra.mxu0 0
  %884 = vmatprep.subr.bf16.mxu0 0
  %885 = vmatpush2.bf16.msra.mxu0 0
  %886 = vmatprep.subr.bf16.mxu0 0
  %887 = vmatpush2.bf16.msra.mxu0 0
  %888 = vmatprep.subr.bf16.mxu0 0
  %889 = vmatpush2.bf16.msra.mxu0 0
  %890 = vmatprep.mubr.bf16.mxu0 0
  %891 = vmatmul.mubr.bf16.gmra.mxu0 %v12
  %v892 = vpop.f32.mrf.mxu0
  %v893 = vadd.f32 0.0, %v892
  %v894 = vpop.f32.mrf.mxu0
  %v895 = vadd.f32 0.0, %v894
  %v896 = vpop.f32.mrf.mxu0
  %v897 = vpop.f32.mrf.mxu0
  %898 = vdwg.mxu0
  %899 = vmatprep.subr.bf16.mxu0 0
  %900 = vmatpush1.bf16.msra.mxu0 %v548
  %901 = vmatprep.subr.bf16.mxu0 0
  %902 = vmatpush1.bf16.msra.mxu0 %v535
  %903 = vmatprep.subr.bf16.mxu0 0
  %904 = vmatpush1.bf16.msra.mxu0 %v522
  %905 = vmatprep.subr.bf16.mxu0 0
  %906 = vmatpush1.bf16.msra.mxu0 %v509
  %907 = vmatprep.subr.bf16.mxu0 0
  %908 = vmatpush1.bf16.msra.mxu0 %v496
  %909 = vmatprep.subr.bf16.mxu0 0
  %910 = vmatpush1.bf16.msra.mxu0 %v483
  %911 = vmatprep.subr.bf16.mxu0 0
  %912 = vmatpush1.bf16.msra.mxu0 %v470
  %913 = vmatprep.subr.bf16.mxu0 0
  %914 = vmatpush1.bf16.msra.mxu0 %v457
  %915 = vmatprep.subr.bf16.mxu0 0
  %916 = vmatpush2.bf16.msra.mxu0 0
  %917 = vmatprep.subr.bf16.mxu0 0
  %918 = vmatpush2.bf16.msra.mxu0 0
  %919 = vmatprep.subr.bf16.mxu0 0
  %920 = vmatpush2.bf16.msra.mxu0 0
  %921 = vmatprep.subr.bf16.mxu0 0
  %922 = vmatpush2.bf16.msra.mxu0 0
  %923 = vmatprep.subr.bf16.mxu0 0
  %924 = vmatpush2.bf16.msra.mxu0 0
  %925 = vmatprep.subr.bf16.mxu0 0
  %926 = vmatpush2.bf16.msra.mxu0 0
  %927 = vmatprep.subr.bf16.mxu0 0
  %928 = vmatpush2.bf16.msra.mxu0 0
  %929 = vmatprep.subr.bf16.mxu0 0
  %930 = vmatpush2.bf16.msra.mxu0 0
  %931 = vmatprep.mubr.bf16.mxu0 0
  %932 = vmatmul.mubr.bf16.gmra.mxu0 %v12
  %v933 = vpop.f32.mrf.mxu0
  %v934 = vadd.f32 0.0, %v933
  %v935 = vpop.f32.mrf.mxu0
  %v936 = vpop.f32.mrf.mxu0
  %v937 = vpop.f32.mrf.mxu0
  %938 = vdwg.mxu0
  %v939 = vtanh.pop %v688
  %v940 = vtanh.pop %v690
  %v941 = vtanh.pop %v729
  %v942 = vtanh.pop %v731
  %v943 = vtanh.pop %v770
  %v944 = vtanh.pop %v772
  %v945 = vtanh.pop %v811
  %v946 = vtanh.pop %v813
  %v947 = vtanh.pop %v852
  %v948 = vtanh.pop %v854
  %v949 = vtanh.pop %v893
  %v950 = vtanh.pop %v895
  %v951 = vtanh.pop %v934
  %952 = vst [vmem:[%s2] sm:$0xff] %v939
  %953 = vst [vmem:[%s2 + $0x8] sm:$0xff] %v940
  %954 = vst [vmem:[%s2 + $0x10] sm:$0xff] %v941
  %955 = vst [vmem:[%s2 + $0x18] sm:$0xff] %v942
  %956 = vst [vmem:[%s2 + $0x20] sm:$0xff] %v943
  %957 = vst [vmem:[%s2 + $0x28] sm:$0xff] %v944
  %958 = vst [vmem:[%s2 + $0x30] sm:$0xff] %v945
  %959 = vst [vmem:[%s2 + $0x38] sm:$0xff] %v946
  %960 = vst [vmem:[%s2 + $0x40] sm:$0xff] %v947
  %961 = vst [vmem:[%s2 + $0x48] sm:$0xff] %v948
  %962 = vst [vmem:[%s2 + $0x50] sm:$0xff] %v949
  %963 = vst [vmem:[%s2 + $0x58] sm:$0xff] %v950
  %964 = vst [vmem:[%s2 + $0x60] sm:$0xff] %v951
  // Predicated region
  $region10: #{generator_forward.7} parent=0 // pred_check
    _
  $region11: #{generator_forward.7} parent=0 // pred_check_branch
    %966 = sbr.rel (0) target = $region13
  $region12: #{generator_forward.7} parent=0 // pred_region
    _
  $region13: #{generator_forward.7} parent=0 // pred_fallthru
    _
  // Predicated region
  $region14: #{generator_forward.7} parent=0 // pred_check
    _
  $region15: #{generator_forward.7} parent=0 // pred_check_branch
    %968 = sbr.rel (0) target = $region17
  $region16: #{generator_forward.7} parent=0 // pred_region
    _
  $region17: #{generator_forward.7} parent=0 // pred_fallthru
    _

</llo_original>
